<compile_context>
chip_gen: v7x
topology: tpu7x:2x2x1
jax: 0.10.0
libtpu: 0.0.40
codegen_flags: <defaults>
</compile_context>

<pallas_src>
import functools

import jax
import jax.numpy as jnp
from jax.experimental import pallas as pl
from jax.experimental.pallas import tpu as pltpu


def _round_up(x, m):
    return (x + m - 1) // m * m


def _conv2d_relu_kernel(x_ref, w_ref, b_ref, o_ref, *, taps_off, n_rows):
    """One sample per grid step.

    x_ref: (1, HWp, C_in_p)        flattened channels-last input (+ halo/pad rows)
    w_ref: (kH*kW, C_in_p, C_out_p) repacked weights (grid-invariant, VMEM resident)
    b_ref: (1, C_out_p)            bias (padded)
    o_ref: (1, n_rows, C_out_p)    flattened output rows m = ho*W + wo (wo in [0, W))
    """
    c_out_p = o_ref.shape[-1]
    # Bias folded into the accumulator init; hoisted broadcast (single use, outside loops).
    acc = jnp.broadcast_to(b_ref[...].astype(jnp.float32), (n_rows, c_out_p))

    # Fully-unrolled static tap loop.  Each tap is one MXU matmul with a large M
    # (the whole sample), K = C_in_p, N = C_out_p; the shifted window is a plain
    # static sublane-offset slice of the flattened input (amortised once per sample).
    for t, off in enumerate(taps_off):
        piece = x_ref[0, off:off + n_rows, :]                     # (n_rows, C_in_p)
        acc = acc + jnp.dot(piece, w_ref[t],
                            preferred_element_type=jnp.float32)   # MXU

    # Single cast point + one lane-dense store of the whole sample (last dim % 128 == 0).
    o_ref[0] = jnp.maximum(acc, 0.0).astype(o_ref.dtype)


def _conv2d_relu(x, weight, bias):
    """relu(conv2d(x, weight, bias)) with PyTorch Conv2d defaults (stride 1, VALID)."""
    n, c_in, h, w = x.shape
    c_out, c_in_w, kh, kw = weight.shape
    assert c_in_w == c_in, "groups != 1 not supported"
    h_out = h - kh + 1
    w_out = w - kw + 1
    taps = kh * kw

    c_in_p = _round_up(max(c_in, 1), 8)       # sublane/K-friendly
    c_out_p = _round_up(max(c_out, 1), 128)   # lane-dense N and stores
    n_rows = h_out * w                        # flattened output rows (wo >= w_out dropped later)
    hwp = _round_up(h * w + (kw - 1), 8)      # input rows incl. halo for the largest tap offset

    # ---- one-time layout plumbing (XLA ops outside the kernel; disappears if the model
    #      is kept channels-last end-to-end) ----
    x_nhwc = jnp.transpose(x, (0, 2, 3, 1))                               # (N, H, W, C_in)
    y = x_nhwc.reshape(n, h * w, c_in)                                    # free view
    y = jnp.pad(y, ((0, 0), (0, hwp - h * w), (0, c_in_p - c_in)))        # halo + channel pad
    # weight (C_out, C_in, kH, kW) -> (kH*kW, C_in_p, C_out_p); tap t = ikh*kW + ikw.
    w_r = jnp.transpose(weight, (2, 3, 1, 0)).reshape(taps, c_in, c_out)
    w_r = jnp.pad(w_r, ((0, 0), (0, c_in_p - c_in), (0, c_out_p - c_out)))
    b_r = jnp.pad(bias.reshape(1, c_out), ((0, 0), (0, c_out_p - c_out)))

    # Tap offsets in the flattened (H*W) index space: x[ho+ikh, wo+ikw] = y[m + ikh*W + ikw].
    taps_off = tuple(ikh * w + ikw for ikh in range(kh) for ikw in range(kw))

    kernel = functools.partial(_conv2d_relu_kernel, taps_off=taps_off, n_rows=n_rows)

    # Explicit VMEM budget: double-buffered in/out blocks + resident weights + slack.
    in_blk = hwp * c_in_p * 4
    out_blk = n_rows * c_out_p * 4
    vmem_bytes = 2 * in_blk + 4 * out_blk + (w_r.size + b_r.size) * 4
    vmem_bytes = int(min(max(vmem_bytes, 4 << 20), 96 << 20))

    cost = pl.CostEstimate(
        flops=int(2 * n * h_out * w_out * c_out * taps * c_in),
        transcendentals=0,
        bytes_accessed=int((y.size + w_r.size + b_r.size + n * n_rows * c_out_p) * 4),
    )

    out_pad = pl.pallas_call(
        kernel,
        out_shape=jax.ShapeDtypeStruct((n, n_rows, c_out_p), x.dtype),
        grid_spec=pl.GridSpec(
            grid=(n,),
            in_specs=[
                # Per-sample flattened block (last two dims equal full array dims).
                pl.BlockSpec((1, hwp, c_in_p), lambda i: (i, 0, 0)),
                # Weight / bias: same block every step -> stay resident in VMEM.
                pl.BlockSpec((taps, c_in_p, c_out_p), lambda i: (0, 0, 0)),
                pl.BlockSpec((1, c_out_p), lambda i: (0, 0)),
            ],
            out_specs=pl.BlockSpec((1, n_rows, c_out_p), lambda i: (i, 0, 0)),
        ),
        compiler_params=pltpu.CompilerParams(
            dimension_semantics=("parallel",),   # v7x: shard the batch across both TCs
            vmem_limit_bytes=vmem_bytes,
        ),
        cost_estimate=cost,
    )(y, w_r, b_r)

    # Drop the wo >= W_out wrap columns and the channel padding; back to NCHW.
    out = out_pad.reshape(n, h_out, w, c_out_p)[:, :, :w_out, :c_out]
    return jnp.transpose(out, (0, 3, 1, 2))


@jax.jit
def convnd_relu_forward(x, weight, bias):
    """ConvNd_Relu.forward for dim=2: relu(conv2d(x, weight, bias)), NCHW in/out."""
    return _conv2d_relu(x, weight, bias)


if __name__ == "__main__":
    key = jax.random.PRNGKey(0)
    k_x, k_w, k_b = jax.random.split(key, 3)

    N, C_IN, C_OUT, K, H, W = 2, 4, 8, 3, 16, 16

    x = jax.random.normal(k_x, (N, C_IN, H, W), dtype=jnp.float32)
    # Deterministic init mimicking torch.nn.Conv2d default (uniform +/- 1/sqrt(fan_in)).
    fan_in = C_IN * K * K
    bound = 1.0 / (fan_in ** 0.5)
    weight = jax.random.uniform(k_w, (C_OUT, C_IN, K, K),
                                minval=-bound, maxval=bound, dtype=jnp.float32)
    bias = jax.random.uniform(k_b, (C_OUT,),
                              minval=-bound, maxval=bound, dtype=jnp.float32)

    out = convnd_relu_forward(x, weight, bias)
    out = jax.block_until_ready(out)

    # Reference: relu(conv2d(x, W) + b) with PyTorch Conv2d semantics (stride 1, VALID).
    ref = jax.lax.conv_general_dilated(
        x, weight, window_strides=(1, 1), padding="VALID",
        dimension_numbers=("NCHW", "OIHW", "NCHW"))
    ref = jnp.maximum(ref + bias[None, :, None, None], 0.0)

    assert out.shape == (N, C_OUT, H - K + 1, W - K + 1)
    max_err = float(jnp.max(jnp.abs(out - ref)))
    assert max_err < 1e-4, max_err

    print("KERNEL_OK")
</pallas_src>

<mosaic_0001>
module attributes {stable_mosaic.version = 11 : i64} {
  func.func @_conv2d_relu_kernel(%arg0: i32, %arg1: memref<1x264x8xf32, #tpu.memory_space<vmem>>, %arg2: memref<9x8x128xf32, #tpu.memory_space<vmem>>, %arg3: memref<1x128xf32, #tpu.memory_space<vmem>>, %arg4: memref<1x224x128xf32, #tpu.memory_space<vmem>>) attributes {dimension_semantics = [#tpu.dimension_semantics<parallel>], iteration_bounds = array<i64: 2>, scalar_prefetch = 0 : i64, scratch_operands = 0 : i64, tpu.core_type = #tpu.core_type<tc>, window_params = [{transform_indices = @transform_0, window_bounds = array<i64: 1, 264, 8>}, {pipeline_mode = #tpu.pipeline_mode<synchronous>, transform_indices = @transform_1, window_bounds = array<i64: 9, 8, 128>}, {pipeline_mode = #tpu.pipeline_mode<synchronous>, transform_indices = @transform_2, window_bounds = array<i64: 1, 128>}, {transform_indices = @transform_3, window_bounds = array<i64: 1, 224, 128>}]} {
    %c0 = arith.constant 0 : index
    %c0_0 = arith.constant 0 : index
    %0 = vector.load %arg3[%c0, %c0_0] : memref<1x128xf32, #tpu.memory_space<vmem>>, vector<1x128xf32>
    %1 = vector.shape_cast %0 : vector<1x128xf32> to vector<1x128xf32>
    %2 = vector.broadcast %1 : vector<1x128xf32> to vector<224x128xf32>
    %c0_1 = arith.constant 0 : index
    %c0_2 = arith.constant 0 : index
    %c0_3 = arith.constant 0 : index
    %3 = vector.load %arg1[%c0_1, %c0_2, %c0_3] : memref<1x264x8xf32, #tpu.memory_space<vmem>>, vector<1x224x8xf32>
    %4 = vector.shape_cast %3 : vector<1x224x8xf32> to vector<224x8xf32>
    %c0_4 = arith.constant 0 : index
    %c0_5 = arith.constant 0 : index
    %c0_6 = arith.constant 0 : index
    %5 = vector.load %arg2[%c0_4, %c0_5, %c0_6] : memref<9x8x128xf32, #tpu.memory_space<vmem>>, vector<1x8x128xf32>
    %6 = vector.shape_cast %5 : vector<1x8x128xf32> to vector<8x128xf32>
    %cst = arith.constant dense<0.000000e+00> : vector<224x128xf32>
    %7 = tpu.matmul %4, %6, %cst {dimension_numbers = #tpu.dot_dimension_numbers<[1], [0], [0], [1], [0, 0, 1, 1], [], []>} : vector<224x8xf32>, vector<8x128xf32>, vector<224x128xf32> -> vector<224x128xf32>
    %8 = arith.addf %2, %7 : vector<224x128xf32>
    %c0_7 = arith.constant 0 : index
    %c1 = arith.constant 1 : index
    %c0_8 = arith.constant 0 : index
    %9 = vector.load %arg1[%c0_7, %c1, %c0_8] : memref<1x264x8xf32, #tpu.memory_space<vmem>>, vector<1x224x8xf32>
    %10 = vector.shape_cast %9 : vector<1x224x8xf32> to vector<224x8xf32>
    %c1_9 = arith.constant 1 : index
    %c0_10 = arith.constant 0 : index
    %c0_11 = arith.constant 0 : index
    %11 = vector.load %arg2[%c1_9, %c0_10, %c0_11] : memref<9x8x128xf32, #tpu.memory_space<vmem>>, vector<1x8x128xf32>
    %12 = vector.shape_cast %11 : vector<1x8x128xf32> to vector<8x128xf32>
    %cst_12 = arith.constant dense<0.000000e+00> : vector<224x128xf32>
    %13 = tpu.matmul %10, %12, %cst_12 {dimension_numbers = #tpu.dot_dimension_numbers<[1], [0], [0], [1], [0, 0, 1, 1], [], []>} : vector<224x8xf32>, vector<8x128xf32>, vector<224x128xf32> -> vector<224x128xf32>
    %14 = arith.addf %8, %13 : vector<224x128xf32>
    %c0_13 = arith.constant 0 : index
    %c2 = arith.constant 2 : index
    %c0_14 = arith.constant 0 : index
    %15 = vector.load %arg1[%c0_13, %c2, %c0_14] : memref<1x264x8xf32, #tpu.memory_space<vmem>>, vector<1x224x8xf32>
    %16 = vector.shape_cast %15 : vector<1x224x8xf32> to vector<224x8xf32>
    %c2_15 = arith.constant 2 : index
    %c0_16 = arith.constant 0 : index
    %c0_17 = arith.constant 0 : index
    %17 = vector.load %arg2[%c2_15, %c0_16, %c0_17] : memref<9x8x128xf32, #tpu.memory_space<vmem>>, vector<1x8x128xf32>
    %18 = vector.shape_cast %17 : vector<1x8x128xf32> to vector<8x128xf32>
    %cst_18 = arith.constant dense<0.000000e+00> : vector<224x128xf32>
    %19 = tpu.matmul %16, %18, %cst_18 {dimension_numbers = #tpu.dot_dimension_numbers<[1], [0], [0], [1], [0, 0, 1, 1], [], []>} : vector<224x8xf32>, vector<8x128xf32>, vector<224x128xf32> -> vector<224x128xf32>
    %20 = arith.addf %14, %19 : vector<224x128xf32>
    %c0_19 = arith.constant 0 : index
    %c16 = arith.constant 16 : index
    %c0_20 = arith.constant 0 : index
    %21 = vector.load %arg1[%c0_19, %c16, %c0_20] : memref<1x264x8xf32, #tpu.memory_space<vmem>>, vector<1x224x8xf32>
    %22 = vector.shape_cast %21 : vector<1x224x8xf32> to vector<224x8xf32>
    %c3 = arith.constant 3 : index
    %c0_21 = arith.constant 0 : index
    %c0_22 = arith.constant 0 : index
    %23 = vector.load %arg2[%c3, %c0_21, %c0_22] : memref<9x8x128xf32, #tpu.memory_space<vmem>>, vector<1x8x128xf32>
    %24 = vector.shape_cast %23 : vector<1x8x128xf32> to vector<8x128xf32>
    %cst_23 = arith.constant dense<0.000000e+00> : vector<224x128xf32>
    %25 = tpu.matmul %22, %24, %cst_23 {dimension_numbers = #tpu.dot_dimension_numbers<[1], [0], [0], [1], [0, 0, 1, 1], [], []>} : vector<224x8xf32>, vector<8x128xf32>, vector<224x128xf32> -> vector<224x128xf32>
    %26 = arith.addf %20, %25 : vector<224x128xf32>
    %c0_24 = arith.constant 0 : index
    %c17 = arith.constant 17 : index
    %c0_25 = arith.constant 0 : index
    %27 = vector.load %arg1[%c0_24, %c17, %c0_25] : memref<1x264x8xf32, #tpu.memory_space<vmem>>, vector<1x224x8xf32>
    %28 = vector.shape_cast %27 : vector<1x224x8xf32> to vector<224x8xf32>
    %c4 = arith.constant 4 : index
    %c0_26 = arith.constant 0 : index
    %c0_27 = arith.constant 0 : index
    %29 = vector.load %arg2[%c4, %c0_26, %c0_27] : memref<9x8x128xf32, #tpu.memory_space<vmem>>, vector<1x8x128xf32>
    %30 = vector.shape_cast %29 : vector<1x8x128xf32> to vector<8x128xf32>
    %cst_28 = arith.constant dense<0.000000e+00> : vector<224x128xf32>
    %31 = tpu.matmul %28, %30, %cst_28 {dimension_numbers = #tpu.dot_dimension_numbers<[1], [0], [0], [1], [0, 0, 1, 1], [], []>} : vector<224x8xf32>, vector<8x128xf32>, vector<224x128xf32> -> vector<224x128xf32>
    %32 = arith.addf %26, %31 : vector<224x128xf32>
    %c0_29 = arith.constant 0 : index
    %c18 = arith.constant 18 : index
    %c0_30 = arith.constant 0 : index
    %33 = vector.load %arg1[%c0_29, %c18, %c0_30] : memref<1x264x8xf32, #tpu.memory_space<vmem>>, vector<1x224x8xf32>
    %34 = vector.shape_cast %33 : vector<1x224x8xf32> to vector<224x8xf32>
    %c5 = arith.constant 5 : index
    %c0_31 = arith.constant 0 : index
    %c0_32 = arith.constant 0 : index
    %35 = vector.load %arg2[%c5, %c0_31, %c0_32] : memref<9x8x128xf32, #tpu.memory_space<vmem>>, vector<1x8x128xf32>
    %36 = vector.shape_cast %35 : vector<1x8x128xf32> to vector<8x128xf32>
    %cst_33 = arith.constant dense<0.000000e+00> : vector<224x128xf32>
    %37 = tpu.matmul %34, %36, %cst_33 {dimension_numbers = #tpu.dot_dimension_numbers<[1], [0], [0], [1], [0, 0, 1, 1], [], []>} : vector<224x8xf32>, vector<8x128xf32>, vector<224x128xf32> -> vector<224x128xf32>
    %38 = arith.addf %32, %37 : vector<224x128xf32>
    %c0_34 = arith.constant 0 : index
    %c32 = arith.constant 32 : index
    %c0_35 = arith.constant 0 : index
    %39 = vector.load %arg1[%c0_34, %c32, %c0_35] : memref<1x264x8xf32, #tpu.memory_space<vmem>>, vector<1x224x8xf32>
    %40 = vector.shape_cast %39 : vector<1x224x8xf32> to vector<224x8xf32>
    %c6 = arith.constant 6 : index
    %c0_36 = arith.constant 0 : index
    %c0_37 = arith.constant 0 : index
    %41 = vector.load %arg2[%c6, %c0_36, %c0_37] : memref<9x8x128xf32, #tpu.memory_space<vmem>>, vector<1x8x128xf32>
    %42 = vector.shape_cast %41 : vector<1x8x128xf32> to vector<8x128xf32>
    %cst_38 = arith.constant dense<0.000000e+00> : vector<224x128xf32>
    %43 = tpu.matmul %40, %42, %cst_38 {dimension_numbers = #tpu.dot_dimension_numbers<[1], [0], [0], [1], [0, 0, 1, 1], [], []>} : vector<224x8xf32>, vector<8x128xf32>, vector<224x128xf32> -> vector<224x128xf32>
    %44 = arith.addf %38, %43 : vector<224x128xf32>
    %c0_39 = arith.constant 0 : index
    %c33 = arith.constant 33 : index
    %c0_40 = arith.constant 0 : index
    %45 = vector.load %arg1[%c0_39, %c33, %c0_40] : memref<1x264x8xf32, #tpu.memory_space<vmem>>, vector<1x224x8xf32>
    %46 = vector.shape_cast %45 : vector<1x224x8xf32> to vector<224x8xf32>
    %c7 = arith.constant 7 : index
    %c0_41 = arith.constant 0 : index
    %c0_42 = arith.constant 0 : index
    %47 = vector.load %arg2[%c7, %c0_41, %c0_42] : memref<9x8x128xf32, #tpu.memory_space<vmem>>, vector<1x8x128xf32>
    %48 = vector.shape_cast %47 : vector<1x8x128xf32> to vector<8x128xf32>
    %cst_43 = arith.constant dense<0.000000e+00> : vector<224x128xf32>
    %49 = tpu.matmul %46, %48, %cst_43 {dimension_numbers = #tpu.dot_dimension_numbers<[1], [0], [0], [1], [0, 0, 1, 1], [], []>} : vector<224x8xf32>, vector<8x128xf32>, vector<224x128xf32> -> vector<224x128xf32>
    %50 = arith.addf %44, %49 : vector<224x128xf32>
    %c0_44 = arith.constant 0 : index
    %c34 = arith.constant 34 : index
    %c0_45 = arith.constant 0 : index
    %51 = vector.load %arg1[%c0_44, %c34, %c0_45] : memref<1x264x8xf32, #tpu.memory_space<vmem>>, vector<1x224x8xf32>
    %52 = vector.shape_cast %51 : vector<1x224x8xf32> to vector<224x8xf32>
    %c8 = arith.constant 8 : index
    %c0_46 = arith.constant 0 : index
    %c0_47 = arith.constant 0 : index
    %53 = vector.load %arg2[%c8, %c0_46, %c0_47] : memref<9x8x128xf32, #tpu.memory_space<vmem>>, vector<1x8x128xf32>
    %54 = vector.shape_cast %53 : vector<1x8x128xf32> to vector<8x128xf32>
    %cst_48 = arith.constant dense<0.000000e+00> : vector<224x128xf32>
    %55 = tpu.matmul %52, %54, %cst_48 {dimension_numbers = #tpu.dot_dimension_numbers<[1], [0], [0], [1], [0, 0, 1, 1], [], []>} : vector<224x8xf32>, vector<8x128xf32>, vector<224x128xf32> -> vector<224x128xf32>
    %56 = arith.addf %50, %55 : vector<224x128xf32>
    %cst_49 = arith.constant 0.000000e+00 : f32
    %57 = vector.broadcast %cst_49 : f32 to vector<224x128xf32>
    %58 = arith.maximumf %56, %57 : vector<224x128xf32>
    %c0_50 = arith.constant 0 : index
    %c0_51 = arith.constant 0 : index
    %c0_52 = arith.constant 0 : index
    %59 = vector.load %arg4[%c0_50, %c0_51, %c0_52] : memref<1x224x128xf32, #tpu.memory_space<vmem>>, vector<1x224x128xf32>
    %60 = vector.shape_cast %59 : vector<1x224x128xf32> to vector<224x128xf32>
    %61 = vector.shape_cast %58 : vector<224x128xf32> to vector<1x224x128xf32>
    tpu.vector_store %arg4[%c0_50, %c0_51, %c0_52], %61 {strides = array<i32>} : memref<1x224x128xf32, #tpu.memory_space<vmem>>, vector<1x224x128xf32>,
    return
  }
  func.func @transform_0(%arg0: i32) -> (i32, i32, i32) {
    %c0_i32 = arith.constant 0 : i32
    %c0_i32_0 = arith.constant 0 : i32
    %c0_i32_1 = arith.constant 0 : i32
    return %arg0, %c0_i32, %c0_i32_0 : i32, i32, i32
  }
  func.func @transform_1(%arg0: i32) -> (i32, i32, i32) {
    %c0_i32 = arith.constant 0 : i32
    %c0_i32_0 = arith.constant 0 : i32
    %c0_i32_1 = arith.constant 0 : i32
    %c0_i32_2 = arith.constant 0 : i32
    return %c0_i32, %c0_i32_0, %c0_i32_1 : i32, i32, i32
  }
  func.func @transform_2(%arg0: i32) -> (i32, i32) {
    %c0_i32 = arith.constant 0 : i32
    %c0_i32_0 = arith.constant 0 : i32
    %c0_i32_1 = arith.constant 0 : i32
    return %c0_i32, %c0_i32_0 : i32, i32
  }
  func.func @transform_3(%arg0: i32) -> (i32, i32, i32) {
    %c0_i32 = arith.constant 0 : i32
    %c0_i32_0 = arith.constant 0 : i32
    %c0_i32_1 = arith.constant 0 : i32
    return %arg0, %c0_i32, %c0_i32_0 : i32, i32, i32
  }
}

</mosaic_0001>

<llo_original>
// kernel: convnd_relu_forward.1
$region0: #{convnd_relu_forward.1}
  #allocation0 [shape = 'u32[]', space=smem, size = 0x4, offset = 0x4, fixed_abs, tag = 'smem constant byte address 0x4 - core index']
  #allocation1 [shape = 'u32[144,128]{1,0:T(1,128)}', space=vmem, size = 0x12000, scoped, tag = 'internal scratch']
  %s0 = inlined_call_operand.vmem [shape: f32[2,264,8], index: 0, kind: input, shape index: {}]
  %s1 = inlined_call_operand.vmem [shape: f32[9,8,128], index: 1, kind: input, shape index: {}]
  %s2 = inlined_call_operand.vmem [shape: f32[1,128], index: 2, kind: input, shape index: {}]
  %s3 = inlined_call_operand.vmem [shape: f32[2,224,128], index: 3, kind: output, shape index: {}]
  %s4 = sld [smem:[#allocation0]]
  $region45: #{convnd_relu_forward.1} parent=0
    _
  %s6 = ssub.s32 1, %s4
  %s7 = scalar_select 0, %s6, %s4
  loop: start=0, step=1, limit=4
  $region2: #{convnd_relu_forward.1} parent=0 // loop_pre_header
    _
  $region3: #{convnd_relu_forward.1} parent=0 // loop_header
    %s9 = sphi 0, %s13
    %p10 = scmp.ge.s32.totalorder %s9, 4
    %s19 = sphi 0, %s21
    %s22 = sphi 0, %s19
    %s23 = sphi 0, %s22
    %s39 = sphi 0, %s23
    %s43 = sphi 0, %s43
    %s45 = sphi 0, %s43
    %s46 = sphi 0, %s45
    %s60 = sphi 0, %s46
    %s64 = sphi 0, %s64
    %s66 = sphi 0, %s64
    %s67 = sphi 0, %s66
    %s81 = sphi 0, %s67
    %s87 = sphi 0, %s89
    %s90 = sphi 0, %s87
    %s91 = sphi 0, %s90
    %s107 = sphi 0, %s91
  $region4: #{convnd_relu_forward.1} parent=0 // loop_header_branch
    %12 = sbr.rel (%p10) target = $region8
  $region5: #{convnd_relu_forward.1} parent=0 // loop_body
    %s14 = ssub.s32 %s9, 1
    %s15 = ssub.s32 %s9, 2
    %s16 = sadd.s32 %s9, 1
    %s17 = ssub.s32 %s9, %s16
    %p18 = scmp.eq.s32.totalorder %s17, 0
    %s20 = sadd.s32 %s19, 1
    %s21 = scalar_select %p18, %s19, %s20
    %p24 = pneg %p18
    %p25 = scmp.eq.s32.totalorder %s9, 1
    %p26 = por %p24, %p25
    %p27 = scmp.ne.s32.totalorder %s19, %s22
    %p28 = scmp.eq.s32.totalorder %s9, 0
    %p29 = por %p27, %p28
    %p30 = scmp.ne.s32.totalorder %s19, %s22
    %p31 = scmp.eq.s32.totalorder %s14, 1
    %p32 = por %p30, %p31
    %p33 = scmp.ne.s32.totalorder %s22, %s23
    %p34 = scmp.eq.s32.totalorder %s14, 0
    %p35 = por %p33, %p34
    %p36 = scmp.ne.s32.totalorder %s22, %s23
    %p37 = scmp.eq.s32.totalorder %s15, 1
    %p38 = por %p36, %p37
    %p40 = scmp.ne.s32.totalorder %s23, %s39
    %p41 = scmp.eq.s32.totalorder %s15, 0
    %p42 = por %p40, %p41
    %s44 = sadd.s32 %s43, 1
    %p47 = scmp.eq.s32.totalorder %s9, 1
    %p48 = scmp.ne.s32.totalorder %s43, %s45
    %p49 = scmp.eq.s32.totalorder %s9, 0
    %p50 = por %p48, %p49
    %p51 = scmp.ne.s32.totalorder %s43, %s45
    %p52 = scmp.eq.s32.totalorder %s14, 1
    %p53 = por %p51, %p52
    %p54 = scmp.ne.s32.totalorder %s45, %s46
    %p55 = scmp.eq.s32.totalorder %s14, 0
    %p56 = por %p54, %p55
    %p57 = scmp.ne.s32.totalorder %s45, %s46
    %p58 = scmp.eq.s32.totalorder %s15, 1
    %p59 = por %p57, %p58
    %p61 = scmp.ne.s32.totalorder %s46, %s60
    %p62 = scmp.eq.s32.totalorder %s15, 0
    %p63 = por %p61, %p62
    %s65 = sadd.s32 %s64, 1
    %p68 = scmp.eq.s32.totalorder %s9, 1
    %p69 = scmp.ne.s32.totalorder %s64, %s66
    %p70 = scmp.eq.s32.totalorder %s9, 0
    %p71 = por %p69, %p70
    %p72 = scmp.ne.s32.totalorder %s64, %s66
    %p73 = scmp.eq.s32.totalorder %s14, 1
    %p74 = por %p72, %p73
    %p75 = scmp.ne.s32.totalorder %s66, %s67
    %p76 = scmp.eq.s32.totalorder %s14, 0
    %p77 = por %p75, %p76
    %p78 = scmp.ne.s32.totalorder %s66, %s67
    %p79 = scmp.eq.s32.totalorder %s15, 1
    %p80 = por %p78, %p79
    %p82 = scmp.ne.s32.totalorder %s67, %s81
    %p83 = scmp.eq.s32.totalorder %s15, 0
    %p84 = por %p82, %p83
    %s85 = ssub.s32 %s9, %s16
    %p86 = scmp.eq.s32.totalorder %s85, 0
    %s88 = sadd.s32 %s87, 1
    %s89 = scalar_select %p86, %s87, %s88
    %p92 = pneg %p86
    %p93 = scmp.eq.s32.totalorder %s9, 1
    %p94 = por %p92, %p93
    %p95 = scmp.ne.s32.totalorder %s87, %s90
    %p96 = scmp.eq.s32.totalorder %s9, 0
    %p97 = por %p95, %p96
    %p98 = scmp.ne.s32.totalorder %s87, %s90
    %p99 = scmp.eq.s32.totalorder %s14, 1
    %p100 = por %p98, %p99
    %p101 = scmp.ne.s32.totalorder %s90, %s91
    %p102 = scmp.eq.s32.totalorder %s14, 0
    %p103 = por %p101, %p102
    %p104 = scmp.ne.s32.totalorder %s90, %s91
    %p105 = scmp.eq.s32.totalorder %s15, 1
    %p106 = por %p104, %p105
    %p108 = scmp.ne.s32.totalorder %s91, %s107
    %p109 = scmp.eq.s32.totalorder %s15, 0
    %p110 = por %p108, %p109
    %p111 = scmp.le.s32.totalorder 1, %s9
    %p112 = scmp.lt.s32.totalorder %s9, 3
    %p113 = pnand %p111, %p112
    %p114 = pneg %p113
    // Predicated region
    $region9: #{convnd_relu_forward.1} parent=5 // pred_check
      _
    $region10: #{convnd_relu_forward.1} parent=5 // pred_check_branch
      %116 = sbr.rel (%p113) target = $region12
    $region11: #{convnd_relu_forward.1} parent=5 // pred_region
      %s117 = ssub.s32 %s9, 1
      // Predicated region
      $region13: #{convnd_relu_forward.1} parent=11 // pred_check
        %p118 = pneg %p56
      $region14: #{convnd_relu_forward.1} parent=11 // pred_check_branch
        %120 = sbr.rel (%p118) target = $region16
      $region15: #{convnd_relu_forward.1} parent=11 // pred_region
        _
      $region16: #{convnd_relu_forward.1} parent=11 // pred_fallthru
        _
      // Predicated region
      $region17: #{convnd_relu_forward.1} parent=11 // pred_check
        %p121 = pneg %p77
      $region18: #{convnd_relu_forward.1} parent=11 // pred_check_branch
        %123 = sbr.rel (%p121) target = $region20
      $region19: #{convnd_relu_forward.1} parent=11 // pred_region
        _
      $region20: #{convnd_relu_forward.1} parent=11 // pred_fallthru
        _
    $region12: #{convnd_relu_forward.1} parent=5 // pred_fallthru
      _
    %p124 = scmp.lt.s32.totalorder %s9, 2
    // Predicated region
    $region21: #{convnd_relu_forward.1} parent=5 // pred_check
      %p125 = pneg %p124
    $region22: #{convnd_relu_forward.1} parent=5 // pred_check_branch
      %127 = sbr.rel (%p125) target = $region24
    $region23: #{convnd_relu_forward.1} parent=5 // pred_region
      // Predicated region
      $region25: #{convnd_relu_forward.1} parent=23 // pred_check
        %p128 = pneg %p29
      $region26: #{convnd_relu_forward.1} parent=23 // pred_check_branch
        %130 = sbr.rel (%p128) target = $region28
      $region27: #{convnd_relu_forward.1} parent=23 // pred_region
        %p131 = scmp.lt.s32.totalorder %s9, 1
        %s132 = scalar_select %p131, %s9, 1
        %s133 = smul.addr %s132, 33
        %s134 = smul.addr %s133, 8
        %s135 = scalar_lea.vmem %s0, %s134
      $region28: #{convnd_relu_forward.1} parent=23 // pred_fallthru
        _
    $region24: #{convnd_relu_forward.1} parent=5 // pred_fallthru
      _
    %p136 = scmp.le.s32.totalorder 1, %s9
    %p137 = scmp.lt.s32.totalorder %s9, 3
    %p138 = pnand %p136, %p137
    %p139 = pneg %p138
    // Predicated region
    $region29: #{convnd_relu_forward.1} parent=5 // pred_check
      _
    $region30: #{convnd_relu_forward.1} parent=5 // pred_check_branch
      %141 = sbr.rel (%p138) target = $region32
    $region31: #{convnd_relu_forward.1} parent=5 // pred_region
      %s142 = ssub.s32 %s9, 1
      %p143 = scmp.lt.s32.totalorder %s14, 1
      %s144 = scalar_select %p143, %s14, 1
      %s145 = smul.addr %s144, 33
      %s146 = smul.addr %s145, 8
      %s147 = scalar_lea.vmem %s0, %s146
      %p148 = pneg %p35
      %p149 = pneg %p32
      %p150 = pneg %p56
      %p151 = pneg %p53
      %p152 = pneg %p77
      %p153 = pneg %p74
      %p154 = pneg %p103
      %p155 = pneg %p100
      %p156 = scmp.lt.s32.totalorder %s14, 1
      %s157 = scalar_select %p156, %s14, 1
      %s158 = smul.addr %s157, 28
      %s159 = smul.addr %s158, 8
      %s160 = scalar_lea.vmem %s3, %s159
      %p161 = scmp.lt.s32.totalorder %s14, 1
      %s162 = scalar_select %p161, %s14, 1
      %s163 = smul.addr %s162, 33
      %s164 = smul.addr %s163, 8
      %s165 = scalar_lea.vmem %s0, %s164
      %p166 = scmp.lt.s32.totalorder %s14, 1
      %s167 = scalar_select %p166, %s14, 1
      %s168 = smul.addr %s167, 28
      %s169 = smul.addr %s168, 8
      %s170 = scalar_lea.vmem %s3, %s169
      %v171 = vld [vmem:[%s2] sm:$0x1]
      %v173 = vlaneseq
      %v174 = vshrl.u32 %v173, 7
      %v175 = vsub.s32 0, %v174
      %v176 = vrot.slane %v171, %v175
      %v178 = vld [vmem:[%s165] sm:$0xff]
      %v179 = vld [vmem:[%s165 + $0x8] sm:$0xff]
      %v180 = vld [vmem:[%s165 + $0x10] sm:$0xff]
      %v181 = vld [vmem:[%s165 + $0x18] sm:$0xff]
      %v182 = vld [vmem:[%s165 + $0x20] sm:$0xff]
      %v183 = vld [vmem:[%s165 + $0x28] sm:$0xff]
      %v184 = vld [vmem:[%s165 + $0x30] sm:$0xff]
      %v185 = vld [vmem:[%s165 + $0x38] sm:$0xff]
      %v186 = vld [vmem:[%s165 + $0x40] sm:$0xff]
      %v187 = vld [vmem:[%s165 + $0x48] sm:$0xff]
      %v188 = vld [vmem:[%s165 + $0x50] sm:$0xff]
      %v189 = vld [vmem:[%s165 + $0x58] sm:$0xff]
      %v190 = vld [vmem:[%s165 + $0x60] sm:$0xff]
      %v191 = vld [vmem:[%s165 + $0x68] sm:$0xff]
      %v192 = vld [vmem:[%s165 + $0x70] sm:$0xff]
      %v193 = vld [vmem:[%s165 + $0x78] sm:$0xff]
      %v194 = vld [vmem:[%s165 + $0x80] sm:$0xff]
      %v195 = vld [vmem:[%s165 + $0x88] sm:$0xff]
      %v196 = vld [vmem:[%s165 + $0x90] sm:$0xff]
      %v197 = vld [vmem:[%s165 + $0x98] sm:$0xff]
      %v198 = vld [vmem:[%s165 + $0xa0] sm:$0xff]
      %v199 = vld [vmem:[%s165 + $0xa8] sm:$0xff]
      %v200 = vld [vmem:[%s165 + $0xb0] sm:$0xff]
      %v201 = vld [vmem:[%s165 + $0xb8] sm:$0xff]
      %v202 = vld [vmem:[%s165 + $0xc0] sm:$0xff]
      %v203 = vld [vmem:[%s165 + $0xc8] sm:$0xff]
      %v204 = vld [vmem:[%s165 + $0xd0] sm:$0xff]
      %v205 = vld [vmem:[%s165 + $0xd8] sm:$0xff]
      %v206 = vld [vmem:[%s1] sm:$0xff]
      %vm207 = vcmask 64512
      %v209 = vsel %vm207, %v178, 0
      %v212 = vsel %vm207, %v179, 0
      %v215 = vsel %vm207, %v180, 0
      %v218 = vsel %vm207, %v181, 0
      %v221 = vsel %vm207, %v182, 0
      %v224 = vsel %vm207, %v183, 0
      %v227 = vsel %vm207, %v184, 0
      %v230 = vsel %vm207, %v185, 0
      %v233 = vsel %vm207, %v186, 0
      %v236 = vsel %vm207, %v187, 0
      %v239 = vsel %vm207, %v188, 0
      %v242 = vsel %vm207, %v189, 0
      %v245 = vsel %vm207, %v190, 0
      %v248 = vsel %vm207, %v191, 0
      %v251 = vsel %vm207, %v192, 0
      %v254 = vsel %vm207, %v193, 0
      %v257 = vsel %vm207, %v194, 0
      %v260 = vsel %vm207, %v195, 0
      %v263 = vsel %vm207, %v196, 0
      %v266 = vsel %vm207, %v197, 0
      %v269 = vsel %vm207, %v198, 0
      %v272 = vsel %vm207, %v199, 0
      %v275 = vsel %vm207, %v200, 0
      %v278 = vsel %vm207, %v201, 0
      %v281 = vsel %vm207, %v202, 0
      %v284 = vsel %vm207, %v203, 0
      %v287 = vsel %vm207, %v204, 0
      %v290 = vsel %vm207, %v205, 0
      %292 = vmatprep.subr.mxu0 0.0
      %293 = vmatpush1.msra.mxu0 %v206
      %294 = vmatprep.subr.mxu0 0.0
      %295 = vmatpush1.msra.mxu0 0.0
      %296 = vmatprep.subr.mxu0 0.0
      %297 = vmatpush1.msra.mxu0 0.0
      %298 = vmatprep.subr.mxu0 0.0
      %299 = vmatpush1.msra.mxu0 0.0
      %300 = vmatprep.subr.mxu0 0.0
      %301 = vmatpush1.msra.mxu0 0.0
      %302 = vmatprep.subr.mxu0 0.0
      %303 = vmatpush1.msra.mxu0 0.0
      %304 = vmatprep.subr.mxu0 0.0
      %305 = vmatpush1.msra.mxu0 0.0
      %306 = vmatprep.subr.mxu0 0.0
      %307 = vmatpush1.msra.mxu0 0.0
      %308 = vmatprep.subr.mxu0 0.0
      %309 = vmatpush1.msra.mxu0 0.0
      %310 = vmatprep.subr.mxu0 0.0
      %311 = vmatpush1.msra.mxu0 0.0
      %312 = vmatprep.subr.mxu0 0.0
      %313 = vmatpush1.msra.mxu0 0.0
      %314 = vmatprep.subr.mxu0 0.0
      %315 = vmatpush1.msra.mxu0 0.0
      %316 = vmatprep.subr.mxu0 0.0
      %317 = vmatpush1.msra.mxu0 0.0
      %318 = vmatprep.subr.mxu0 0.0
      %319 = vmatpush1.msra.mxu0 0.0
      %320 = vmatprep.subr.mxu0 0.0
      %321 = vmatpush1.msra.mxu0 0.0
      %322 = vmatprep.subr.mxu0 0.0
      %323 = vmatpush1.msra.mxu0 0.0
      %324 = vmatprep.subr.mxu0 0.0
      %325 = vmatpush1.msra.mxu0 0.0
      %326 = vmatprep.subr.mxu0 0.0
      %327 = vmatpush1.msra.mxu0 0.0
      %328 = vmatprep.subr.mxu0 0.0
      %329 = vmatpush1.msra.mxu0 0.0
      %330 = vmatprep.subr.mxu0 0.0
      %331 = vmatpush1.msra.mxu0 0.0
      %332 = vmatprep.subr.mxu0 0.0
      %333 = vmatpush1.msra.mxu0 0.0
      %334 = vmatprep.subr.mxu0 0.0
      %335 = vmatpush1.msra.mxu0 0.0
      %336 = vmatprep.subr.mxu0 0.0
      %337 = vmatpush1.msra.mxu0 0.0
      %338 = vmatprep.subr.mxu0 0.0
      %339 = vmatpush1.msra.mxu0 0.0
      %340 = vmatprep.subr.mxu0 0.0
      %341 = vmatpush1.msra.mxu0 0.0
      %342 = vmatprep.subr.mxu0 0.0
      %343 = vmatpush1.msra.mxu0 0.0
      %344 = vmatprep.subr.mxu0 0.0
      %345 = vmatpush1.msra.mxu0 0.0
      %346 = vmatprep.subr.mxu0 0.0
      %347 = vmatpush1.msra.mxu0 0.0
      %348 = vmatprep.subr.mxu0 0.0
      %349 = vmatpush1.msra.mxu0 0.0
      %350 = vmatprep.subr.mxu0 0.0
      %351 = vmatpush1.msra.mxu0 0.0
      %352 = vmatprep.subr.mxu0 0.0
      %353 = vmatpush1.msra.mxu0 0.0
      %354 = vmatprep.subr.mxu0 0.0
      %355 = vmatpush1.msra.mxu0 0.0
      %356 = vmatprep.mubr.f32.mxu0 0.0
      %357 = vmatmul.mubr.f32.gmra.mrb[0].mxu0 %v209
      %v358 = vpop.f32.mrb[0].mxu0
      %v359 = vadd.f32 0.0, %v358
      %v360 = vpop.f32.mrb[0].mxu0
      %361 = vmatprep.mubr.f32.mxu0 0.0
      %362 = vmatmul.mubr.f32.gmra.mrb[0].mxu0 %v212
      %v363 = vpop.f32.mrb[0].mxu0
      %v364 = vadd.f32 0.0, %v363
      %v365 = vpop.f32.mrb[0].mxu0
      %366 = vmatprep.mubr.f32.mxu0 0.0
      %367 = vmatmul.mubr.f32.gmra.mrb[0].mxu0 %v215
      %v368 = vpop.f32.mrb[0].mxu0
      %v369 = vadd.f32 0.0, %v368
      %v370 = vpop.f32.mrb[0].mxu0
      %371 = vmatprep.mubr.f32.mxu0 0.0
      %372 = vmatmul.mubr.f32.gmra.mrb[0].mxu0 %v218
      %v373 = vpop.f32.mrb[0].mxu0
      %v374 = vadd.f32 0.0, %v373
      %v375 = vpop.f32.mrb[0].mxu0
      %376 = vmatprep.mubr.f32.mxu0 0.0
      %377 = vmatmul.mubr.f32.gmra.mrb[0].mxu0 %v221
      %v378 = vpop.f32.mrb[0].mxu0
      %v379 = vadd.f32 0.0, %v378
      %v380 = vpop.f32.mrb[0].mxu0
      %381 = vmatprep.mubr.f32.mxu0 0.0
      %382 = vmatmul.mubr.f32.gmra.mrb[0].mxu0 %v224
      %v383 = vpop.f32.mrb[0].mxu0
      %v384 = vadd.f32 0.0, %v383
      %v385 = vpop.f32.mrb[0].mxu0
      %386 = vmatprep.mubr.f32.mxu0 0.0
      %387 = vmatmul.mubr.f32.gmra.mrb[0].mxu0 %v227
      %v388 = vpop.f32.mrb[0].mxu0
      %v389 = vadd.f32 0.0, %v388
      %v390 = vpop.f32.mrb[0].mxu0
      %391 = vmatprep.mubr.f32.mxu0 0.0
      %392 = vmatmul.mubr.f32.gmra.mrb[0].mxu0 %v230
      %v393 = vpop.f32.mrb[0].mxu0
      %v394 = vadd.f32 0.0, %v393
      %v395 = vpop.f32.mrb[0].mxu0
      %396 = vmatprep.mubr.f32.mxu0 0.0
      %397 = vmatmul.mubr.f32.gmra.mrb[0].mxu0 %v233
      %v398 = vpop.f32.mrb[0].mxu0
      %v399 = vadd.f32 0.0, %v398
      %v400 = vpop.f32.mrb[0].mxu0
      %401 = vmatprep.mubr.f32.mxu0 0.0
      %402 = vmatmul.mubr.f32.gmra.mrb[0].mxu0 %v236
      %v403 = vpop.f32.mrb[0].mxu0
      %v404 = vadd.f32 0.0, %v403
      %v405 = vpop.f32.mrb[0].mxu0
      %406 = vmatprep.mubr.f32.mxu0 0.0
      %407 = vmatmul.mubr.f32.gmra.mrb[0].mxu0 %v239
      %v408 = vpop.f32.mrb[0].mxu0
      %v409 = vadd.f32 0.0, %v408
      %v410 = vpop.f32.mrb[0].mxu0
      %411 = vmatprep.mubr.f32.mxu0 0.0
      %412 = vmatmul.mubr.f32.gmra.mrb[0].mxu0 %v242
      %v413 = vpop.f32.mrb[0].mxu0
      %v414 = vadd.f32 0.0, %v413
      %v415 = vpop.f32.mrb[0].mxu0
      %416 = vmatprep.mubr.f32.mxu0 0.0
      %417 = vmatmul.mubr.f32.gmra.mrb[0].mxu0 %v245
      %v418 = vpop.f32.mrb[0].mxu0
      %v419 = vadd.f32 0.0, %v418
      %v420 = vpop.f32.mrb[0].mxu0
      %421 = vmatprep.mubr.f32.mxu0 0.0
      %422 = vmatmul.mubr.f32.gmra.mrb[0].mxu0 %v248
      %v423 = vpop.f32.mrb[0].mxu0
      %v424 = vadd.f32 0.0, %v423
      %v425 = vpop.f32.mrb[0].mxu0
      %426 = vmatprep.mubr.f32.mxu0 0.0
      %427 = vmatmul.mubr.f32.gmra.mrb[0].mxu0 %v251
      %v428 = vpop.f32.mrb[0].mxu0
      %v429 = vadd.f32 0.0, %v428
      %v430 = vpop.f32.mrb[0].mxu0
      %431 = vmatprep.mubr.f32.mxu0 0.0
      %432 = vmatmul.mubr.f32.gmra.mrb[0].mxu0 %v254
      %v433 = vpop.f32.mrb[0].mxu0
      %v434 = vadd.f32 0.0, %v433
      %v435 = vpop.f32.mrb[0].mxu0
      %436 = vmatprep.mubr.f32.mxu0 0.0
      %437 = vmatmul.mubr.f32.gmra.mrb[0].mxu0 %v257
      %v438 = vpop.f32.mrb[0].mxu0
      %v439 = vadd.f32 0.0, %v438
      %v440 = vpop.f32.mrb[0].mxu0
      %441 = vmatprep.mubr.f32.mxu0 0.0
      %442 = vmatmul.mubr.f32.gmra.mrb[0].mxu0 %v260
      %v443 = vpop.f32.mrb[0].mxu0
      %v444 = vadd.f32 0.0, %v443
      %v445 = vpop.f32.mrb[0].mxu0
      %446 = vmatprep.mubr.f32.mxu0 0.0
      %447 = vmatmul.mubr.f32.gmra.mrb[0].mxu0 %v263
      %v448 = vpop.f32.mrb[0].mxu0
      %v449 = vadd.f32 0.0, %v448
      %v450 = vpop.f32.mrb[0].mxu0
      %451 = vmatprep.mubr.f32.mxu0 0.0
      %452 = vmatmul.mubr.f32.gmra.mrb[0].mxu0 %v266
      %v453 = vpop.f32.mrb[0].mxu0
      %v454 = vadd.f32 0.0, %v453
      %v455 = vpop.f32.mrb[0].mxu0
      %456 = vmatprep.mubr.f32.mxu0 0.0
      %457 = vmatmul.mubr.f32.gmra.mrb[0].mxu0 %v269
      %v458 = vpop.f32.mrb[0].mxu0
      %v459 = vadd.f32 0.0, %v458
      %v460 = vpop.f32.mrb[0].mxu0
      %461 = vmatprep.mubr.f32.mxu0 0.0
      %462 = vmatmul.mubr.f32.gmra.mrb[0].mxu0 %v272
      %v463 = vpop.f32.mrb[0].mxu0
      %v464 = vadd.f32 0.0, %v463
      %v465 = vpop.f32.mrb[0].mxu0
      %466 = vmatprep.mubr.f32.mxu0 0.0
      %467 = vmatmul.mubr.f32.gmra.mrb[0].mxu0 %v275
      %v468 = vpop.f32.mrb[0].mxu0
      %v469 = vadd.f32 0.0, %v468
      %v470 = vpop.f32.mrb[0].mxu0
      %471 = vmatprep.mubr.f32.mxu0 0.0
      %472 = vmatmul.mubr.f32.gmra.mrb[0].mxu0 %v278
      %v473 = vpop.f32.mrb[0].mxu0
      %v474 = vadd.f32 0.0, %v473
      %v475 = vpop.f32.mrb[0].mxu0
      %476 = vmatprep.mubr.f32.mxu0 0.0
      %477 = vmatmul.mubr.f32.gmra.mrb[0].mxu0 %v281
      %v478 = vpop.f32.mrb[0].mxu0
      %v479 = vadd.f32 0.0, %v478
      %v480 = vpop.f32.mrb[0].mxu0
      %481 = vmatprep.mubr.f32.mxu0 0.0
      %482 = vmatmul.mubr.f32.gmra.mrb[0].mxu0 %v284
      %v483 = vpop.f32.mrb[0].mxu0
      %v484 = vadd.f32 0.0, %v483
      %v485 = vpop.f32.mrb[0].mxu0
      %486 = vmatprep.mubr.f32.mxu0 0.0
      %487 = vmatmul.mubr.f32.gmra.mrb[0].mxu0 %v287
      %v488 = vpop.f32.mrb[0].mxu0
      %v489 = vadd.f32 0.0, %v488
      %v490 = vpop.f32.mrb[0].mxu0
      %491 = vmatprep.mubr.f32.mxu0 0.0
      %492 = vmatmul.mubr.f32.gmra.mrb[0].mxu0 %v290
      %v493 = vpop.f32.mrb[0].mxu0
      %v494 = vadd.f32 0.0, %v493
      %v495 = vpop.f32.mrb[0].mxu0
      %496 = vdwg.mxu0
      %v497 = vadd.f32 %v176, %v359
      %v498 = vadd.f32 %v176, %v364
      %v499 = vadd.f32 %v176, %v369
      %v500 = vadd.f32 %v176, %v374
      %v501 = vadd.f32 %v176, %v379
      %v502 = vadd.f32 %v176, %v384
      %v503 = vadd.f32 %v176, %v389
      %v504 = vadd.f32 %v176, %v394
      %v505 = vadd.f32 %v176, %v399
      %v506 = vadd.f32 %v176, %v404
      %v507 = vadd.f32 %v176, %v409
      %v508 = vadd.f32 %v176, %v414
      %v509 = vadd.f32 %v176, %v419
      %v510 = vadd.f32 %v176, %v424
      %v511 = vadd.f32 %v176, %v429
      %v512 = vadd.f32 %v176, %v434
      %v513 = vadd.f32 %v176, %v439
      %v514 = vadd.f32 %v176, %v444
      %v515 = vadd.f32 %v176, %v449
      %v516 = vadd.f32 %v176, %v454
      %v517 = vadd.f32 %v176, %v459
      %v518 = vadd.f32 %v176, %v464
      %v519 = vadd.f32 %v176, %v469
      %v520 = vadd.f32 %v176, %v474
      %v521 = vadd.f32 %v176, %v479
      %v522 = vadd.f32 %v176, %v484
      %v523 = vadd.f32 %v176, %v489
      %v524 = vadd.f32 %v176, %v494
      %v525 = vld [vmem:[%s165 + $0x1] sm:$0xff]
      %v526 = vld [vmem:[%s165 + $0x9] sm:$0xff]
      %v527 = vld [vmem:[%s165 + $0x11] sm:$0xff]
      %v528 = vld [vmem:[%s165 + $0x19] sm:$0xff]
      %v529 = vld [vmem:[%s165 + $0x21] sm:$0xff]
      %v530 = vld [vmem:[%s165 + $0x29] sm:$0xff]
      %v531 = vld [vmem:[%s165 + $0x31] sm:$0xff]
      %v532 = vld [vmem:[%s165 + $0x39] sm:$0xff]
      %v533 = vld [vmem:[%s165 + $0x41] sm:$0xff]
      %v534 = vld [vmem:[%s165 + $0x49] sm:$0xff]
      %v535 = vld [vmem:[%s165 + $0x51] sm:$0xff]
      %v536 = vld [vmem:[%s165 + $0x59] sm:$0xff]
      %v537 = vld [vmem:[%s165 + $0x61] sm:$0xff]
      %v538 = vld [vmem:[%s165 + $0x69] sm:$0xff]
      %v539 = vld [vmem:[%s165 + $0x71] sm:$0xff]
      %v540 = vld [vmem:[%s165 + $0x79] sm:$0xff]
      %v541 = vld [vmem:[%s165 + $0x81] sm:$0xff]
      %v542 = vld [vmem:[%s165 + $0x89] sm:$0xff]
      %v543 = vld [vmem:[%s165 + $0x91] sm:$0xff]
      %v544 = vld [vmem:[%s165 + $0x99] sm:$0xff]
      %v545 = vld [vmem:[%s165 + $0xa1] sm:$0xff]
      %v546 = vld [vmem:[%s165 + $0xa9] sm:$0xff]
      %v547 = vld [vmem:[%s165 + $0xb1] sm:$0xff]
      %v548 = vld [vmem:[%s165 + $0xb9] sm:$0xff]
      %v549 = vld [vmem:[%s165 + $0xc1] sm:$0xff]
      %v550 = vld [vmem:[%s165 + $0xc9] sm:$0xff]
      %v551 = vld [vmem:[%s165 + $0xd1] sm:$0xff]
      %v552 = vld [vmem:[%s165 + $0xd9] sm:$0xff]
      %s553 = scalar_lea.vmem %s1, 8
      %v554 = vld [vmem:[%s553] sm:$0xff]
      %v556 = vsel %vm207, %v525, 0
      %v559 = vsel %vm207, %v526, 0
      %v562 = vsel %vm207, %v527, 0
      %v565 = vsel %vm207, %v528, 0
      %v568 = vsel %vm207, %v529, 0
      %v571 = vsel %vm207, %v530, 0
      %v574 = vsel %vm207, %v531, 0
      %v577 = vsel %vm207, %v532, 0
      %v580 = vsel %vm207, %v533, 0
      %v583 = vsel %vm207, %v534, 0
      %v586 = vsel %vm207, %v535, 0
      %v589 = vsel %vm207, %v536, 0
      %v592 = vsel %vm207, %v537, 0
      %v595 = vsel %vm207, %v538, 0
      %v598 = vsel %vm207, %v539, 0
      %v601 = vsel %vm207, %v540, 0
      %v604 = vsel %vm207, %v541, 0
      %v607 = vsel %vm207, %v542, 0
      %v610 = vsel %vm207, %v543, 0
      %v613 = vsel %vm207, %v544, 0
      %v616 = vsel %vm207, %v545, 0
      %v619 = vsel %vm207, %v546, 0
      %v622 = vsel %vm207, %v547, 0
      %v625 = vsel %vm207, %v548, 0
      %v628 = vsel %vm207, %v549, 0
      %v631 = vsel %vm207, %v550, 0
      %v634 = vsel %vm207, %v551, 0
      %v637 = vsel %vm207, %v552, 0
      %639 = vmatprep.subr.mxu0 0.0
      %640 = vmatpush1.msra.mxu0 %v554
      %641 = vmatprep.subr.mxu0 0.0
      %642 = vmatpush1.msra.mxu0 0.0
      %643 = vmatprep.subr.mxu0 0.0
      %644 = vmatpush1.msra.mxu0 0.0
      %645 = vmatprep.subr.mxu0 0.0
      %646 = vmatpush1.msra.mxu0 0.0
      %647 = vmatprep.subr.mxu0 0.0
      %648 = vmatpush1.msra.mxu0 0.0
      %649 = vmatprep.subr.mxu0 0.0
      %650 = vmatpush1.msra.mxu0 0.0
      %651 = vmatprep.subr.mxu0 0.0
      %652 = vmatpush1.msra.mxu0 0.0
      %653 = vmatprep.subr.mxu0 0.0
      %654 = vmatpush1.msra.mxu0 0.0
      %655 = vmatprep.subr.mxu0 0.0
      %656 = vmatpush1.msra.mxu0 0.0
      %657 = vmatprep.subr.mxu0 0.0
      %658 = vmatpush1.msra.mxu0 0.0
      %659 = vmatprep.subr.mxu0 0.0
      %660 = vmatpush1.msra.mxu0 0.0
      %661 = vmatprep.subr.mxu0 0.0
      %662 = vmatpush1.msra.mxu0 0.0
      %663 = vmatprep.subr.mxu0 0.0
      %664 = vmatpush1.msra.mxu0 0.0
      %665 = vmatprep.subr.mxu0 0.0
      %666 = vmatpush1.msra.mxu0 0.0
      %667 = vmatprep.subr.mxu0 0.0
      %668 = vmatpush1.msra.mxu0 0.0
      %669 = vmatprep.subr.mxu0 0.0
      %670 = vmatpush1.msra.mxu0 0.0
      %671 = vmatprep.subr.mxu0 0.0
      %672 = vmatpush1.msra.mxu0 0.0
      %673 = vmatprep.subr.mxu0 0.0
      %674 = vmatpush1.msra.mxu0 0.0
      %675 = vmatprep.subr.mxu0 0.0
      %676 = vmatpush1.msra.mxu0 0.0
      %677 = vmatprep.subr.mxu0 0.0
      %678 = vmatpush1.msra.mxu0 0.0
      %679 = vmatprep.subr.mxu0 0.0
      %680 = vmatpush1.msra.mxu0 0.0
      %681 = vmatprep.subr.mxu0 0.0
      %682 = vmatpush1.msra.mxu0 0.0
      %683 = vmatprep.subr.mxu0 0.0
      %684 = vmatpush1.msra.mxu0 0.0
      %685 = vmatprep.subr.mxu0 0.0
      %686 = vmatpush1.msra.mxu0 0.0
      %687 = vmatprep.subr.mxu0 0.0
      %688 = vmatpush1.msra.mxu0 0.0
      %689 = vmatprep.subr.mxu0 0.0
      %690 = vmatpush1.msra.mxu0 0.0
      %691 = vmatprep.subr.mxu0 0.0
      %692 = vmatpush1.msra.mxu0 0.0
      %693 = vmatprep.subr.mxu0 0.0
      %694 = vmatpush1.msra.mxu0 0.0
      %695 = vmatprep.subr.mxu0 0.0
      %696 = vmatpush1.msra.mxu0 0.0
      %697 = vmatprep.subr.mxu0 0.0
      %698 = vmatpush1.msra.mxu0 0.0
      %699 = vmatprep.subr.mxu0 0.0
      %700 = vmatpush1.msra.mxu0 0.0
      %701 = vmatprep.subr.mxu0 0.0
      %702 = vmatpush1.msra.mxu0 0.0
      %703 = vmatprep.mubr.f32.mxu0 0.0
      %704 = vmatmul.mubr.f32.gmra.mrb[0].mxu0 %v556
      %v705 = vpop.f32.mrb[0].mxu0
      %v706 = vadd.f32 0.0, %v705
      %v707 = vpop.f32.mrb[0].mxu0
      %708 = vmatprep.mubr.f32.mxu0 0.0
      %709 = vmatmul.mubr.f32.gmra.mrb[0].mxu0 %v559
      %v710 = vpop.f32.mrb[0].mxu0
      %v711 = vadd.f32 0.0, %v710
      %v712 = vpop.f32.mrb[0].mxu0
      %713 = vmatprep.mubr.f32.mxu0 0.0
      %714 = vmatmul.mubr.f32.gmra.mrb[0].mxu0 %v562
      %v715 = vpop.f32.mrb[0].mxu0
      %v716 = vadd.f32 0.0, %v715
      %v717 = vpop.f32.mrb[0].mxu0
      %718 = vmatprep.mubr.f32.mxu0 0.0
      %719 = vmatmul.mubr.f32.gmra.mrb[0].mxu0 %v565
      %v720 = vpop.f32.mrb[0].mxu0
      %v721 = vadd.f32 0.0, %v720
      %v722 = vpop.f32.mrb[0].mxu0
      %723 = vmatprep.mubr.f32.mxu0 0.0
      %724 = vmatmul.mubr.f32.gmra.mrb[0].mxu0 %v568
      %v725 = vpop.f32.mrb[0].mxu0
      %v726 = vadd.f32 0.0, %v725
      %v727 = vpop.f32.mrb[0].mxu0
      %728 = vmatprep.mubr.f32.mxu0 0.0
      %729 = vmatmul.mubr.f32.gmra.mrb[0].mxu0 %v571
      %v730 = vpop.f32.mrb[0].mxu0
      %v731 = vadd.f32 0.0, %v730
      %v732 = vpop.f32.mrb[0].mxu0
      %733 = vmatprep.mubr.f32.mxu0 0.0
      %734 = vmatmul.mubr.f32.gmra.mrb[0].mxu0 %v574
      %v735 = vpop.f32.mrb[0].mxu0
      %v736 = vadd.f32 0.0, %v735
      %v737 = vpop.f32.mrb[0].mxu0
      %738 = vmatprep.mubr.f32.mxu0 0.0
      %739 = vmatmul.mubr.f32.gmra.mrb[0].mxu0 %v577
      %v740 = vpop.f32.mrb[0].mxu0
      %v741 = vadd.f32 0.0, %v740
      %v742 = vpop.f32.mrb[0].mxu0
      %743 = vmatprep.mubr.f32.mxu0 0.0
      %744 = vmatmul.mubr.f32.gmra.mrb[0].mxu0 %v580
      %v745 = vpop.f32.mrb[0].mxu0
      %v746 = vadd.f32 0.0, %v745
      %v747 = vpop.f32.mrb[0].mxu0
      %748 = vmatprep.mubr.f32.mxu0 0.0
      %749 = vmatmul.mubr.f32.gmra.mrb[0].mxu0 %v583
      %v750 = vpop.f32.mrb[0].mxu0
      %v751 = vadd.f32 0.0, %v750
      %v752 = vpop.f32.mrb[0].mxu0
      %753 = vmatprep.mubr.f32.mxu0 0.0
      %754 = vmatmul.mubr.f32.gmra.mrb[0].mxu0 %v586
      %v755 = vpop.f32.mrb[0].mxu0
      %v756 = vadd.f32 0.0, %v755
      %v757 = vpop.f32.mrb[0].mxu0
      %758 = vmatprep.mubr.f32.mxu0 0.0
      %759 = vmatmul.mubr.f32.gmra.mrb[0].mxu0 %v589
      %v760 = vpop.f32.mrb[0].mxu0
      %v761 = vadd.f32 0.0, %v760
      %v762 = vpop.f32.mrb[0].mxu0
      %763 = vmatprep.mubr.f32.mxu0 0.0
      %764 = vmatmul.mubr.f32.gmra.mrb[0].mxu0 %v592
      %v765 = vpop.f32.mrb[0].mxu0
      %v766 = vadd.f32 0.0, %v765
      %v767 = vpop.f32.mrb[0].mxu0
      %768 = vmatprep.mubr.f32.mxu0 0.0
      %769 = vmatmul.mubr.f32.gmra.mrb[0].mxu0 %v595
      %v770 = vpop.f32.mrb[0].mxu0
      %v771 = vadd.f32 0.0, %v770
      %v772 = vpop.f32.mrb[0].mxu0
      %773 = vmatprep.mubr.f32.mxu0 0.0
      %774 = vmatmul.mubr.f32.gmra.mrb[0].mxu0 %v598
      %v775 = vpop.f32.mrb[0].mxu0
      %v776 = vadd.f32 0.0, %v775
      %v777 = vpop.f32.mrb[0].mxu0
      %778 = vmatprep.mubr.f32.mxu0 0.0
      %779 = vmatmul.mubr.f32.gmra.mrb[0].mxu0 %v601
      %v780 = vpop.f32.mrb[0].mxu0
      %v781 = vadd.f32 0.0, %v780
      %v782 = vpop.f32.mrb[0].mxu0
      %783 = vmatprep.mubr.f32.mxu0 0.0
      %784 = vmatmul.mubr.f32.gmra.mrb[0].mxu0 %v604
      %v785 = vpop.f32.mrb[0].mxu0
      %v786 = vadd.f32 0.0, %v785
      %v787 = vpop.f32.mrb[0].mxu0
      %788 = vmatprep.mubr.f32.mxu0 0.0
      %789 = vmatmul.mubr.f32.gmra.mrb[0].mxu0 %v607
      %v790 = vpop.f32.mrb[0].mxu0
      %v791 = vadd.f32 0.0, %v790
      %v792 = vpop.f32.mrb[0].mxu0
      %793 = vmatprep.mubr.f32.mxu0 0.0
      %794 = vmatmul.mubr.f32.gmra.mrb[0].mxu0 %v610
      %v795 = vpop.f32.mrb[0].mxu0
      %v796 = vadd.f32 0.0, %v795
      %v797 = vpop.f32.mrb[0].mxu0
      %798 = vmatprep.mubr.f32.mxu0 0.0
      %799 = vmatmul.mubr.f32.gmra.mrb[0].mxu0 %v613
      %v800 = vpop.f32.mrb[0].mxu0
      %v801 = vadd.f32 0.0, %v800
      %v802 = vpop.f32.mrb[0].mxu0
      %803 = vmatprep.mubr.f32.mxu0 0.0
      %804 = vmatmul.mubr.f32.gmra.mrb[0].mxu0 %v616
      %v805 = vpop.f32.mrb[0].mxu0
      %v806 = vadd.f32 0.0, %v805
      %v807 = vpop.f32.mrb[0].mxu0
      %808 = vmatprep.mubr.f32.mxu0 0.0
      %809 = vmatmul.mubr.f32.gmra.mrb[0].mxu0 %v619
      %v810 = vpop.f32.mrb[0].mxu0
      %v811 = vadd.f32 0.0, %v810
      %v812 = vpop.f32.mrb[0].mxu0
      %813 = vmatprep.mubr.f32.mxu0 0.0
      %814 = vmatmul.mubr.f32.gmra.mrb[0].mxu0 %v622
      %v815 = vpop.f32.mrb[0].mxu0
      %v816 = vadd.f32 0.0, %v815
      %v817 = vpop.f32.mrb[0].mxu0
      %818 = vmatprep.mubr.f32.mxu0 0.0
      %819 = vmatmul.mubr.f32.gmra.mrb[0].mxu0 %v625
      %v820 = vpop.f32.mrb[0].mxu0
      %v821 = vadd.f32 0.0, %v820
      %v822 = vpop.f32.mrb[0].mxu0
      %823 = vmatprep.mubr.f32.mxu0 0.0
      %824 = vmatmul.mubr.f32.gmra.mrb[0].mxu0 %v628
      %v825 = vpop.f32.mrb[0].mxu0
      %v826 = vadd.f32 0.0, %v825
      %v827 = vpop.f32.mrb[0].mxu0
      %828 = vmatprep.mubr.f32.mxu0 0.0
      %829 = vmatmul.mubr.f32.gmra.mrb[0].mxu0 %v631
      %v830 = vpop.f32.mrb[0].mxu0
      %v831 = vadd.f32 0.0, %v830
      %v832 = vpop.f32.mrb[0].mxu0
      %833 = vmatprep.mubr.f32.mxu0 0.0
      %834 = vmatmul.mubr.f32.gmra.mrb[0].mxu0 %v634
      %v835 = vpop.f32.mrb[0].mxu0
      %v836 = vadd.f32 0.0, %v835
      %v837 = vpop.f32.mrb[0].mxu0
      %838 = vmatprep.mubr.f32.mxu0 0.0
      %839 = vmatmul.mubr.f32.gmra.mrb[0].mxu0 %v637
      %v840 = vpop.f32.mrb[0].mxu0
      %v841 = vadd.f32 0.0, %v840
      %v842 = vpop.f32.mrb[0].mxu0
      %843 = vdwg.mxu0
      %v844 = vadd.f32 %v497, %v706
      %v845 = vadd.f32 %v498, %v711
      %v846 = vadd.f32 %v499, %v716
      %v847 = vadd.f32 %v500, %v721
      %v848 = vadd.f32 %v501, %v726
      %v849 = vadd.f32 %v502, %v731
      %v850 = vadd.f32 %v503, %v736
      %v851 = vadd.f32 %v504, %v741
      %v852 = vadd.f32 %v505, %v746
      %v853 = vadd.f32 %v506, %v751
      %v854 = vadd.f32 %v507, %v756
      %v855 = vadd.f32 %v508, %v761
      %v856 = vadd.f32 %v509, %v766
      %v857 = vadd.f32 %v510, %v771
      %v858 = vadd.f32 %v511, %v776
      %v859 = vadd.f32 %v512, %v781
      %v860 = vadd.f32 %v513, %v786
      %v861 = vadd.f32 %v514, %v791
      %v862 = vadd.f32 %v515, %v796
      %v863 = vadd.f32 %v516, %v801
      %v864 = vadd.f32 %v517, %v806
      %v865 = vadd.f32 %v518, %v811
      %v866 = vadd.f32 %v519, %v816
      %v867 = vadd.f32 %v520, %v821
      %v868 = vadd.f32 %v521, %v826
      %v869 = vadd.f32 %v522, %v831
      %v870 = vadd.f32 %v523, %v836
      %v871 = vadd.f32 %v524, %v841
      %v872 = vld [vmem:[%s165 + $0x2] sm:$0xff]
      %v873 = vld [vmem:[%s165 + $0xa] sm:$0xff]
      %v874 = vld [vmem:[%s165 + $0x12] sm:$0xff]
      %v875 = vld [vmem:[%s165 + $0x1a] sm:$0xff]
      %v876 = vld [vmem:[%s165 + $0x22] sm:$0xff]
      %v877 = vld [vmem:[%s165 + $0x2a] sm:$0xff]
      %v878 = vld [vmem:[%s165 + $0x32] sm:$0xff]
      %v879 = vld [vmem:[%s165 + $0x3a] sm:$0xff]
      %v880 = vld [vmem:[%s165 + $0x42] sm:$0xff]
      %v881 = vld [vmem:[%s165 + $0x4a] sm:$0xff]
      %v882 = vld [vmem:[%s165 + $0x52] sm:$0xff]
      %v883 = vld [vmem:[%s165 + $0x5a] sm:$0xff]
      %v884 = vld [vmem:[%s165 + $0x62] sm:$0xff]
      %v885 = vld [vmem:[%s165 + $0x6a] sm:$0xff]
      %v886 = vld [vmem:[%s165 + $0x72] sm:$0xff]
      %v887 = vld [vmem:[%s165 + $0x7a] sm:$0xff]
      %v888 = vld [vmem:[%s165 + $0x82] sm:$0xff]
      %v889 = vld [vmem:[%s165 + $0x8a] sm:$0xff]
      %v890 = vld [vmem:[%s165 + $0x92] sm:$0xff]
      %v891 = vld [vmem:[%s165 + $0x9a] sm:$0xff]
      %v892 = vld [vmem:[%s165 + $0xa2] sm:$0xff]
      %v893 = vld [vmem:[%s165 + $0xaa] sm:$0xff]
      %v894 = vld [vmem:[%s165 + $0xb2] sm:$0xff]
      %v895 = vld [vmem:[%s165 + $0xba] sm:$0xff]
      %v896 = vld [vmem:[%s165 + $0xc2] sm:$0xff]
      %v897 = vld [vmem:[%s165 + $0xca] sm:$0xff]
      %v898 = vld [vmem:[%s165 + $0xd2] sm:$0xff]
      %v899 = vld [vmem:[%s165 + $0xda] sm:$0xff]
      %s900 = scalar_lea.vmem %s1, 16
      %v901 = vld [vmem:[%s900] sm:$0xff]
      %v903 = vsel %vm207, %v872, 0
      %v906 = vsel %vm207, %v873, 0
      %v909 = vsel %vm207, %v874, 0
      %v912 = vsel %vm207, %v875, 0
      %v915 = vsel %vm207, %v876, 0
      %v918 = vsel %vm207, %v877, 0
      %v921 = vsel %vm207, %v878, 0
      %v924 = vsel %vm207, %v879, 0
      %v927 = vsel %vm207, %v880, 0
      %v930 = vsel %vm207, %v881, 0
      %v933 = vsel %vm207, %v882, 0
      %v936 = vsel %vm207, %v883, 0
      %v939 = vsel %vm207, %v884, 0
      %v942 = vsel %vm207, %v885, 0
      %v945 = vsel %vm207, %v886, 0
      %v948 = vsel %vm207, %v887, 0
      %v951 = vsel %vm207, %v888, 0
      %v954 = vsel %vm207, %v889, 0
      %v957 = vsel %vm207, %v890, 0
      %v960 = vsel %vm207, %v891, 0
      %v963 = vsel %vm207, %v892, 0
      %v966 = vsel %vm207, %v893, 0
      %v969 = vsel %vm207, %v894, 0
      %v972 = vsel %vm207, %v895, 0
      %v975 = vsel %vm207, %v896, 0
      %v978 = vsel %vm207, %v897, 0
      %v981 = vsel %vm207, %v898, 0
      %v984 = vsel %vm207, %v899, 0
      %986 = vmatprep.subr.mxu0 0.0
      %987 = vmatpush1.msra.mxu0 %v901
      %988 = vmatprep.subr.mxu0 0.0
      %989 = vmatpush1.msra.mxu0 0.0
      %990 = vmatprep.subr.mxu0 0.0
      %991 = vmatpush1.msra.mxu0 0.0
      %992 = vmatprep.subr.mxu0 0.0
      %993 = vmatpush1.msra.mxu0 0.0
      %994 = vmatprep.subr.mxu0 0.0
      %995 = vmatpush1.msra.mxu0 0.0
      %996 = vmatprep.subr.mxu0 0.0
      %997 = vmatpush1.msra.mxu0 0.0
      %998 = vmatprep.subr.mxu0 0.0
      %999 = vmatpush1.msra.mxu0 0.0
      %1000 = vmatprep.subr.mxu0 0.0
      %1001 = vmatpush1.msra.mxu0 0.0
      %1002 = vmatprep.subr.mxu0 0.0
      %1003 = vmatpush1.msra.mxu0 0.0
      %1004 = vmatprep.subr.mxu0 0.0
      %1005 = vmatpush1.msra.mxu0 0.0
      %1006 = vmatprep.subr.mxu0 0.0
      %1007 = vmatpush1.msra.mxu0 0.0
      %1008 = vmatprep.subr.mxu0 0.0
      %1009 = vmatpush1.msra.mxu0 0.0
      %1010 = vmatprep.subr.mxu0 0.0
      %1011 = vmatpush1.msra.mxu0 0.0
      %1012 = vmatprep.subr.mxu0 0.0
      %1013 = vmatpush1.msra.mxu0 0.0
      %1014 = vmatprep.subr.mxu0 0.0
      %1015 = vmatpush1.msra.mxu0 0.0
      %1016 = vmatprep.subr.mxu0 0.0
      %1017 = vmatpush1.msra.mxu0 0.0
      %1018 = vmatprep.subr.mxu0 0.0
      %1019 = vmatpush1.msra.mxu0 0.0
      %1020 = vmatprep.subr.mxu0 0.0
      %1021 = vmatpush1.msra.mxu0 0.0
      %1022 = vmatprep.subr.mxu0 0.0
      %1023 = vmatpush1.msra.mxu0 0.0
      %1024 = vmatprep.subr.mxu0 0.0
      %1025 = vmatpush1.msra.mxu0 0.0
      %1026 = vmatprep.subr.mxu0 0.0
      %1027 = vmatpush1.msra.mxu0 0.0
      %1028 = vmatprep.subr.mxu0 0.0
      %1029 = vmatpush1.msra.mxu0 0.0
      %1030 = vmatprep.subr.mxu0 0.0
      %1031 = vmatpush1.msra.mxu0 0.0
      %1032 = vmatprep.subr.mxu0 0.0
      %1033 = vmatpush1.msra.mxu0 0.0
      %1034 = vmatprep.subr.mxu0 0.0
      %1035 = vmatpush1.msra.mxu0 0.0
      %1036 = vmatprep.subr.mxu0 0.0
      %1037 = vmatpush1.msra.mxu0 0.0
      %1038 = vmatprep.subr.mxu0 0.0
      %1039 = vmatpush1.msra.mxu0 0.0
      %1040 = vmatprep.subr.mxu0 0.0
      %1041 = vmatpush1.msra.mxu0 0.0
      %1042 = vmatprep.subr.mxu0 0.0
      %1043 = vmatpush1.msra.mxu0 0.0
      %1044 = vmatprep.subr.mxu0 0.0
      %1045 = vmatpush1.msra.mxu0 0.0
      %1046 = vmatprep.subr.mxu0 0.0
      %1047 = vmatpush1.msra.mxu0 0.0
      %1048 = vmatprep.subr.mxu0 0.0
      %1049 = vmatpush1.msra.mxu0 0.0
      %1050 = vmatprep.mubr.f32.mxu0 0.0
      %1051 = vmatmul.mubr.f32.gmra.mrb[0].mxu0 %v903
      %v1052 = vpop.f32.mrb[0].mxu0
      %v1053 = vadd.f32 0.0, %v1052
      %v1054 = vpop.f32.mrb[0].mxu0
      %1055 = vmatprep.mubr.f32.mxu0 0.0
      %1056 = vmatmul.mubr.f32.gmra.mrb[0].mxu0 %v906
      %v1057 = vpop.f32.mrb[0].mxu0
      %v1058 = vadd.f32 0.0, %v1057
      %v1059 = vpop.f32.mrb[0].mxu0
      %1060 = vmatprep.mubr.f32.mxu0 0.0
      %1061 = vmatmul.mubr.f32.gmra.mrb[0].mxu0 %v909
      %v1062 = vpop.f32.mrb[0].mxu0
      %v1063 = vadd.f32 0.0, %v1062
      %v1064 = vpop.f32.mrb[0].mxu0
      %1065 = vmatprep.mubr.f32.mxu0 0.0
      %1066 = vmatmul.mubr.f32.gmra.mrb[0].mxu0 %v912
      %v1067 = vpop.f32.mrb[0].mxu0
      %v1068 = vadd.f32 0.0, %v1067
      %v1069 = vpop.f32.mrb[0].mxu0
      %1070 = vmatprep.mubr.f32.mxu0 0.0
      %1071 = vmatmul.mubr.f32.gmra.mrb[0].mxu0 %v915
      %v1072 = vpop.f32.mrb[0].mxu0
      %v1073 = vadd.f32 0.0, %v1072
      %v1074 = vpop.f32.mrb[0].mxu0
      %1075 = vmatprep.mubr.f32.mxu0 0.0
      %1076 = vmatmul.mubr.f32.gmra.mrb[0].mxu0 %v918
      %v1077 = vpop.f32.mrb[0].mxu0
      %v1078 = vadd.f32 0.0, %v1077
      %v1079 = vpop.f32.mrb[0].mxu0
      %1080 = vmatprep.mubr.f32.mxu0 0.0
      %1081 = vmatmul.mubr.f32.gmra.mrb[0].mxu0 %v921
      %v1082 = vpop.f32.mrb[0].mxu0
      %v1083 = vadd.f32 0.0, %v1082
      %v1084 = vpop.f32.mrb[0].mxu0
      %1085 = vmatprep.mubr.f32.mxu0 0.0
      %1086 = vmatmul.mubr.f32.gmra.mrb[0].mxu0 %v924
      %v1087 = vpop.f32.mrb[0].mxu0
      %v1088 = vadd.f32 0.0, %v1087
      %v1089 = vpop.f32.mrb[0].mxu0
      %1090 = vmatprep.mubr.f32.mxu0 0.0
      %1091 = vmatmul.mubr.f32.gmra.mrb[0].mxu0 %v927
      %v1092 = vpop.f32.mrb[0].mxu0
      %v1093 = vadd.f32 0.0, %v1092
      %v1094 = vpop.f32.mrb[0].mxu0
      %1095 = vmatprep.mubr.f32.mxu0 0.0
      %1096 = vmatmul.mubr.f32.gmra.mrb[0].mxu0 %v930
      %v1097 = vpop.f32.mrb[0].mxu0
      %v1098 = vadd.f32 0.0, %v1097
      %v1099 = vpop.f32.mrb[0].mxu0
      %1100 = vmatprep.mubr.f32.mxu0 0.0
      %1101 = vmatmul.mubr.f32.gmra.mrb[0].mxu0 %v933
      %v1102 = vpop.f32.mrb[0].mxu0
      %v1103 = vadd.f32 0.0, %v1102
      %v1104 = vpop.f32.mrb[0].mxu0
      %1105 = vmatprep.mubr.f32.mxu0 0.0
      %1106 = vmatmul.mubr.f32.gmra.mrb[0].mxu0 %v936
      %v1107 = vpop.f32.mrb[0].mxu0
      %v1108 = vadd.f32 0.0, %v1107
      %v1109 = vpop.f32.mrb[0].mxu0
      %1110 = vmatprep.mubr.f32.mxu0 0.0
      %1111 = vmatmul.mubr.f32.gmra.mrb[0].mxu0 %v939
      %v1112 = vpop.f32.mrb[0].mxu0
      %v1113 = vadd.f32 0.0, %v1112
      %v1114 = vpop.f32.mrb[0].mxu0
      %1115 = vmatprep.mubr.f32.mxu0 0.0
      %1116 = vmatmul.mubr.f32.gmra.mrb[0].mxu0 %v942
      %v1117 = vpop.f32.mrb[0].mxu0
      %v1118 = vadd.f32 0.0, %v1117
      %v1119 = vpop.f32.mrb[0].mxu0
      %1120 = vmatprep.mubr.f32.mxu0 0.0
      %1121 = vmatmul.mubr.f32.gmra.mrb[0].mxu0 %v945
      %v1122 = vpop.f32.mrb[0].mxu0
      %v1123 = vadd.f32 0.0, %v1122
      %v1124 = vpop.f32.mrb[0].mxu0
      %1125 = vmatprep.mubr.f32.mxu0 0.0
      %1126 = vmatmul.mubr.f32.gmra.mrb[0].mxu0 %v948
      %v1127 = vpop.f32.mrb[0].mxu0
      %v1128 = vadd.f32 0.0, %v1127
      %v1129 = vpop.f32.mrb[0].mxu0
      %1130 = vmatprep.mubr.f32.mxu0 0.0
      %1131 = vmatmul.mubr.f32.gmra.mrb[0].mxu0 %v951
      %v1132 = vpop.f32.mrb[0].mxu0
      %v1133 = vadd.f32 0.0, %v1132
      %v1134 = vpop.f32.mrb[0].mxu0
      %1135 = vmatprep.mubr.f32.mxu0 0.0
      %1136 = vmatmul.mubr.f32.gmra.mrb[0].mxu0 %v954
      %v1137 = vpop.f32.mrb[0].mxu0
      %v1138 = vadd.f32 0.0, %v1137
      %v1139 = vpop.f32.mrb[0].mxu0
      %1140 = vmatprep.mubr.f32.mxu0 0.0
      %1141 = vmatmul.mubr.f32.gmra.mrb[0].mxu0 %v957
      %v1142 = vpop.f32.mrb[0].mxu0
      %v1143 = vadd.f32 0.0, %v1142
      %v1144 = vpop.f32.mrb[0].mxu0
      %1145 = vmatprep.mubr.f32.mxu0 0.0
      %1146 = vmatmul.mubr.f32.gmra.mrb[0].mxu0 %v960
      %v1147 = vpop.f32.mrb[0].mxu0
      %v1148 = vadd.f32 0.0, %v1147
      %v1149 = vpop.f32.mrb[0].mxu0
      %1150 = vmatprep.mubr.f32.mxu0 0.0
      %1151 = vmatmul.mubr.f32.gmra.mrb[0].mxu0 %v963
      %v1152 = vpop.f32.mrb[0].mxu0
      %v1153 = vadd.f32 0.0, %v1152
      %v1154 = vpop.f32.mrb[0].mxu0
      %1155 = vmatprep.mubr.f32.mxu0 0.0
      %1156 = vmatmul.mubr.f32.gmra.mrb[0].mxu0 %v966
      %v1157 = vpop.f32.mrb[0].mxu0
      %v1158 = vadd.f32 0.0, %v1157
      %v1159 = vpop.f32.mrb[0].mxu0
      %1160 = vmatprep.mubr.f32.mxu0 0.0
      %1161 = vmatmul.mubr.f32.gmra.mrb[0].mxu0 %v969
      %v1162 = vpop.f32.mrb[0].mxu0
      %v1163 = vadd.f32 0.0, %v1162
      %v1164 = vpop.f32.mrb[0].mxu0
      %1165 = vmatprep.mubr.f32.mxu0 0.0
      %1166 = vmatmul.mubr.f32.gmra.mrb[0].mxu0 %v972
      %v1167 = vpop.f32.mrb[0].mxu0
      %v1168 = vadd.f32 0.0, %v1167
      %v1169 = vpop.f32.mrb[0].mxu0
      %1170 = vmatprep.mubr.f32.mxu0 0.0
      %1171 = vmatmul.mubr.f32.gmra.mrb[0].mxu0 %v975
      %v1172 = vpop.f32.mrb[0].mxu0
      %v1173 = vadd.f32 0.0, %v1172
      %v1174 = vpop.f32.mrb[0].mxu0
      %1175 = vmatprep.mubr.f32.mxu0 0.0
      %1176 = vmatmul.mubr.f32.gmra.mrb[0].mxu0 %v978
      %v1177 = vpop.f32.mrb[0].mxu0
      %v1178 = vadd.f32 0.0, %v1177
      %v1179 = vpop.f32.mrb[0].mxu0
      %1180 = vmatprep.mubr.f32.mxu0 0.0
      %1181 = vmatmul.mubr.f32.gmra.mrb[0].mxu0 %v981
      %v1182 = vpop.f32.mrb[0].mxu0
      %v1183 = vadd.f32 0.0, %v1182
      %v1184 = vpop.f32.mrb[0].mxu0
      %1185 = vmatprep.mubr.f32.mxu0 0.0
      %1186 = vmatmul.mubr.f32.gmra.mrb[0].mxu0 %v984
      %v1187 = vpop.f32.mrb[0].mxu0
      %v1188 = vadd.f32 0.0, %v1187
      %v1189 = vpop.f32.mrb[0].mxu0
      %1190 = vdwg.mxu0
      %v1191 = vadd.f32 %v844, %v1053
      %v1192 = vadd.f32 %v845, %v1058
      %v1193 = vadd.f32 %v846, %v1063
      %v1194 = vadd.f32 %v847, %v1068
      %v1195 = vadd.f32 %v848, %v1073
      %v1196 = vadd.f32 %v849, %v1078
      %v1197 = vadd.f32 %v850, %v1083
      %v1198 = vadd.f32 %v851, %v1088
      %v1199 = vadd.f32 %v852, %v1093
      %v1200 = vadd.f32 %v853, %v1098
      %v1201 = vadd.f32 %v854, %v1103
      %v1202 = vadd.f32 %v855, %v1108
      %v1203 = vadd.f32 %v856, %v1113
      %v1204 = vadd.f32 %v857, %v1118
      %v1205 = vadd.f32 %v858, %v1123
      %v1206 = vadd.f32 %v859, %v1128
      %v1207 = vadd.f32 %v860, %v1133
      %v1208 = vadd.f32 %v861, %v1138
      %v1209 = vadd.f32 %v862, %v1143
      %v1210 = vadd.f32 %v863, %v1148
      %v1211 = vadd.f32 %v864, %v1153
      %v1212 = vadd.f32 %v865, %v1158
      %v1213 = vadd.f32 %v866, %v1163
      %v1214 = vadd.f32 %v867, %v1168
      %v1215 = vadd.f32 %v868, %v1173
      %v1216 = vadd.f32 %v869, %v1178
      %v1217 = vadd.f32 %v870, %v1183
      %v1218 = vadd.f32 %v871, %v1188
      %v1219 = vld [vmem:[%s165 + $0x10] sm:$0xff]
      %v1220 = vld [vmem:[%s165 + $0x18] sm:$0xff]
      %v1221 = vld [vmem:[%s165 + $0x20] sm:$0xff]
      %v1222 = vld [vmem:[%s165 + $0x28] sm:$0xff]
      %v1223 = vld [vmem:[%s165 + $0x30] sm:$0xff]
      %v1224 = vld [vmem:[%s165 + $0x38] sm:$0xff]
      %v1225 = vld [vmem:[%s165 + $0x40] sm:$0xff]
      %v1226 = vld [vmem:[%s165 + $0x48] sm:$0xff]
      %v1227 = vld [vmem:[%s165 + $0x50] sm:$0xff]
      %v1228 = vld [vmem:[%s165 + $0x58] sm:$0xff]
      %v1229 = vld [vmem:[%s165 + $0x60] sm:$0xff]
      %v1230 = vld [vmem:[%s165 + $0x68] sm:$0xff]
      %v1231 = vld [vmem:[%s165 + $0x70] sm:$0xff]
      %v1232 = vld [vmem:[%s165 + $0x78] sm:$0xff]
      %v1233 = vld [vmem:[%s165 + $0x80] sm:$0xff]
      %v1234 = vld [vmem:[%s165 + $0x88] sm:$0xff]
      %v1235 = vld [vmem:[%s165 + $0x90] sm:$0xff]
      %v1236 = vld [vmem:[%s165 + $0x98] sm:$0xff]
      %v1237 = vld [vmem:[%s165 + $0xa0] sm:$0xff]
      %v1238 = vld [vmem:[%s165 + $0xa8] sm:$0xff]
      %v1239 = vld [vmem:[%s165 + $0xb0] sm:$0xff]
      %v1240 = vld [vmem:[%s165 + $0xb8] sm:$0xff]
      %v1241 = vld [vmem:[%s165 + $0xc0] sm:$0xff]
      %v1242 = vld [vmem:[%s165 + $0xc8] sm:$0xff]
      %v1243 = vld [vmem:[%s165 + $0xd0] sm:$0xff]
      %v1244 = vld [vmem:[%s165 + $0xd8] sm:$0xff]
      %v1245 = vld [vmem:[%s165 + $0xe0] sm:$0xff]
      %v1246 = vld [vmem:[%s165 + $0xe8] sm:$0xff]
      %s1247 = scalar_lea.vmem %s1, 24
      %v1248 = vld [vmem:[%s1247] sm:$0xff]
      %v1250 = vsel %vm207, %v1219, 0
      %v1253 = vsel %vm207, %v1220, 0
      %v1256 = vsel %vm207, %v1221, 0
      %v1259 = vsel %vm207, %v1222, 0
      %v1262 = vsel %vm207, %v1223, 0
      %v1265 = vsel %vm207, %v1224, 0
      %v1268 = vsel %vm207, %v1225, 0
      %v1271 = vsel %vm207, %v1226, 0
      %v1274 = vsel %vm207, %v1227, 0
      %v1277 = vsel %vm207, %v1228, 0
      %v1280 = vsel %vm207, %v1229, 0
      %v1283 = vsel %vm207, %v1230, 0
      %v1286 = vsel %vm207, %v1231, 0
      %v1289 = vsel %vm207, %v1232, 0
      %v1292 = vsel %vm207, %v1233, 0
      %v1295 = vsel %vm207, %v1234, 0
      %v1298 = vsel %vm207, %v1235, 0
      %v1301 = vsel %vm207, %v1236, 0
      %v1304 = vsel %vm207, %v1237, 0
      %v1307 = vsel %vm207, %v1238, 0
      %v1310 = vsel %vm207, %v1239, 0
      %v1313 = vsel %vm207, %v1240, 0
      %v1316 = vsel %vm207, %v1241, 0
      %v1319 = vsel %vm207, %v1242, 0
      %v1322 = vsel %vm207, %v1243, 0
      %v1325 = vsel %vm207, %v1244, 0
      %v1328 = vsel %vm207, %v1245, 0
      %v1331 = vsel %vm207, %v1246, 0
      %1333 = vmatprep.subr.mxu0 0.0
      %1334 = vmatpush1.msra.mxu0 %v1248
      %1335 = vmatprep.subr.mxu0 0.0
      %1336 = vmatpush1.msra.mxu0 0.0
      %1337 = vmatprep.subr.mxu0 0.0
      %1338 = vmatpush1.msra.mxu0 0.0
      %1339 = vmatprep.subr.mxu0 0.0
      %1340 = vmatpush1.msra.mxu0 0.0
      %1341 = vmatprep.subr.mxu0 0.0
      %1342 = vmatpush1.msra.mxu0 0.0
      %1343 = vmatprep.subr.mxu0 0.0
      %1344 = vmatpush1.msra.mxu0 0.0
      %1345 = vmatprep.subr.mxu0 0.0
      %1346 = vmatpush1.msra.mxu0 0.0
      %1347 = vmatprep.subr.mxu0 0.0
      %1348 = vmatpush1.msra.mxu0 0.0
      %1349 = vmatprep.subr.mxu0 0.0
      %1350 = vmatpush1.msra.mxu0 0.0
      %1351 = vmatprep.subr.mxu0 0.0
      %1352 = vmatpush1.msra.mxu0 0.0
      %1353 = vmatprep.subr.mxu0 0.0
      %1354 = vmatpush1.msra.mxu0 0.0
      %1355 = vmatprep.subr.mxu0 0.0
      %1356 = vmatpush1.msra.mxu0 0.0
      %1357 = vmatprep.subr.mxu0 0.0
      %1358 = vmatpush1.msra.mxu0 0.0
      %1359 = vmatprep.subr.mxu0 0.0
      %1360 = vmatpush1.msra.mxu0 0.0
      %1361 = vmatprep.subr.mxu0 0.0
      %1362 = vmatpush1.msra.mxu0 0.0
      %1363 = vmatprep.subr.mxu0 0.0
      %1364 = vmatpush1.msra.mxu0 0.0
      %1365 = vmatprep.subr.mxu0 0.0
      %1366 = vmatpush1.msra.mxu0 0.0
      %1367 = vmatprep.subr.mxu0 0.0
      %1368 = vmatpush1.msra.mxu0 0.0
      %1369 = vmatprep.subr.mxu0 0.0
      %1370 = vmatpush1.msra.mxu0 0.0
      %1371 = vmatprep.subr.mxu0 0.0
      %1372 = vmatpush1.msra.mxu0 0.0
      %1373 = vmatprep.subr.mxu0 0.0
      %1374 = vmatpush1.msra.mxu0 0.0
      %1375 = vmatprep.subr.mxu0 0.0
      %1376 = vmatpush1.msra.mxu0 0.0
      %1377 = vmatprep.subr.mxu0 0.0
      %1378 = vmatpush1.msra.mxu0 0.0
      %1379 = vmatprep.subr.mxu0 0.0
      %1380 = vmatpush1.msra.mxu0 0.0
      %1381 = vmatprep.subr.mxu0 0.0
      %1382 = vmatpush1.msra.mxu0 0.0
      %1383 = vmatprep.subr.mxu0 0.0
      %1384 = vmatpush1.msra.mxu0 0.0
      %1385 = vmatprep.subr.mxu0 0.0
      %1386 = vmatpush1.msra.mxu0 0.0
      %1387 = vmatprep.subr.mxu0 0.0
      %1388 = vmatpush1.msra.mxu0 0.0
      %1389 = vmatprep.subr.mxu0 0.0
      %1390 = vmatpush1.msra.mxu0 0.0
      %1391 = vmatprep.subr.mxu0 0.0
      %1392 = vmatpush1.msra.mxu0 0.0
      %1393 = vmatprep.subr.mxu0 0.0
      %1394 = vmatpush1.msra.mxu0 0.0
      %1395 = vmatprep.subr.mxu0 0.0
      %1396 = vmatpush1.msra.mxu0 0.0
      %1397 = vmatprep.mubr.f32.mxu0 0.0
      %1398 = vmatmul.mubr.f32.gmra.mrb[0].mxu0 %v1250
      %v1399 = vpop.f32.mrb[0].mxu0
      %v1400 = vadd.f32 0.0, %v1399
      %v1401 = vpop.f32.mrb[0].mxu0
      %1402 = vmatprep.mubr.f32.mxu0 0.0
      %1403 = vmatmul.mubr.f32.gmra.mrb[0].mxu0 %v1253
      %v1404 = vpop.f32.mrb[0].mxu0
      %v1405 = vadd.f32 0.0, %v1404
      %v1406 = vpop.f32.mrb[0].mxu0
      %1407 = vmatprep.mubr.f32.mxu0 0.0
      %1408 = vmatmul.mubr.f32.gmra.mrb[0].mxu0 %v1256
      %v1409 = vpop.f32.mrb[0].mxu0
      %v1410 = vadd.f32 0.0, %v1409
      %v1411 = vpop.f32.mrb[0].mxu0
      %1412 = vmatprep.mubr.f32.mxu0 0.0
      %1413 = vmatmul.mubr.f32.gmra.mrb[0].mxu0 %v1259
      %v1414 = vpop.f32.mrb[0].mxu0
      %v1415 = vadd.f32 0.0, %v1414
      %v1416 = vpop.f32.mrb[0].mxu0
      %1417 = vmatprep.mubr.f32.mxu0 0.0
      %1418 = vmatmul.mubr.f32.gmra.mrb[0].mxu0 %v1262
      %v1419 = vpop.f32.mrb[0].mxu0
      %v1420 = vadd.f32 0.0, %v1419
      %v1421 = vpop.f32.mrb[0].mxu0
      %1422 = vmatprep.mubr.f32.mxu0 0.0
      %1423 = vmatmul.mubr.f32.gmra.mrb[0].mxu0 %v1265
      %v1424 = vpop.f32.mrb[0].mxu0
      %v1425 = vadd.f32 0.0, %v1424
      %v1426 = vpop.f32.mrb[0].mxu0
      %1427 = vmatprep.mubr.f32.mxu0 0.0
      %1428 = vmatmul.mubr.f32.gmra.mrb[0].mxu0 %v1268
      %v1429 = vpop.f32.mrb[0].mxu0
      %v1430 = vadd.f32 0.0, %v1429
      %v1431 = vpop.f32.mrb[0].mxu0
      %1432 = vmatprep.mubr.f32.mxu0 0.0
      %1433 = vmatmul.mubr.f32.gmra.mrb[0].mxu0 %v1271
      %v1434 = vpop.f32.mrb[0].mxu0
      %v1435 = vadd.f32 0.0, %v1434
      %v1436 = vpop.f32.mrb[0].mxu0
      %1437 = vmatprep.mubr.f32.mxu0 0.0
      %1438 = vmatmul.mubr.f32.gmra.mrb[0].mxu0 %v1274
      %v1439 = vpop.f32.mrb[0].mxu0
      %v1440 = vadd.f32 0.0, %v1439
      %v1441 = vpop.f32.mrb[0].mxu0
      %1442 = vmatprep.mubr.f32.mxu0 0.0
      %1443 = vmatmul.mubr.f32.gmra.mrb[0].mxu0 %v1277
      %v1444 = vpop.f32.mrb[0].mxu0
      %v1445 = vadd.f32 0.0, %v1444
      %v1446 = vpop.f32.mrb[0].mxu0
      %1447 = vmatprep.mubr.f32.mxu0 0.0
      %1448 = vmatmul.mubr.f32.gmra.mrb[0].mxu0 %v1280
      %v1449 = vpop.f32.mrb[0].mxu0
      %v1450 = vadd.f32 0.0, %v1449
      %v1451 = vpop.f32.mrb[0].mxu0
      %1452 = vmatprep.mubr.f32.mxu0 0.0
      %1453 = vmatmul.mubr.f32.gmra.mrb[0].mxu0 %v1283
      %v1454 = vpop.f32.mrb[0].mxu0
      %v1455 = vadd.f32 0.0, %v1454
      %v1456 = vpop.f32.mrb[0].mxu0
      %1457 = vmatprep.mubr.f32.mxu0 0.0
      %1458 = vmatmul.mubr.f32.gmra.mrb[0].mxu0 %v1286
      %v1459 = vpop.f32.mrb[0].mxu0
      %v1460 = vadd.f32 0.0, %v1459
      %v1461 = vpop.f32.mrb[0].mxu0
      %1462 = vmatprep.mubr.f32.mxu0 0.0
      %1463 = vmatmul.mubr.f32.gmra.mrb[0].mxu0 %v1289
      %v1464 = vpop.f32.mrb[0].mxu0
      %v1465 = vadd.f32 0.0, %v1464
      %v1466 = vpop.f32.mrb[0].mxu0
      %1467 = vmatprep.mubr.f32.mxu0 0.0
      %1468 = vmatmul.mubr.f32.gmra.mrb[0].mxu0 %v1292
      %v1469 = vpop.f32.mrb[0].mxu0
      %v1470 = vadd.f32 0.0, %v1469
      %v1471 = vpop.f32.mrb[0].mxu0
      %1472 = vmatprep.mubr.f32.mxu0 0.0
      %1473 = vmatmul.mubr.f32.gmra.mrb[0].mxu0 %v1295
      %v1474 = vpop.f32.mrb[0].mxu0
      %v1475 = vadd.f32 0.0, %v1474
      %v1476 = vpop.f32.mrb[0].mxu0
      %1477 = vmatprep.mubr.f32.mxu0 0.0
      %1478 = vmatmul.mubr.f32.gmra.mrb[0].mxu0 %v1298
      %v1479 = vpop.f32.mrb[0].mxu0
      %v1480 = vadd.f32 0.0, %v1479
      %v1481 = vpop.f32.mrb[0].mxu0
      %1482 = vmatprep.mubr.f32.mxu0 0.0
      %1483 = vmatmul.mubr.f32.gmra.mrb[0].mxu0 %v1301
      %v1484 = vpop.f32.mrb[0].mxu0
      %v1485 = vadd.f32 0.0, %v1484
      %v1486 = vpop.f32.mrb[0].mxu0
      %1487 = vmatprep.mubr.f32.mxu0 0.0
      %1488 = vmatmul.mubr.f32.gmra.mrb[0].mxu0 %v1304
      %v1489 = vpop.f32.mrb[0].mxu0
      %v1490 = vadd.f32 0.0, %v1489
      %v1491 = vpop.f32.mrb[0].mxu0
      %1492 = vmatprep.mubr.f32.mxu0 0.0
      %1493 = vmatmul.mubr.f32.gmra.mrb[0].mxu0 %v1307
      %v1494 = vpop.f32.mrb[0].mxu0
      %v1495 = vadd.f32 0.0, %v1494
      %v1496 = vpop.f32.mrb[0].mxu0
      %1497 = vmatprep.mubr.f32.mxu0 0.0
      %1498 = vmatmul.mubr.f32.gmra.mrb[0].mxu0 %v1310
      %v1499 = vpop.f32.mrb[0].mxu0
      %v1500 = vadd.f32 0.0, %v1499
      %v1501 = vpop.f32.mrb[0].mxu0
      %1502 = vmatprep.mubr.f32.mxu0 0.0
      %1503 = vmatmul.mubr.f32.gmra.mrb[0].mxu0 %v1313
      %v1504 = vpop.f32.mrb[0].mxu0
      %v1505 = vadd.f32 0.0, %v1504
      %v1506 = vpop.f32.mrb[0].mxu0
      %1507 = vmatprep.mubr.f32.mxu0 0.0
      %1508 = vmatmul.mubr.f32.gmra.mrb[0].mxu0 %v1316
      %v1509 = vpop.f32.mrb[0].mxu0
      %v1510 = vadd.f32 0.0, %v1509
      %v1511 = vpop.f32.mrb[0].mxu0
      %1512 = vmatprep.mubr.f32.mxu0 0.0
      %1513 = vmatmul.mubr.f32.gmra.mrb[0].mxu0 %v1319
      %v1514 = vpop.f32.mrb[0].mxu0
      %v1515 = vadd.f32 0.0, %v1514
      %v1516 = vpop.f32.mrb[0].mxu0
      %1517 = vmatprep.mubr.f32.mxu0 0.0
      %1518 = vmatmul.mubr.f32.gmra.mrb[0].mxu0 %v1322
      %v1519 = vpop.f32.mrb[0].mxu0
      %v1520 = vadd.f32 0.0, %v1519
      %v1521 = vpop.f32.mrb[0].mxu0
      %1522 = vmatprep.mubr.f32.mxu0 0.0
      %1523 = vmatmul.mubr.f32.gmra.mrb[0].mxu0 %v1325
      %v1524 = vpop.f32.mrb[0].mxu0
      %v1525 = vadd.f32 0.0, %v1524
      %v1526 = vpop.f32.mrb[0].mxu0
      %1527 = vmatprep.mubr.f32.mxu0 0.0
      %1528 = vmatmul.mubr.f32.gmra.mrb[0].mxu0 %v1328
      %v1529 = vpop.f32.mrb[0].mxu0
      %v1530 = vadd.f32 0.0, %v1529
      %v1531 = vpop.f32.mrb[0].mxu0
      %1532 = vmatprep.mubr.f32.mxu0 0.0
      %1533 = vmatmul.mubr.f32.gmra.mrb[0].mxu0 %v1331
      %v1534 = vpop.f32.mrb[0].mxu0
      %v1535 = vadd.f32 0.0, %v1534
      %v1536 = vpop.f32.mrb[0].mxu0
      %1537 = vdwg.mxu0
      %v1538 = vadd.f32 %v1191, %v1400
      %v1539 = vadd.f32 %v1192, %v1405
      %v1540 = vadd.f32 %v1193, %v1410
      %v1541 = vadd.f32 %v1194, %v1415
      %v1542 = vadd.f32 %v1195, %v1420
      %v1543 = vadd.f32 %v1196, %v1425
      %v1544 = vadd.f32 %v1197, %v1430
      %v1545 = vadd.f32 %v1198, %v1435
      %v1546 = vadd.f32 %v1199, %v1440
      %v1547 = vadd.f32 %v1200, %v1445
      %v1548 = vadd.f32 %v1201, %v1450
      %v1549 = vadd.f32 %v1202, %v1455
      %v1550 = vadd.f32 %v1203, %v1460
      %v1551 = vadd.f32 %v1204, %v1465
      %v1552 = vadd.f32 %v1205, %v1470
      %v1553 = vadd.f32 %v1206, %v1475
      %v1554 = vadd.f32 %v1207, %v1480
      %v1555 = vadd.f32 %v1208, %v1485
      %v1556 = vadd.f32 %v1209, %v1490
      %v1557 = vadd.f32 %v1210, %v1495
      %v1558 = vadd.f32 %v1211, %v1500
      %v1559 = vadd.f32 %v1212, %v1505
      %v1560 = vadd.f32 %v1213, %v1510
      %v1561 = vadd.f32 %v1214, %v1515
      %v1562 = vadd.f32 %v1215, %v1520
      %v1563 = vadd.f32 %v1216, %v1525
      %v1564 = vadd.f32 %v1217, %v1530
      %v1565 = vadd.f32 %v1218, %v1535
      %v1566 = vld [vmem:[%s165 + $0x11] sm:$0xff]
      %v1567 = vld [vmem:[%s165 + $0x19] sm:$0xff]
      %v1568 = vld [vmem:[%s165 + $0x21] sm:$0xff]
      %v1569 = vld [vmem:[%s165 + $0x29] sm:$0xff]
      %v1570 = vld [vmem:[%s165 + $0x31] sm:$0xff]
      %v1571 = vld [vmem:[%s165 + $0x39] sm:$0xff]
      %v1572 = vld [vmem:[%s165 + $0x41] sm:$0xff]
      %v1573 = vld [vmem:[%s165 + $0x49] sm:$0xff]
      %v1574 = vld [vmem:[%s165 + $0x51] sm:$0xff]
      %v1575 = vld [vmem:[%s165 + $0x59] sm:$0xff]
      %v1576 = vld [vmem:[%s165 + $0x61] sm:$0xff]
      %v1577 = vld [vmem:[%s165 + $0x69] sm:$0xff]
      %v1578 = vld [vmem:[%s165 + $0x71] sm:$0xff]
      %v1579 = vld [vmem:[%s165 + $0x79] sm:$0xff]
      %v1580 = vld [vmem:[%s165 + $0x81] sm:$0xff]
      %v1581 = vld [vmem:[%s165 + $0x89] sm:$0xff]
      %v1582 = vld [vmem:[%s165 + $0x91] sm:$0xff]
      %v1583 = vld [vmem:[%s165 + $0x99] sm:$0xff]
      %v1584 = vld [vmem:[%s165 + $0xa1] sm:$0xff]
      %v1585 = vld [vmem:[%s165 + $0xa9] sm:$0xff]
      %v1586 = vld [vmem:[%s165 + $0xb1] sm:$0xff]
      %v1587 = vld [vmem:[%s165 + $0xb9] sm:$0xff]
      %v1588 = vld [vmem:[%s165 + $0xc1] sm:$0xff]
      %v1589 = vld [vmem:[%s165 + $0xc9] sm:$0xff]
      %v1590 = vld [vmem:[%s165 + $0xd1] sm:$0xff]
      %v1591 = vld [vmem:[%s165 + $0xd9] sm:$0xff]
      %v1592 = vld [vmem:[%s165 + $0xe1] sm:$0xff]
      %v1593 = vld [vmem:[%s165 + $0xe9] sm:$0xff]
      %s1594 = scalar_lea.vmem %s1, 32
      %v1595 = vld [vmem:[%s1594] sm:$0xff]
      %v1597 = vsel %vm207, %v1566, 0
      %v1600 = vsel %vm207, %v1567, 0
      %v1603 = vsel %vm207, %v1568, 0
      %v1606 = vsel %vm207, %v1569, 0
      %v1609 = vsel %vm207, %v1570, 0
      %v1612 = vsel %vm207, %v1571, 0
      %v1615 = vsel %vm207, %v1572, 0
      %v1618 = vsel %vm207, %v1573, 0
      %v1621 = vsel %vm207, %v1574, 0
      %v1624 = vsel %vm207, %v1575, 0
      %v1627 = vsel %vm207, %v1576, 0
      %v1630 = vsel %vm207, %v1577, 0
      %v1633 = vsel %vm207, %v1578, 0
      %v1636 = vsel %vm207, %v1579, 0
      %v1639 = vsel %vm207, %v1580, 0
      %v1642 = vsel %vm207, %v1581, 0
      %v1645 = vsel %vm207, %v1582, 0
      %v1648 = vsel %vm207, %v1583, 0
      %v1651 = vsel %vm207, %v1584, 0
      %v1654 = vsel %vm207, %v1585, 0
      %v1657 = vsel %vm207, %v1586, 0
      %v1660 = vsel %vm207, %v1587, 0
      %v1663 = vsel %vm207, %v1588, 0
      %v1666 = vsel %vm207, %v1589, 0
      %v1669 = vsel %vm207, %v1590, 0
      %v1672 = vsel %vm207, %v1591, 0
      %v1675 = vsel %vm207, %v1592, 0
      %v1678 = vsel %vm207, %v1593, 0
      %1680 = vmatprep.subr.mxu0 0.0
      %1681 = vmatpush1.msra.mxu0 %v1595
      %1682 = vmatprep.subr.mxu0 0.0
      %1683 = vmatpush1.msra.mxu0 0.0
      %1684 = vmatprep.subr.mxu0 0.0
      %1685 = vmatpush1.msra.mxu0 0.0
      %1686 = vmatprep.subr.mxu0 0.0
      %1687 = vmatpush1.msra.mxu0 0.0
      %1688 = vmatprep.subr.mxu0 0.0
      %1689 = vmatpush1.msra.mxu0 0.0
      %1690 = vmatprep.subr.mxu0 0.0
      %1691 = vmatpush1.msra.mxu0 0.0
      %1692 = vmatprep.subr.mxu0 0.0
      %1693 = vmatpush1.msra.mxu0 0.0
      %1694 = vmatprep.subr.mxu0 0.0
      %1695 = vmatpush1.msra.mxu0 0.0
      %1696 = vmatprep.subr.mxu0 0.0
      %1697 = vmatpush1.msra.mxu0 0.0
      %1698 = vmatprep.subr.mxu0 0.0
      %1699 = vmatpush1.msra.mxu0 0.0
      %1700 = vmatprep.subr.mxu0 0.0
      %1701 = vmatpush1.msra.mxu0 0.0
      %1702 = vmatprep.subr.mxu0 0.0
      %1703 = vmatpush1.msra.mxu0 0.0
      %1704 = vmatprep.subr.mxu0 0.0
      %1705 = vmatpush1.msra.mxu0 0.0
      %1706 = vmatprep.subr.mxu0 0.0
      %1707 = vmatpush1.msra.mxu0 0.0
      %1708 = vmatprep.subr.mxu0 0.0
      %1709 = vmatpush1.msra.mxu0 0.0
      %1710 = vmatprep.subr.mxu0 0.0
      %1711 = vmatpush1.msra.mxu0 0.0
      %1712 = vmatprep.subr.mxu0 0.0
      %1713 = vmatpush1.msra.mxu0 0.0
      %1714 = vmatprep.subr.mxu0 0.0
      %1715 = vmatpush1.msra.mxu0 0.0
      %1716 = vmatprep.subr.mxu0 0.0
      %1717 = vmatpush1.msra.mxu0 0.0
      %1718 = vmatprep.subr.mxu0 0.0
      %1719 = vmatpush1.msra.mxu0 0.0
      %1720 = vmatprep.subr.mxu0 0.0
      %1721 = vmatpush1.msra.mxu0 0.0
      %1722 = vmatprep.subr.mxu0 0.0
      %1723 = vmatpush1.msra.mxu0 0.0
      %1724 = vmatprep.subr.mxu0 0.0
      %1725 = vmatpush1.msra.mxu0 0.0
      %1726 = vmatprep.subr.mxu0 0.0
      %1727 = vmatpush1.msra.mxu0 0.0
      %1728 = vmatprep.subr.mxu0 0.0
      %1729 = vmatpush1.msra.mxu0 0.0
      %1730 = vmatprep.subr.mxu0 0.0
      %1731 = vmatpush1.msra.mxu0 0.0
      %1732 = vmatprep.subr.mxu0 0.0
      %1733 = vmatpush1.msra.mxu0 0.0
      %1734 = vmatprep.subr.mxu0 0.0
      %1735 = vmatpush1.msra.mxu0 0.0
      %1736 = vmatprep.subr.mxu0 0.0
      %1737 = vmatpush1.msra.mxu0 0.0
      %1738 = vmatprep.subr.mxu0 0.0
      %1739 = vmatpush1.msra.mxu0 0.0
      %1740 = vmatprep.subr.mxu0 0.0
      %1741 = vmatpush1.msra.mxu0 0.0
      %1742 = vmatprep.subr.mxu0 0.0
      %1743 = vmatpush1.msra.mxu0 0.0
      %1744 = vmatprep.mubr.f32.mxu0 0.0
      %1745 = vmatmul.mubr.f32.gmra.mrb[0].mxu0 %v1597
      %v1746 = vpop.f32.mrb[0].mxu0
      %v1747 = vadd.f32 0.0, %v1746
      %v1748 = vpop.f32.mrb[0].mxu0
      %1749 = vmatprep.mubr.f32.mxu0 0.0
      %1750 = vmatmul.mubr.f32.gmra.mrb[0].mxu0 %v1600
      %v1751 = vpop.f32.mrb[0].mxu0
      %v1752 = vadd.f32 0.0, %v1751
      %v1753 = vpop.f32.mrb[0].mxu0
      %1754 = vmatprep.mubr.f32.mxu0 0.0
      %1755 = vmatmul.mubr.f32.gmra.mrb[0].mxu0 %v1603
      %v1756 = vpop.f32.mrb[0].mxu0
      %v1757 = vadd.f32 0.0, %v1756
      %v1758 = vpop.f32.mrb[0].mxu0
      %1759 = vmatprep.mubr.f32.mxu0 0.0
      %1760 = vmatmul.mubr.f32.gmra.mrb[0].mxu0 %v1606
      %v1761 = vpop.f32.mrb[0].mxu0
      %v1762 = vadd.f32 0.0, %v1761
      %v1763 = vpop.f32.mrb[0].mxu0
      %1764 = vmatprep.mubr.f32.mxu0 0.0
      %1765 = vmatmul.mubr.f32.gmra.mrb[0].mxu0 %v1609
      %v1766 = vpop.f32.mrb[0].mxu0
      %v1767 = vadd.f32 0.0, %v1766
      %v1768 = vpop.f32.mrb[0].mxu0
      %1769 = vmatprep.mubr.f32.mxu0 0.0
      %1770 = vmatmul.mubr.f32.gmra.mrb[0].mxu0 %v1612
      %v1771 = vpop.f32.mrb[0].mxu0
      %v1772 = vadd.f32 0.0, %v1771
      %v1773 = vpop.f32.mrb[0].mxu0
      %1774 = vmatprep.mubr.f32.mxu0 0.0
      %1775 = vmatmul.mubr.f32.gmra.mrb[0].mxu0 %v1615
      %v1776 = vpop.f32.mrb[0].mxu0
      %v1777 = vadd.f32 0.0, %v1776
      %v1778 = vpop.f32.mrb[0].mxu0
      %1779 = vmatprep.mubr.f32.mxu0 0.0
      %1780 = vmatmul.mubr.f32.gmra.mrb[0].mxu0 %v1618
      %v1781 = vpop.f32.mrb[0].mxu0
      %v1782 = vadd.f32 0.0, %v1781
      %v1783 = vpop.f32.mrb[0].mxu0
      %1784 = vmatprep.mubr.f32.mxu0 0.0
      %1785 = vmatmul.mubr.f32.gmra.mrb[0].mxu0 %v1621
      %v1786 = vpop.f32.mrb[0].mxu0
      %v1787 = vadd.f32 0.0, %v1786
      %v1788 = vpop.f32.mrb[0].mxu0
      %1789 = vmatprep.mubr.f32.mxu0 0.0
      %1790 = vmatmul.mubr.f32.gmra.mrb[0].mxu0 %v1624
      %v1791 = vpop.f32.mrb[0].mxu0
      %v1792 = vadd.f32 0.0, %v1791
      %v1793 = vpop.f32.mrb[0].mxu0
      %1794 = vmatprep.mubr.f32.mxu0 0.0
      %1795 = vmatmul.mubr.f32.gmra.mrb[0].mxu0 %v1627
      %v1796 = vpop.f32.mrb[0].mxu0
      %v1797 = vadd.f32 0.0, %v1796
      %v1798 = vpop.f32.mrb[0].mxu0
      %1799 = vmatprep.mubr.f32.mxu0 0.0
      %1800 = vmatmul.mubr.f32.gmra.mrb[0].mxu0 %v1630
      %v1801 = vpop.f32.mrb[0].mxu0
      %v1802 = vadd.f32 0.0, %v1801
      %v1803 = vpop.f32.mrb[0].mxu0
      %1804 = vmatprep.mubr.f32.mxu0 0.0
      %1805 = vmatmul.mubr.f32.gmra.mrb[0].mxu0 %v1633
      %v1806 = vpop.f32.mrb[0].mxu0
      %v1807 = vadd.f32 0.0, %v1806
      %v1808 = vpop.f32.mrb[0].mxu0
      %1809 = vmatprep.mubr.f32.mxu0 0.0
      %1810 = vmatmul.mubr.f32.gmra.mrb[0].mxu0 %v1636
      %v1811 = vpop.f32.mrb[0].mxu0
      %v1812 = vadd.f32 0.0, %v1811
      %v1813 = vpop.f32.mrb[0].mxu0
      %1814 = vmatprep.mubr.f32.mxu0 0.0
      %1815 = vmatmul.mubr.f32.gmra.mrb[0].mxu0 %v1639
      %v1816 = vpop.f32.mrb[0].mxu0
      %v1817 = vadd.f32 0.0, %v1816
      %v1818 = vpop.f32.mrb[0].mxu0
      %1819 = vmatprep.mubr.f32.mxu0 0.0
      %1820 = vmatmul.mubr.f32.gmra.mrb[0].mxu0 %v1642
      %v1821 = vpop.f32.mrb[0].mxu0
      %v1822 = vadd.f32 0.0, %v1821
      %v1823 = vpop.f32.mrb[0].mxu0
      %1824 = vmatprep.mubr.f32.mxu0 0.0
      %1825 = vmatmul.mubr.f32.gmra.mrb[0].mxu0 %v1645
      %v1826 = vpop.f32.mrb[0].mxu0
      %v1827 = vadd.f32 0.0, %v1826
      %v1828 = vpop.f32.mrb[0].mxu0
      %1829 = vmatprep.mubr.f32.mxu0 0.0
      %1830 = vmatmul.mubr.f32.gmra.mrb[0].mxu0 %v1648
      %v1831 = vpop.f32.mrb[0].mxu0
      %v1832 = vadd.f32 0.0, %v1831
      %v1833 = vpop.f32.mrb[0].mxu0
      %1834 = vmatprep.mubr.f32.mxu0 0.0
      %1835 = vmatmul.mubr.f32.gmra.mrb[0].mxu0 %v1651
      %v1836 = vpop.f32.mrb[0].mxu0
      %v1837 = vadd.f32 0.0, %v1836
      %v1838 = vpop.f32.mrb[0].mxu0
      %1839 = vmatprep.mubr.f32.mxu0 0.0
      %1840 = vmatmul.mubr.f32.gmra.mrb[0].mxu0 %v1654
      %v1841 = vpop.f32.mrb[0].mxu0
      %v1842 = vadd.f32 0.0, %v1841
      %v1843 = vpop.f32.mrb[0].mxu0
      %1844 = vmatprep.mubr.f32.mxu0 0.0
      %1845 = vmatmul.mubr.f32.gmra.mrb[0].mxu0 %v1657
      %v1846 = vpop.f32.mrb[0].mxu0
      %v1847 = vadd.f32 0.0, %v1846
      %v1848 = vpop.f32.mrb[0].mxu0
      %1849 = vmatprep.mubr.f32.mxu0 0.0
      %1850 = vmatmul.mubr.f32.gmra.mrb[0].mxu0 %v1660
      %v1851 = vpop.f32.mrb[0].mxu0
      %v1852 = vadd.f32 0.0, %v1851
      %v1853 = vpop.f32.mrb[0].mxu0
      %1854 = vmatprep.mubr.f32.mxu0 0.0
      %1855 = vmatmul.mubr.f32.gmra.mrb[0].mxu0 %v1663
      %v1856 = vpop.f32.mrb[0].mxu0
      %v1857 = vadd.f32 0.0, %v1856
      %v1858 = vpop.f32.mrb[0].mxu0
      %1859 = vmatprep.mubr.f32.mxu0 0.0
      %1860 = vmatmul.mubr.f32.gmra.mrb[0].mxu0 %v1666
      %v1861 = vpop.f32.mrb[0].mxu0
      %v1862 = vadd.f32 0.0, %v1861
      %v1863 = vpop.f32.mrb[0].mxu0
      %1864 = vmatprep.mubr.f32.mxu0 0.0
      %1865 = vmatmul.mubr.f32.gmra.mrb[0].mxu0 %v1669
      %v1866 = vpop.f32.mrb[0].mxu0
      %v1867 = vadd.f32 0.0, %v1866
      %v1868 = vpop.f32.mrb[0].mxu0
      %1869 = vmatprep.mubr.f32.mxu0 0.0
      %1870 = vmatmul.mubr.f32.gmra.mrb[0].mxu0 %v1672
      %v1871 = vpop.f32.mrb[0].mxu0
      %v1872 = vadd.f32 0.0, %v1871
      %v1873 = vpop.f32.mrb[0].mxu0
      %1874 = vmatprep.mubr.f32.mxu0 0.0
      %1875 = vmatmul.mubr.f32.gmra.mrb[0].mxu0 %v1675
      %v1876 = vpop.f32.mrb[0].mxu0
      %v1877 = vadd.f32 0.0, %v1876
      %v1878 = vpop.f32.mrb[0].mxu0
      %1879 = vmatprep.mubr.f32.mxu0 0.0
      %1880 = vmatmul.mubr.f32.gmra.mrb[0].mxu0 %v1678
      %v1881 = vpop.f32.mrb[0].mxu0
      %v1882 = vadd.f32 0.0, %v1881
      %v1883 = vpop.f32.mrb[0].mxu0
      %1884 = vdwg.mxu0
      %v1885 = vadd.f32 %v1538, %v1747
      %v1886 = vadd.f32 %v1539, %v1752
      %v1887 = vadd.f32 %v1540, %v1757
      %v1888 = vadd.f32 %v1541, %v1762
      %v1889 = vadd.f32 %v1542, %v1767
      %v1890 = vadd.f32 %v1543, %v1772
      %v1891 = vadd.f32 %v1544, %v1777
      %v1892 = vadd.f32 %v1545, %v1782
      %v1893 = vadd.f32 %v1546, %v1787
      %v1894 = vadd.f32 %v1547, %v1792
      %v1895 = vadd.f32 %v1548, %v1797
      %v1896 = vadd.f32 %v1549, %v1802
      %v1897 = vadd.f32 %v1550, %v1807
      %v1898 = vadd.f32 %v1551, %v1812
      %v1899 = vadd.f32 %v1552, %v1817
      %v1900 = vadd.f32 %v1553, %v1822
      %v1901 = vadd.f32 %v1554, %v1827
      %v1902 = vadd.f32 %v1555, %v1832
      %v1903 = vadd.f32 %v1556, %v1837
      %v1904 = vadd.f32 %v1557, %v1842
      %v1905 = vadd.f32 %v1558, %v1847
      %v1906 = vadd.f32 %v1559, %v1852
      %v1907 = vadd.f32 %v1560, %v1857
      %v1908 = vadd.f32 %v1561, %v1862
      %v1909 = vadd.f32 %v1562, %v1867
      %v1910 = vadd.f32 %v1563, %v1872
      %v1911 = vadd.f32 %v1564, %v1877
      %v1912 = vadd.f32 %v1565, %v1882
      %v1913 = vld [vmem:[%s165 + $0x12] sm:$0xff]
      %v1914 = vld [vmem:[%s165 + $0x1a] sm:$0xff]
      %v1915 = vld [vmem:[%s165 + $0x22] sm:$0xff]
      %v1916 = vld [vmem:[%s165 + $0x2a] sm:$0xff]
      %v1917 = vld [vmem:[%s165 + $0x32] sm:$0xff]
      %v1918 = vld [vmem:[%s165 + $0x3a] sm:$0xff]
      %v1919 = vld [vmem:[%s165 + $0x42] sm:$0xff]
      %v1920 = vld [vmem:[%s165 + $0x4a] sm:$0xff]
      %v1921 = vld [vmem:[%s165 + $0x52] sm:$0xff]
      %v1922 = vld [vmem:[%s165 + $0x5a] sm:$0xff]
      %v1923 = vld [vmem:[%s165 + $0x62] sm:$0xff]
      %v1924 = vld [vmem:[%s165 + $0x6a] sm:$0xff]
      %v1925 = vld [vmem:[%s165 + $0x72] sm:$0xff]
      %v1926 = vld [vmem:[%s165 + $0x7a] sm:$0xff]
      %v1927 = vld [vmem:[%s165 + $0x82] sm:$0xff]
      %v1928 = vld [vmem:[%s165 + $0x8a] sm:$0xff]
      %v1929 = vld [vmem:[%s165 + $0x92] sm:$0xff]
      %v1930 = vld [vmem:[%s165 + $0x9a] sm:$0xff]
      %v1931 = vld [vmem:[%s165 + $0xa2] sm:$0xff]
      %v1932 = vld [vmem:[%s165 + $0xaa] sm:$0xff]
      %v1933 = vld [vmem:[%s165 + $0xb2] sm:$0xff]
      %v1934 = vld [vmem:[%s165 + $0xba] sm:$0xff]
      %v1935 = vld [vmem:[%s165 + $0xc2] sm:$0xff]
      %v1936 = vld [vmem:[%s165 + $0xca] sm:$0xff]
      %v1937 = vld [vmem:[%s165 + $0xd2] sm:$0xff]
      %v1938 = vld [vmem:[%s165 + $0xda] sm:$0xff]
      %v1939 = vld [vmem:[%s165 + $0xe2] sm:$0xff]
      %v1940 = vld [vmem:[%s165 + $0xea] sm:$0xff]
      %s1941 = scalar_lea.vmem %s1, 40
      %v1942 = vld [vmem:[%s1941] sm:$0xff]
      %v1944 = vsel %vm207, %v1913, 0
      %v1947 = vsel %vm207, %v1914, 0
      %v1950 = vsel %vm207, %v1915, 0
      %v1953 = vsel %vm207, %v1916, 0
      %v1956 = vsel %vm207, %v1917, 0
      %v1959 = vsel %vm207, %v1918, 0
      %v1962 = vsel %vm207, %v1919, 0
      %v1965 = vsel %vm207, %v1920, 0
      %v1968 = vsel %vm207, %v1921, 0
      %v1971 = vsel %vm207, %v1922, 0
      %v1974 = vsel %vm207, %v1923, 0
      %v1977 = vsel %vm207, %v1924, 0
      %v1980 = vsel %vm207, %v1925, 0
      %v1983 = vsel %vm207, %v1926, 0
      %v1986 = vsel %vm207, %v1927, 0
      %v1989 = vsel %vm207, %v1928, 0
      %v1992 = vsel %vm207, %v1929, 0
      %v1995 = vsel %vm207, %v1930, 0
      %v1998 = vsel %vm207, %v1931, 0
      %v2001 = vsel %vm207, %v1932, 0
      %v2004 = vsel %vm207, %v1933, 0
      %v2007 = vsel %vm207, %v1934, 0
      %v2010 = vsel %vm207, %v1935, 0
      %v2013 = vsel %vm207, %v1936, 0
      %v2016 = vsel %vm207, %v1937, 0
      %v2019 = vsel %vm207, %v1938, 0
      %v2022 = vsel %vm207, %v1939, 0
      %v2025 = vsel %vm207, %v1940, 0
      %2027 = vmatprep.subr.mxu0 0.0
      %2028 = vmatpush1.msra.mxu0 %v1942
      %2029 = vmatprep.subr.mxu0 0.0
      %2030 = vmatpush1.msra.mxu0 0.0
      %2031 = vmatprep.subr.mxu0 0.0
      %2032 = vmatpush1.msra.mxu0 0.0
      %2033 = vmatprep.subr.mxu0 0.0
      %2034 = vmatpush1.msra.mxu0 0.0
      %2035 = vmatprep.subr.mxu0 0.0
      %2036 = vmatpush1.msra.mxu0 0.0
      %2037 = vmatprep.subr.mxu0 0.0
      %2038 = vmatpush1.msra.mxu0 0.0
      %2039 = vmatprep.subr.mxu0 0.0
      %2040 = vmatpush1.msra.mxu0 0.0
      %2041 = vmatprep.subr.mxu0 0.0
      %2042 = vmatpush1.msra.mxu0 0.0
      %2043 = vmatprep.subr.mxu0 0.0
      %2044 = vmatpush1.msra.mxu0 0.0
      %2045 = vmatprep.subr.mxu0 0.0
      %2046 = vmatpush1.msra.mxu0 0.0
      %2047 = vmatprep.subr.mxu0 0.0
      %2048 = vmatpush1.msra.mxu0 0.0
      %2049 = vmatprep.subr.mxu0 0.0
      %2050 = vmatpush1.msra.mxu0 0.0
      %2051 = vmatprep.subr.mxu0 0.0
      %2052 = vmatpush1.msra.mxu0 0.0
      %2053 = vmatprep.subr.mxu0 0.0
      %2054 = vmatpush1.msra.mxu0 0.0
      %2055 = vmatprep.subr.mxu0 0.0
      %2056 = vmatpush1.msra.mxu0 0.0
      %2057 = vmatprep.subr.mxu0 0.0
      %2058 = vmatpush1.msra.mxu0 0.0
      %2059 = vmatprep.subr.mxu0 0.0
      %2060 = vmatpush1.msra.mxu0 0.0
      %2061 = vmatprep.subr.mxu0 0.0
      %2062 = vmatpush1.msra.mxu0 0.0
      %2063 = vmatprep.subr.mxu0 0.0
      %2064 = vmatpush1.msra.mxu0 0.0
      %2065 = vmatprep.subr.mxu0 0.0
      %2066 = vmatpush1.msra.mxu0 0.0
      %2067 = vmatprep.subr.mxu0 0.0
      %2068 = vmatpush1.msra.mxu0 0.0
      %2069 = vmatprep.subr.mxu0 0.0
      %2070 = vmatpush1.msra.mxu0 0.0
      %2071 = vmatprep.subr.mxu0 0.0
      %2072 = vmatpush1.msra.mxu0 0.0
      %2073 = vmatprep.subr.mxu0 0.0
      %2074 = vmatpush1.msra.mxu0 0.0
      %2075 = vmatprep.subr.mxu0 0.0
      %2076 = vmatpush1.msra.mxu0 0.0
      %2077 = vmatprep.subr.mxu0 0.0
      %2078 = vmatpush1.msra.mxu0 0.0
      %2079 = vmatprep.subr.mxu0 0.0
      %2080 = vmatpush1.msra.mxu0 0.0
      %2081 = vmatprep.subr.mxu0 0.0
      %2082 = vmatpush1.msra.mxu0 0.0
      %2083 = vmatprep.subr.mxu0 0.0
      %2084 = vmatpush1.msra.mxu0 0.0
      %2085 = vmatprep.subr.mxu0 0.0
      %2086 = vmatpush1.msra.mxu0 0.0
      %2087 = vmatprep.subr.mxu0 0.0
      %2088 = vmatpush1.msra.mxu0 0.0
      %2089 = vmatprep.subr.mxu0 0.0
      %2090 = vmatpush1.msra.mxu0 0.0
      %2091 = vmatprep.mubr.f32.mxu0 0.0
      %2092 = vmatmul.mubr.f32.gmra.mrb[0].mxu0 %v1944
      %v2093 = vpop.f32.mrb[0].mxu0
      %v2094 = vadd.f32 0.0, %v2093
      %v2095 = vpop.f32.mrb[0].mxu0
      %2096 = vmatprep.mubr.f32.mxu0 0.0
      %2097 = vmatmul.mubr.f32.gmra.mrb[0].mxu0 %v1947
      %v2098 = vpop.f32.mrb[0].mxu0
      %v2099 = vadd.f32 0.0, %v2098
      %v2100 = vpop.f32.mrb[0].mxu0
      %2101 = vmatprep.mubr.f32.mxu0 0.0
      %2102 = vmatmul.mubr.f32.gmra.mrb[0].mxu0 %v1950
      %v2103 = vpop.f32.mrb[0].mxu0
      %v2104 = vadd.f32 0.0, %v2103
      %v2105 = vpop.f32.mrb[0].mxu0
      %2106 = vmatprep.mubr.f32.mxu0 0.0
      %2107 = vmatmul.mubr.f32.gmra.mrb[0].mxu0 %v1953
      %v2108 = vpop.f32.mrb[0].mxu0
      %v2109 = vadd.f32 0.0, %v2108
      %v2110 = vpop.f32.mrb[0].mxu0
      %2111 = vmatprep.mubr.f32.mxu0 0.0
      %2112 = vmatmul.mubr.f32.gmra.mrb[0].mxu0 %v1956
      %v2113 = vpop.f32.mrb[0].mxu0
      %v2114 = vadd.f32 0.0, %v2113
      %v2115 = vpop.f32.mrb[0].mxu0
      %2116 = vmatprep.mubr.f32.mxu0 0.0
      %2117 = vmatmul.mubr.f32.gmra.mrb[0].mxu0 %v1959
      %v2118 = vpop.f32.mrb[0].mxu0
      %v2119 = vadd.f32 0.0, %v2118
      %v2120 = vpop.f32.mrb[0].mxu0
      %2121 = vmatprep.mubr.f32.mxu0 0.0
      %2122 = vmatmul.mubr.f32.gmra.mrb[0].mxu0 %v1962
      %v2123 = vpop.f32.mrb[0].mxu0
      %v2124 = vadd.f32 0.0, %v2123
      %v2125 = vpop.f32.mrb[0].mxu0
      %2126 = vmatprep.mubr.f32.mxu0 0.0
      %2127 = vmatmul.mubr.f32.gmra.mrb[0].mxu0 %v1965
      %v2128 = vpop.f32.mrb[0].mxu0
      %v2129 = vadd.f32 0.0, %v2128
      %v2130 = vpop.f32.mrb[0].mxu0
      %2131 = vmatprep.mubr.f32.mxu0 0.0
      %2132 = vmatmul.mubr.f32.gmra.mrb[0].mxu0 %v1968
      %v2133 = vpop.f32.mrb[0].mxu0
      %v2134 = vadd.f32 0.0, %v2133
      %v2135 = vpop.f32.mrb[0].mxu0
      %2136 = vmatprep.mubr.f32.mxu0 0.0
      %2137 = vmatmul.mubr.f32.gmra.mrb[0].mxu0 %v1971
      %v2138 = vpop.f32.mrb[0].mxu0
      %v2139 = vadd.f32 0.0, %v2138
      %v2140 = vpop.f32.mrb[0].mxu0
      %2141 = vmatprep.mubr.f32.mxu0 0.0
      %2142 = vmatmul.mubr.f32.gmra.mrb[0].mxu0 %v1974
      %v2143 = vpop.f32.mrb[0].mxu0
      %v2144 = vadd.f32 0.0, %v2143
      %v2145 = vpop.f32.mrb[0].mxu0
      %2146 = vmatprep.mubr.f32.mxu0 0.0
      %2147 = vmatmul.mubr.f32.gmra.mrb[0].mxu0 %v1977
      %v2148 = vpop.f32.mrb[0].mxu0
      %v2149 = vadd.f32 0.0, %v2148
      %v2150 = vpop.f32.mrb[0].mxu0
      %2151 = vmatprep.mubr.f32.mxu0 0.0
      %2152 = vmatmul.mubr.f32.gmra.mrb[0].mxu0 %v1980
      %v2153 = vpop.f32.mrb[0].mxu0
      %v2154 = vadd.f32 0.0, %v2153
      %v2155 = vpop.f32.mrb[0].mxu0
      %2156 = vmatprep.mubr.f32.mxu0 0.0
      %2157 = vmatmul.mubr.f32.gmra.mrb[0].mxu0 %v1983
      %v2158 = vpop.f32.mrb[0].mxu0
      %v2159 = vadd.f32 0.0, %v2158
      %v2160 = vpop.f32.mrb[0].mxu0
      %2161 = vmatprep.mubr.f32.mxu0 0.0
      %2162 = vmatmul.mubr.f32.gmra.mrb[0].mxu0 %v1986
      %v2163 = vpop.f32.mrb[0].mxu0
      %v2164 = vadd.f32 0.0, %v2163
      %v2165 = vpop.f32.mrb[0].mxu0
      %2166 = vmatprep.mubr.f32.mxu0 0.0
      %2167 = vmatmul.mubr.f32.gmra.mrb[0].mxu0 %v1989
      %v2168 = vpop.f32.mrb[0].mxu0
      %v2169 = vadd.f32 0.0, %v2168
      %v2170 = vpop.f32.mrb[0].mxu0
      %2171 = vmatprep.mubr.f32.mxu0 0.0
      %2172 = vmatmul.mubr.f32.gmra.mrb[0].mxu0 %v1992
      %v2173 = vpop.f32.mrb[0].mxu0
      %v2174 = vadd.f32 0.0, %v2173
      %v2175 = vpop.f32.mrb[0].mxu0
      %2176 = vmatprep.mubr.f32.mxu0 0.0
      %2177 = vmatmul.mubr.f32.gmra.mrb[0].mxu0 %v1995
      %v2178 = vpop.f32.mrb[0].mxu0
      %v2179 = vadd.f32 0.0, %v2178
      %v2180 = vpop.f32.mrb[0].mxu0
      %2181 = vmatprep.mubr.f32.mxu0 0.0
      %2182 = vmatmul.mubr.f32.gmra.mrb[0].mxu0 %v1998
      %v2183 = vpop.f32.mrb[0].mxu0
      %v2184 = vadd.f32 0.0, %v2183
      %v2185 = vpop.f32.mrb[0].mxu0
      %2186 = vmatprep.mubr.f32.mxu0 0.0
      %2187 = vmatmul.mubr.f32.gmra.mrb[0].mxu0 %v2001
      %v2188 = vpop.f32.mrb[0].mxu0
      %v2189 = vadd.f32 0.0, %v2188
      %v2190 = vpop.f32.mrb[0].mxu0
      %2191 = vmatprep.mubr.f32.mxu0 0.0
      %2192 = vmatmul.mubr.f32.gmra.mrb[0].mxu0 %v2004
      %v2193 = vpop.f32.mrb[0].mxu0
      %v2194 = vadd.f32 0.0, %v2193
      %v2195 = vpop.f32.mrb[0].mxu0
      %2196 = vmatprep.mubr.f32.mxu0 0.0
      %2197 = vmatmul.mubr.f32.gmra.mrb[0].mxu0 %v2007
      %v2198 = vpop.f32.mrb[0].mxu0
      %v2199 = vadd.f32 0.0, %v2198
      %v2200 = vpop.f32.mrb[0].mxu0
      %2201 = vmatprep.mubr.f32.mxu0 0.0
      %2202 = vmatmul.mubr.f32.gmra.mrb[0].mxu0 %v2010
      %v2203 = vpop.f32.mrb[0].mxu0
      %v2204 = vadd.f32 0.0, %v2203
      %v2205 = vpop.f32.mrb[0].mxu0
      %2206 = vmatprep.mubr.f32.mxu0 0.0
      %2207 = vmatmul.mubr.f32.gmra.mrb[0].mxu0 %v2013
      %v2208 = vpop.f32.mrb[0].mxu0
      %v2209 = vadd.f32 0.0, %v2208
      %v2210 = vpop.f32.mrb[0].mxu0
      %2211 = vmatprep.mubr.f32.mxu0 0.0
      %2212 = vmatmul.mubr.f32.gmra.mrb[0].mxu0 %v2016
      %v2213 = vpop.f32.mrb[0].mxu0
      %v2214 = vadd.f32 0.0, %v2213
      %v2215 = vpop.f32.mrb[0].mxu0
      %2216 = vmatprep.mubr.f32.mxu0 0.0
      %2217 = vmatmul.mubr.f32.gmra.mrb[0].mxu0 %v2019
      %v2218 = vpop.f32.mrb[0].mxu0
      %v2219 = vadd.f32 0.0, %v2218
      %v2220 = vpop.f32.mrb[0].mxu0
      %2221 = vmatprep.mubr.f32.mxu0 0.0
      %2222 = vmatmul.mubr.f32.gmra.mrb[0].mxu0 %v2022
      %v2223 = vpop.f32.mrb[0].mxu0
      %v2224 = vadd.f32 0.0, %v2223
      %v2225 = vpop.f32.mrb[0].mxu0
      %2226 = vmatprep.mubr.f32.mxu0 0.0
      %2227 = vmatmul.mubr.f32.gmra.mrb[0].mxu0 %v2025
      %v2228 = vpop.f32.mrb[0].mxu0
      %v2229 = vadd.f32 0.0, %v2228
      %v2230 = vpop.f32.mrb[0].mxu0
      %2231 = vdwg.mxu0
      %v2232 = vadd.f32 %v1885, %v2094
      %v2233 = vadd.f32 %v1886, %v2099
      %v2234 = vadd.f32 %v1887, %v2104
      %v2235 = vadd.f32 %v1888, %v2109
      %v2236 = vadd.f32 %v1889, %v2114
      %v2237 = vadd.f32 %v1890, %v2119
      %v2238 = vadd.f32 %v1891, %v2124
      %v2239 = vadd.f32 %v1892, %v2129
      %v2240 = vadd.f32 %v1893, %v2134
      %v2241 = vadd.f32 %v1894, %v2139
      %v2242 = vadd.f32 %v1895, %v2144
      %v2243 = vadd.f32 %v1896, %v2149
      %v2244 = vadd.f32 %v1897, %v2154
      %v2245 = vadd.f32 %v1898, %v2159
      %v2246 = vadd.f32 %v1899, %v2164
      %v2247 = vadd.f32 %v1900, %v2169
      %v2248 = vadd.f32 %v1901, %v2174
      %v2249 = vadd.f32 %v1902, %v2179
      %v2250 = vadd.f32 %v1903, %v2184
      %v2251 = vadd.f32 %v1904, %v2189
      %v2252 = vadd.f32 %v1905, %v2194
      %v2253 = vadd.f32 %v1906, %v2199
      %v2254 = vadd.f32 %v1907, %v2204
      %v2255 = vadd.f32 %v1908, %v2209
      %v2256 = vadd.f32 %v1909, %v2214
      %v2257 = vadd.f32 %v1910, %v2219
      %v2258 = vadd.f32 %v1911, %v2224
      %v2259 = vadd.f32 %v1912, %v2229
      %v2260 = vld [vmem:[%s165 + $0x20] sm:$0xff]
      %v2261 = vld [vmem:[%s165 + $0x28] sm:$0xff]
      %v2262 = vld [vmem:[%s165 + $0x30] sm:$0xff]
      %v2263 = vld [vmem:[%s165 + $0x38] sm:$0xff]
      %v2264 = vld [vmem:[%s165 + $0x40] sm:$0xff]
      %v2265 = vld [vmem:[%s165 + $0x48] sm:$0xff]
      %v2266 = vld [vmem:[%s165 + $0x50] sm:$0xff]
      %v2267 = vld [vmem:[%s165 + $0x58] sm:$0xff]
      %v2268 = vld [vmem:[%s165 + $0x60] sm:$0xff]
      %v2269 = vld [vmem:[%s165 + $0x68] sm:$0xff]
      %v2270 = vld [vmem:[%s165 + $0x70] sm:$0xff]
      %v2271 = vld [vmem:[%s165 + $0x78] sm:$0xff]
      %v2272 = vld [vmem:[%s165 + $0x80] sm:$0xff]
      %v2273 = vld [vmem:[%s165 + $0x88] sm:$0xff]
      %v2274 = vld [vmem:[%s165 + $0x90] sm:$0xff]
      %v2275 = vld [vmem:[%s165 + $0x98] sm:$0xff]
      %v2276 = vld [vmem:[%s165 + $0xa0] sm:$0xff]
      %v2277 = vld [vmem:[%s165 + $0xa8] sm:$0xff]
      %v2278 = vld [vmem:[%s165 + $0xb0] sm:$0xff]
      %v2279 = vld [vmem:[%s165 + $0xb8] sm:$0xff]
      %v2280 = vld [vmem:[%s165 + $0xc0] sm:$0xff]
      %v2281 = vld [vmem:[%s165 + $0xc8] sm:$0xff]
      %v2282 = vld [vmem:[%s165 + $0xd0] sm:$0xff]
      %v2283 = vld [vmem:[%s165 + $0xd8] sm:$0xff]
      %v2284 = vld [vmem:[%s165 + $0xe0] sm:$0xff]
      %v2285 = vld [vmem:[%s165 + $0xe8] sm:$0xff]
      %v2286 = vld [vmem:[%s165 + $0xf0] sm:$0xff]
      %v2287 = vld [vmem:[%s165 + $0xf8] sm:$0xff]
      %s2288 = scalar_lea.vmem %s1, 48
      %v2289 = vld [vmem:[%s2288] sm:$0xff]
      %v2291 = vsel %vm207, %v2260, 0
      %v2294 = vsel %vm207, %v2261, 0
      %v2297 = vsel %vm207, %v2262, 0
      %v2300 = vsel %vm207, %v2263, 0
      %v2303 = vsel %vm207, %v2264, 0
      %v2306 = vsel %vm207, %v2265, 0
      %v2309 = vsel %vm207, %v2266, 0
      %v2312 = vsel %vm207, %v2267, 0
      %v2315 = vsel %vm207, %v2268, 0
      %v2318 = vsel %vm207, %v2269, 0
      %v2321 = vsel %vm207, %v2270, 0
      %v2324 = vsel %vm207, %v2271, 0
      %v2327 = vsel %vm207, %v2272, 0
      %v2330 = vsel %vm207, %v2273, 0
      %v2333 = vsel %vm207, %v2274, 0
      %v2336 = vsel %vm207, %v2275, 0
      %v2339 = vsel %vm207, %v2276, 0
      %v2342 = vsel %vm207, %v2277, 0
      %v2345 = vsel %vm207, %v2278, 0
      %v2348 = vsel %vm207, %v2279, 0
      %v2351 = vsel %vm207, %v2280, 0
      %v2354 = vsel %vm207, %v2281, 0
      %v2357 = vsel %vm207, %v2282, 0
      %v2360 = vsel %vm207, %v2283, 0
      %v2363 = vsel %vm207, %v2284, 0
      %v2366 = vsel %vm207, %v2285, 0
      %v2369 = vsel %vm207, %v2286, 0
      %v2372 = vsel %vm207, %v2287, 0
      %2374 = vmatprep.subr.mxu0 0.0
      %2375 = vmatpush1.msra.mxu0 %v2289
      %2376 = vmatprep.subr.mxu0 0.0
      %2377 = vmatpush1.msra.mxu0 0.0
      %2378 = vmatprep.subr.mxu0 0.0
      %2379 = vmatpush1.msra.mxu0 0.0
      %2380 = vmatprep.subr.mxu0 0.0
      %2381 = vmatpush1.msra.mxu0 0.0
      %2382 = vmatprep.subr.mxu0 0.0
      %2383 = vmatpush1.msra.mxu0 0.0
      %2384 = vmatprep.subr.mxu0 0.0
      %2385 = vmatpush1.msra.mxu0 0.0
      %2386 = vmatprep.subr.mxu0 0.0
      %2387 = vmatpush1.msra.mxu0 0.0
      %2388 = vmatprep.subr.mxu0 0.0
      %2389 = vmatpush1.msra.mxu0 0.0
      %2390 = vmatprep.subr.mxu0 0.0
      %2391 = vmatpush1.msra.mxu0 0.0
      %2392 = vmatprep.subr.mxu0 0.0
      %2393 = vmatpush1.msra.mxu0 0.0
      %2394 = vmatprep.subr.mxu0 0.0
      %2395 = vmatpush1.msra.mxu0 0.0
      %2396 = vmatprep.subr.mxu0 0.0
      %2397 = vmatpush1.msra.mxu0 0.0
      %2398 = vmatprep.subr.mxu0 0.0
      %2399 = vmatpush1.msra.mxu0 0.0
      %2400 = vmatprep.subr.mxu0 0.0
      %2401 = vmatpush1.msra.mxu0 0.0
      %2402 = vmatprep.subr.mxu0 0.0
      %2403 = vmatpush1.msra.mxu0 0.0
      %2404 = vmatprep.subr.mxu0 0.0
      %2405 = vmatpush1.msra.mxu0 0.0
      %2406 = vmatprep.subr.mxu0 0.0
      %2407 = vmatpush1.msra.mxu0 0.0
      %2408 = vmatprep.subr.mxu0 0.0
      %2409 = vmatpush1.msra.mxu0 0.0
      %2410 = vmatprep.subr.mxu0 0.0
      %2411 = vmatpush1.msra.mxu0 0.0
      %2412 = vmatprep.subr.mxu0 0.0
      %2413 = vmatpush1.msra.mxu0 0.0
      %2414 = vmatprep.subr.mxu0 0.0
      %2415 = vmatpush1.msra.mxu0 0.0
      %2416 = vmatprep.subr.mxu0 0.0
      %2417 = vmatpush1.msra.mxu0 0.0
      %2418 = vmatprep.subr.mxu0 0.0
      %2419 = vmatpush1.msra.mxu0 0.0
      %2420 = vmatprep.subr.mxu0 0.0
      %2421 = vmatpush1.msra.mxu0 0.0
      %2422 = vmatprep.subr.mxu0 0.0
      %2423 = vmatpush1.msra.mxu0 0.0
      %2424 = vmatprep.subr.mxu0 0.0
      %2425 = vmatpush1.msra.mxu0 0.0
      %2426 = vmatprep.subr.mxu0 0.0
      %2427 = vmatpush1.msra.mxu0 0.0
      %2428 = vmatprep.subr.mxu0 0.0
      %2429 = vmatpush1.msra.mxu0 0.0
      %2430 = vmatprep.subr.mxu0 0.0
      %2431 = vmatpush1.msra.mxu0 0.0
      %2432 = vmatprep.subr.mxu0 0.0
      %2433 = vmatpush1.msra.mxu0 0.0
      %2434 = vmatprep.subr.mxu0 0.0
      %2435 = vmatpush1.msra.mxu0 0.0
      %2436 = vmatprep.subr.mxu0 0.0
      %2437 = vmatpush1.msra.mxu0 0.0
      %2438 = vmatprep.mubr.f32.mxu0 0.0
      %2439 = vmatmul.mubr.f32.gmra.mrb[0].mxu0 %v2291
      %v2440 = vpop.f32.mrb[0].mxu0
      %v2441 = vadd.f32 0.0, %v2440
      %v2442 = vpop.f32.mrb[0].mxu0
      %2443 = vmatprep.mubr.f32.mxu0 0.0
      %2444 = vmatmul.mubr.f32.gmra.mrb[0].mxu0 %v2294
      %v2445 = vpop.f32.mrb[0].mxu0
      %v2446 = vadd.f32 0.0, %v2445
      %v2447 = vpop.f32.mrb[0].mxu0
      %2448 = vmatprep.mubr.f32.mxu0 0.0
      %2449 = vmatmul.mubr.f32.gmra.mrb[0].mxu0 %v2297
      %v2450 = vpop.f32.mrb[0].mxu0
      %v2451 = vadd.f32 0.0, %v2450
      %v2452 = vpop.f32.mrb[0].mxu0
      %2453 = vmatprep.mubr.f32.mxu0 0.0
      %2454 = vmatmul.mubr.f32.gmra.mrb[0].mxu0 %v2300
      %v2455 = vpop.f32.mrb[0].mxu0
      %v2456 = vadd.f32 0.0, %v2455
      %v2457 = vpop.f32.mrb[0].mxu0
      %2458 = vmatprep.mubr.f32.mxu0 0.0
      %2459 = vmatmul.mubr.f32.gmra.mrb[0].mxu0 %v2303
      %v2460 = vpop.f32.mrb[0].mxu0
      %v2461 = vadd.f32 0.0, %v2460
      %v2462 = vpop.f32.mrb[0].mxu0
      %2463 = vmatprep.mubr.f32.mxu0 0.0
      %2464 = vmatmul.mubr.f32.gmra.mrb[0].mxu0 %v2306
      %v2465 = vpop.f32.mrb[0].mxu0
      %v2466 = vadd.f32 0.0, %v2465
      %v2467 = vpop.f32.mrb[0].mxu0
      %2468 = vmatprep.mubr.f32.mxu0 0.0
      %2469 = vmatmul.mubr.f32.gmra.mrb[0].mxu0 %v2309
      %v2470 = vpop.f32.mrb[0].mxu0
      %v2471 = vadd.f32 0.0, %v2470
      %v2472 = vpop.f32.mrb[0].mxu0
      %2473 = vmatprep.mubr.f32.mxu0 0.0
      %2474 = vmatmul.mubr.f32.gmra.mrb[0].mxu0 %v2312
      %v2475 = vpop.f32.mrb[0].mxu0
      %v2476 = vadd.f32 0.0, %v2475
      %v2477 = vpop.f32.mrb[0].mxu0
      %2478 = vmatprep.mubr.f32.mxu0 0.0
      %2479 = vmatmul.mubr.f32.gmra.mrb[0].mxu0 %v2315
      %v2480 = vpop.f32.mrb[0].mxu0
      %v2481 = vadd.f32 0.0, %v2480
      %v2482 = vpop.f32.mrb[0].mxu0
      %2483 = vmatprep.mubr.f32.mxu0 0.0
      %2484 = vmatmul.mubr.f32.gmra.mrb[0].mxu0 %v2318
      %v2485 = vpop.f32.mrb[0].mxu0
      %v2486 = vadd.f32 0.0, %v2485
      %v2487 = vpop.f32.mrb[0].mxu0
      %2488 = vmatprep.mubr.f32.mxu0 0.0
      %2489 = vmatmul.mubr.f32.gmra.mrb[0].mxu0 %v2321
      %v2490 = vpop.f32.mrb[0].mxu0
      %v2491 = vadd.f32 0.0, %v2490
      %v2492 = vpop.f32.mrb[0].mxu0
      %2493 = vmatprep.mubr.f32.mxu0 0.0
      %2494 = vmatmul.mubr.f32.gmra.mrb[0].mxu0 %v2324
      %v2495 = vpop.f32.mrb[0].mxu0
      %v2496 = vadd.f32 0.0, %v2495
      %v2497 = vpop.f32.mrb[0].mxu0
      %2498 = vmatprep.mubr.f32.mxu0 0.0
      %2499 = vmatmul.mubr.f32.gmra.mrb[0].mxu0 %v2327
      %v2500 = vpop.f32.mrb[0].mxu0
      %v2501 = vadd.f32 0.0, %v2500
      %v2502 = vpop.f32.mrb[0].mxu0
      %2503 = vmatprep.mubr.f32.mxu0 0.0
      %2504 = vmatmul.mubr.f32.gmra.mrb[0].mxu0 %v2330
      %v2505 = vpop.f32.mrb[0].mxu0
      %v2506 = vadd.f32 0.0, %v2505
      %v2507 = vpop.f32.mrb[0].mxu0
      %2508 = vmatprep.mubr.f32.mxu0 0.0
      %2509 = vmatmul.mubr.f32.gmra.mrb[0].mxu0 %v2333
      %v2510 = vpop.f32.mrb[0].mxu0
      %v2511 = vadd.f32 0.0, %v2510
      %v2512 = vpop.f32.mrb[0].mxu0
      %2513 = vmatprep.mubr.f32.mxu0 0.0
      %2514 = vmatmul.mubr.f32.gmra.mrb[0].mxu0 %v2336
      %v2515 = vpop.f32.mrb[0].mxu0
      %v2516 = vadd.f32 0.0, %v2515
      %v2517 = vpop.f32.mrb[0].mxu0
      %2518 = vmatprep.mubr.f32.mxu0 0.0
      %2519 = vmatmul.mubr.f32.gmra.mrb[0].mxu0 %v2339
      %v2520 = vpop.f32.mrb[0].mxu0
      %v2521 = vadd.f32 0.0, %v2520
      %v2522 = vpop.f32.mrb[0].mxu0
      %2523 = vmatprep.mubr.f32.mxu0 0.0
      %2524 = vmatmul.mubr.f32.gmra.mrb[0].mxu0 %v2342
      %v2525 = vpop.f32.mrb[0].mxu0
      %v2526 = vadd.f32 0.0, %v2525
      %v2527 = vpop.f32.mrb[0].mxu0
      %2528 = vmatprep.mubr.f32.mxu0 0.0
      %2529 = vmatmul.mubr.f32.gmra.mrb[0].mxu0 %v2345
      %v2530 = vpop.f32.mrb[0].mxu0
      %v2531 = vadd.f32 0.0, %v2530
      %v2532 = vpop.f32.mrb[0].mxu0
      %2533 = vmatprep.mubr.f32.mxu0 0.0
      %2534 = vmatmul.mubr.f32.gmra.mrb[0].mxu0 %v2348
      %v2535 = vpop.f32.mrb[0].mxu0
      %v2536 = vadd.f32 0.0, %v2535
      %v2537 = vpop.f32.mrb[0].mxu0
      %2538 = vmatprep.mubr.f32.mxu0 0.0
      %2539 = vmatmul.mubr.f32.gmra.mrb[0].mxu0 %v2351
      %v2540 = vpop.f32.mrb[0].mxu0
      %v2541 = vadd.f32 0.0, %v2540
      %v2542 = vpop.f32.mrb[0].mxu0
      %2543 = vmatprep.mubr.f32.mxu0 0.0
      %2544 = vmatmul.mubr.f32.gmra.mrb[0].mxu0 %v2354
      %v2545 = vpop.f32.mrb[0].mxu0
      %v2546 = vadd.f32 0.0, %v2545
      %v2547 = vpop.f32.mrb[0].mxu0
      %2548 = vmatprep.mubr.f32.mxu0 0.0
      %2549 = vmatmul.mubr.f32.gmra.mrb[0].mxu0 %v2357
      %v2550 = vpop.f32.mrb[0].mxu0
      %v2551 = vadd.f32 0.0, %v2550
      %v2552 = vpop.f32.mrb[0].mxu0
      %2553 = vmatprep.mubr.f32.mxu0 0.0
      %2554 = vmatmul.mubr.f32.gmra.mrb[0].mxu0 %v2360
      %v2555 = vpop.f32.mrb[0].mxu0
      %v2556 = vadd.f32 0.0, %v2555
      %v2557 = vpop.f32.mrb[0].mxu0
      %2558 = vmatprep.mubr.f32.mxu0 0.0
      %2559 = vmatmul.mubr.f32.gmra.mrb[0].mxu0 %v2363
      %v2560 = vpop.f32.mrb[0].mxu0
      %v2561 = vadd.f32 0.0, %v2560
      %v2562 = vpop.f32.mrb[0].mxu0
      %2563 = vmatprep.mubr.f32.mxu0 0.0
      %2564 = vmatmul.mubr.f32.gmra.mrb[0].mxu0 %v2366
      %v2565 = vpop.f32.mrb[0].mxu0
      %v2566 = vadd.f32 0.0, %v2565
      %v2567 = vpop.f32.mrb[0].mxu0
      %2568 = vmatprep.mubr.f32.mxu0 0.0
      %2569 = vmatmul.mubr.f32.gmra.mrb[0].mxu0 %v2369
      %v2570 = vpop.f32.mrb[0].mxu0
      %v2571 = vadd.f32 0.0, %v2570
      %v2572 = vpop.f32.mrb[0].mxu0
      %2573 = vmatprep.mubr.f32.mxu0 0.0
      %2574 = vmatmul.mubr.f32.gmra.mrb[0].mxu0 %v2372
      %v2575 = vpop.f32.mrb[0].mxu0
      %v2576 = vadd.f32 0.0, %v2575
      %v2577 = vpop.f32.mrb[0].mxu0
      %2578 = vdwg.mxu0
      %v2579 = vadd.f32 %v2232, %v2441
      %v2580 = vadd.f32 %v2233, %v2446
      %v2581 = vadd.f32 %v2234, %v2451
      %v2582 = vadd.f32 %v2235, %v2456
      %v2583 = vadd.f32 %v2236, %v2461
      %v2584 = vadd.f32 %v2237, %v2466
      %v2585 = vadd.f32 %v2238, %v2471
      %v2586 = vadd.f32 %v2239, %v2476
      %v2587 = vadd.f32 %v2240, %v2481
      %v2588 = vadd.f32 %v2241, %v2486
      %v2589 = vadd.f32 %v2242, %v2491
      %v2590 = vadd.f32 %v2243, %v2496
      %v2591 = vadd.f32 %v2244, %v2501
      %v2592 = vadd.f32 %v2245, %v2506
      %v2593 = vadd.f32 %v2246, %v2511
      %v2594 = vadd.f32 %v2247, %v2516
      %v2595 = vadd.f32 %v2248, %v2521
      %v2596 = vadd.f32 %v2249, %v2526
      %v2597 = vadd.f32 %v2250, %v2531
      %v2598 = vadd.f32 %v2251, %v2536
      %v2599 = vadd.f32 %v2252, %v2541
      %v2600 = vadd.f32 %v2253, %v2546
      %v2601 = vadd.f32 %v2254, %v2551
      %v2602 = vadd.f32 %v2255, %v2556
      %v2603 = vadd.f32 %v2256, %v2561
      %v2604 = vadd.f32 %v2257, %v2566
      %v2605 = vadd.f32 %v2258, %v2571
      %v2606 = vadd.f32 %v2259, %v2576
      %v2607 = vld [vmem:[%s165 + $0x21] sm:$0xff]
      %v2608 = vld [vmem:[%s165 + $0x29] sm:$0xff]
      %v2609 = vld [vmem:[%s165 + $0x31] sm:$0xff]
      %v2610 = vld [vmem:[%s165 + $0x39] sm:$0xff]
      %v2611 = vld [vmem:[%s165 + $0x41] sm:$0xff]
      %v2612 = vld [vmem:[%s165 + $0x49] sm:$0xff]
      %v2613 = vld [vmem:[%s165 + $0x51] sm:$0xff]
      %v2614 = vld [vmem:[%s165 + $0x59] sm:$0xff]
      %v2615 = vld [vmem:[%s165 + $0x61] sm:$0xff]
      %v2616 = vld [vmem:[%s165 + $0x69] sm:$0xff]
      %v2617 = vld [vmem:[%s165 + $0x71] sm:$0xff]
      %v2618 = vld [vmem:[%s165 + $0x79] sm:$0xff]
      %v2619 = vld [vmem:[%s165 + $0x81] sm:$0xff]
      %v2620 = vld [vmem:[%s165 + $0x89] sm:$0xff]
      %v2621 = vld [vmem:[%s165 + $0x91] sm:$0xff]
      %v2622 = vld [vmem:[%s165 + $0x99] sm:$0xff]
      %v2623 = vld [vmem:[%s165 + $0xa1] sm:$0xff]
      %v2624 = vld [vmem:[%s165 + $0xa9] sm:$0xff]
      %v2625 = vld [vmem:[%s165 + $0xb1] sm:$0xff]
      %v2626 = vld [vmem:[%s165 + $0xb9] sm:$0xff]
      %v2627 = vld [vmem:[%s165 + $0xc1] sm:$0xff]
      %v2628 = vld [vmem:[%s165 + $0xc9] sm:$0xff]
      %v2629 = vld [vmem:[%s165 + $0xd1] sm:$0xff]
      %v2630 = vld [vmem:[%s165 + $0xd9] sm:$0xff]
      %v2631 = vld [vmem:[%s165 + $0xe1] sm:$0xff]
      %v2632 = vld [vmem:[%s165 + $0xe9] sm:$0xff]
      %v2633 = vld [vmem:[%s165 + $0xf1] sm:$0xff]
      %v2634 = vld [vmem:[%s165 + $0xf9] sm:$0xff]
      %s2635 = scalar_lea.vmem %s1, 56
      %v2636 = vld [vmem:[%s2635] sm:$0xff]
      %v2638 = vsel %vm207, %v2607, 0
      %v2641 = vsel %vm207, %v2608, 0
      %v2644 = vsel %vm207, %v2609, 0
      %v2647 = vsel %vm207, %v2610, 0
      %v2650 = vsel %vm207, %v2611, 0
      %v2653 = vsel %vm207, %v2612, 0
      %v2656 = vsel %vm207, %v2613, 0
      %v2659 = vsel %vm207, %v2614, 0
      %v2662 = vsel %vm207, %v2615, 0
      %v2665 = vsel %vm207, %v2616, 0
      %v2668 = vsel %vm207, %v2617, 0
      %v2671 = vsel %vm207, %v2618, 0
      %v2674 = vsel %vm207, %v2619, 0
      %v2677 = vsel %vm207, %v2620, 0
      %v2680 = vsel %vm207, %v2621, 0
      %v2683 = vsel %vm207, %v2622, 0
      %v2686 = vsel %vm207, %v2623, 0
      %v2689 = vsel %vm207, %v2624, 0
      %v2692 = vsel %vm207, %v2625, 0
      %v2695 = vsel %vm207, %v2626, 0
      %v2698 = vsel %vm207, %v2627, 0
      %v2701 = vsel %vm207, %v2628, 0
      %v2704 = vsel %vm207, %v2629, 0
      %v2707 = vsel %vm207, %v2630, 0
      %v2710 = vsel %vm207, %v2631, 0
      %v2713 = vsel %vm207, %v2632, 0
      %v2716 = vsel %vm207, %v2633, 0
      %v2719 = vsel %vm207, %v2634, 0
      %2721 = vmatprep.subr.mxu0 0.0
      %2722 = vmatpush1.msra.mxu0 %v2636
      %2723 = vmatprep.subr.mxu0 0.0
      %2724 = vmatpush1.msra.mxu0 0.0
      %2725 = vmatprep.subr.mxu0 0.0
      %2726 = vmatpush1.msra.mxu0 0.0
      %2727 = vmatprep.subr.mxu0 0.0
      %2728 = vmatpush1.msra.mxu0 0.0
      %2729 = vmatprep.subr.mxu0 0.0
      %2730 = vmatpush1.msra.mxu0 0.0
      %2731 = vmatprep.subr.mxu0 0.0
      %2732 = vmatpush1.msra.mxu0 0.0
      %2733 = vmatprep.subr.mxu0 0.0
      %2734 = vmatpush1.msra.mxu0 0.0
      %2735 = vmatprep.subr.mxu0 0.0
      %2736 = vmatpush1.msra.mxu0 0.0
      %2737 = vmatprep.subr.mxu0 0.0
      %2738 = vmatpush1.msra.mxu0 0.0
      %2739 = vmatprep.subr.mxu0 0.0
      %2740 = vmatpush1.msra.mxu0 0.0
      %2741 = vmatprep.subr.mxu0 0.0
      %2742 = vmatpush1.msra.mxu0 0.0
      %2743 = vmatprep.subr.mxu0 0.0
      %2744 = vmatpush1.msra.mxu0 0.0
      %2745 = vmatprep.subr.mxu0 0.0
      %2746 = vmatpush1.msra.mxu0 0.0
      %2747 = vmatprep.subr.mxu0 0.0
      %2748 = vmatpush1.msra.mxu0 0.0
      %2749 = vmatprep.subr.mxu0 0.0
      %2750 = vmatpush1.msra.mxu0 0.0
      %2751 = vmatprep.subr.mxu0 0.0
      %2752 = vmatpush1.msra.mxu0 0.0
      %2753 = vmatprep.subr.mxu0 0.0
      %2754 = vmatpush1.msra.mxu0 0.0
      %2755 = vmatprep.subr.mxu0 0.0
      %2756 = vmatpush1.msra.mxu0 0.0
      %2757 = vmatprep.subr.mxu0 0.0
      %2758 = vmatpush1.msra.mxu0 0.0
      %2759 = vmatprep.subr.mxu0 0.0
      %2760 = vmatpush1.msra.mxu0 0.0
      %2761 = vmatprep.subr.mxu0 0.0
      %2762 = vmatpush1.msra.mxu0 0.0
      %2763 = vmatprep.subr.mxu0 0.0
      %2764 = vmatpush1.msra.mxu0 0.0
      %2765 = vmatprep.subr.mxu0 0.0
      %2766 = vmatpush1.msra.mxu0 0.0
      %2767 = vmatprep.subr.mxu0 0.0
      %2768 = vmatpush1.msra.mxu0 0.0
      %2769 = vmatprep.subr.mxu0 0.0
      %2770 = vmatpush1.msra.mxu0 0.0
      %2771 = vmatprep.subr.mxu0 0.0
      %2772 = vmatpush1.msra.mxu0 0.0
      %2773 = vmatprep.subr.mxu0 0.0
      %2774 = vmatpush1.msra.mxu0 0.0
      %2775 = vmatprep.subr.mxu0 0.0
      %2776 = vmatpush1.msra.mxu0 0.0
      %2777 = vmatprep.subr.mxu0 0.0
      %2778 = vmatpush1.msra.mxu0 0.0
      %2779 = vmatprep.subr.mxu0 0.0
      %2780 = vmatpush1.msra.mxu0 0.0
      %2781 = vmatprep.subr.mxu0 0.0
      %2782 = vmatpush1.msra.mxu0 0.0
      %2783 = vmatprep.subr.mxu0 0.0
      %2784 = vmatpush1.msra.mxu0 0.0
      %2785 = vmatprep.mubr.f32.mxu0 0.0
      %2786 = vmatmul.mubr.f32.gmra.mrb[0].mxu0 %v2638
      %v2787 = vpop.f32.mrb[0].mxu0
      %v2788 = vadd.f32 0.0, %v2787
      %v2789 = vpop.f32.mrb[0].mxu0
      %2790 = vmatprep.mubr.f32.mxu0 0.0
      %2791 = vmatmul.mubr.f32.gmra.mrb[0].mxu0 %v2641
      %v2792 = vpop.f32.mrb[0].mxu0
      %v2793 = vadd.f32 0.0, %v2792
      %v2794 = vpop.f32.mrb[0].mxu0
      %2795 = vmatprep.mubr.f32.mxu0 0.0
      %2796 = vmatmul.mubr.f32.gmra.mrb[0].mxu0 %v2644
      %v2797 = vpop.f32.mrb[0].mxu0
      %v2798 = vadd.f32 0.0, %v2797
      %v2799 = vpop.f32.mrb[0].mxu0
      %2800 = vmatprep.mubr.f32.mxu0 0.0
      %2801 = vmatmul.mubr.f32.gmra.mrb[0].mxu0 %v2647
      %v2802 = vpop.f32.mrb[0].mxu0
      %v2803 = vadd.f32 0.0, %v2802
      %v2804 = vpop.f32.mrb[0].mxu0
      %2805 = vmatprep.mubr.f32.mxu0 0.0
      %2806 = vmatmul.mubr.f32.gmra.mrb[0].mxu0 %v2650
      %v2807 = vpop.f32.mrb[0].mxu0
      %v2808 = vadd.f32 0.0, %v2807
      %v2809 = vpop.f32.mrb[0].mxu0
      %2810 = vmatprep.mubr.f32.mxu0 0.0
      %2811 = vmatmul.mubr.f32.gmra.mrb[0].mxu0 %v2653
      %v2812 = vpop.f32.mrb[0].mxu0
      %v2813 = vadd.f32 0.0, %v2812
      %v2814 = vpop.f32.mrb[0].mxu0
      %2815 = vmatprep.mubr.f32.mxu0 0.0
      %2816 = vmatmul.mubr.f32.gmra.mrb[0].mxu0 %v2656
      %v2817 = vpop.f32.mrb[0].mxu0
      %v2818 = vadd.f32 0.0, %v2817
      %v2819 = vpop.f32.mrb[0].mxu0
      %2820 = vmatprep.mubr.f32.mxu0 0.0
      %2821 = vmatmul.mubr.f32.gmra.mrb[0].mxu0 %v2659
      %v2822 = vpop.f32.mrb[0].mxu0
      %v2823 = vadd.f32 0.0, %v2822
      %v2824 = vpop.f32.mrb[0].mxu0
      %2825 = vmatprep.mubr.f32.mxu0 0.0
      %2826 = vmatmul.mubr.f32.gmra.mrb[0].mxu0 %v2662
      %v2827 = vpop.f32.mrb[0].mxu0
      %v2828 = vadd.f32 0.0, %v2827
      %v2829 = vpop.f32.mrb[0].mxu0
      %2830 = vmatprep.mubr.f32.mxu0 0.0
      %2831 = vmatmul.mubr.f32.gmra.mrb[0].mxu0 %v2665
      %v2832 = vpop.f32.mrb[0].mxu0
      %v2833 = vadd.f32 0.0, %v2832
      %v2834 = vpop.f32.mrb[0].mxu0
      %2835 = vmatprep.mubr.f32.mxu0 0.0
      %2836 = vmatmul.mubr.f32.gmra.mrb[0].mxu0 %v2668
      %v2837 = vpop.f32.mrb[0].mxu0
      %v2838 = vadd.f32 0.0, %v2837
      %v2839 = vpop.f32.mrb[0].mxu0
      %2840 = vmatprep.mubr.f32.mxu0 0.0
      %2841 = vmatmul.mubr.f32.gmra.mrb[0].mxu0 %v2671
      %v2842 = vpop.f32.mrb[0].mxu0
      %v2843 = vadd.f32 0.0, %v2842
      %v2844 = vpop.f32.mrb[0].mxu0
      %2845 = vmatprep.mubr.f32.mxu0 0.0
      %2846 = vmatmul.mubr.f32.gmra.mrb[0].mxu0 %v2674
      %v2847 = vpop.f32.mrb[0].mxu0
      %v2848 = vadd.f32 0.0, %v2847
      %v2849 = vpop.f32.mrb[0].mxu0
      %2850 = vmatprep.mubr.f32.mxu0 0.0
      %2851 = vmatmul.mubr.f32.gmra.mrb[0].mxu0 %v2677
      %v2852 = vpop.f32.mrb[0].mxu0
      %v2853 = vadd.f32 0.0, %v2852
      %v2854 = vpop.f32.mrb[0].mxu0
      %2855 = vmatprep.mubr.f32.mxu0 0.0
      %2856 = vmatmul.mubr.f32.gmra.mrb[0].mxu0 %v2680
      %v2857 = vpop.f32.mrb[0].mxu0
      %v2858 = vadd.f32 0.0, %v2857
      %v2859 = vpop.f32.mrb[0].mxu0
      %2860 = vmatprep.mubr.f32.mxu0 0.0
      %2861 = vmatmul.mubr.f32.gmra.mrb[0].mxu0 %v2683
      %v2862 = vpop.f32.mrb[0].mxu0
      %v2863 = vadd.f32 0.0, %v2862
      %v2864 = vpop.f32.mrb[0].mxu0
      %2865 = vmatprep.mubr.f32.mxu0 0.0
      %2866 = vmatmul.mubr.f32.gmra.mrb[0].mxu0 %v2686
      %v2867 = vpop.f32.mrb[0].mxu0
      %v2868 = vadd.f32 0.0, %v2867
      %v2869 = vpop.f32.mrb[0].mxu0
      %2870 = vmatprep.mubr.f32.mxu0 0.0
      %2871 = vmatmul.mubr.f32.gmra.mrb[0].mxu0 %v2689
      %v2872 = vpop.f32.mrb[0].mxu0
      %v2873 = vadd.f32 0.0, %v2872
      %v2874 = vpop.f32.mrb[0].mxu0
      %2875 = vmatprep.mubr.f32.mxu0 0.0
      %2876 = vmatmul.mubr.f32.gmra.mrb[0].mxu0 %v2692
      %v2877 = vpop.f32.mrb[0].mxu0
      %v2878 = vadd.f32 0.0, %v2877
      %v2879 = vpop.f32.mrb[0].mxu0
      %2880 = vmatprep.mubr.f32.mxu0 0.0
      %2881 = vmatmul.mubr.f32.gmra.mrb[0].mxu0 %v2695
      %v2882 = vpop.f32.mrb[0].mxu0
      %v2883 = vadd.f32 0.0, %v2882
      %v2884 = vpop.f32.mrb[0].mxu0
      %2885 = vmatprep.mubr.f32.mxu0 0.0
      %2886 = vmatmul.mubr.f32.gmra.mrb[0].mxu0 %v2698
      %v2887 = vpop.f32.mrb[0].mxu0
      %v2888 = vadd.f32 0.0, %v2887
      %v2889 = vpop.f32.mrb[0].mxu0
      %2890 = vmatprep.mubr.f32.mxu0 0.0
      %2891 = vmatmul.mubr.f32.gmra.mrb[0].mxu0 %v2701
      %v2892 = vpop.f32.mrb[0].mxu0
      %v2893 = vadd.f32 0.0, %v2892
      %v2894 = vpop.f32.mrb[0].mxu0
      %2895 = vmatprep.mubr.f32.mxu0 0.0
      %2896 = vmatmul.mubr.f32.gmra.mrb[0].mxu0 %v2704
      %v2897 = vpop.f32.mrb[0].mxu0
      %v2898 = vadd.f32 0.0, %v2897
      %v2899 = vpop.f32.mrb[0].mxu0
      %2900 = vmatprep.mubr.f32.mxu0 0.0
      %2901 = vmatmul.mubr.f32.gmra.mrb[0].mxu0 %v2707
      %v2902 = vpop.f32.mrb[0].mxu0
      %v2903 = vadd.f32 0.0, %v2902
      %v2904 = vpop.f32.mrb[0].mxu0
      %2905 = vmatprep.mubr.f32.mxu0 0.0
      %2906 = vmatmul.mubr.f32.gmra.mrb[0].mxu0 %v2710
      %v2907 = vpop.f32.mrb[0].mxu0
      %v2908 = vadd.f32 0.0, %v2907
      %v2909 = vpop.f32.mrb[0].mxu0
      %2910 = vmatprep.mubr.f32.mxu0 0.0
      %2911 = vmatmul.mubr.f32.gmra.mrb[0].mxu0 %v2713
      %v2912 = vpop.f32.mrb[0].mxu0
      %v2913 = vadd.f32 0.0, %v2912
      %v2914 = vpop.f32.mrb[0].mxu0
      %2915 = vmatprep.mubr.f32.mxu0 0.0
      %2916 = vmatmul.mubr.f32.gmra.mrb[0].mxu0 %v2716
      %v2917 = vpop.f32.mrb[0].mxu0
      %v2918 = vadd.f32 0.0, %v2917
      %v2919 = vpop.f32.mrb[0].mxu0
      %2920 = vmatprep.mubr.f32.mxu0 0.0
      %2921 = vmatmul.mubr.f32.gmra.mrb[0].mxu0 %v2719
      %v2922 = vpop.f32.mrb[0].mxu0
      %v2923 = vadd.f32 0.0, %v2922
      %v2924 = vpop.f32.mrb[0].mxu0
      %2925 = vdwg.mxu0
      %v2926 = vadd.f32 %v2579, %v2788
      %v2927 = vadd.f32 %v2580, %v2793
      %v2928 = vadd.f32 %v2581, %v2798
      %v2929 = vadd.f32 %v2582, %v2803
      %v2930 = vadd.f32 %v2583, %v2808
      %v2931 = vadd.f32 %v2584, %v2813
      %v2932 = vadd.f32 %v2585, %v2818
      %v2933 = vadd.f32 %v2586, %v2823
      %v2934 = vadd.f32 %v2587, %v2828
      %v2935 = vadd.f32 %v2588, %v2833
      %v2936 = vadd.f32 %v2589, %v2838
      %v2937 = vadd.f32 %v2590, %v2843
      %v2938 = vadd.f32 %v2591, %v2848
      %v2939 = vadd.f32 %v2592, %v2853
      %v2940 = vadd.f32 %v2593, %v2858
      %v2941 = vadd.f32 %v2594, %v2863
      %v2942 = vadd.f32 %v2595, %v2868
      %v2943 = vadd.f32 %v2596, %v2873
      %v2944 = vadd.f32 %v2597, %v2878
      %v2945 = vadd.f32 %v2598, %v2883
      %v2946 = vadd.f32 %v2599, %v2888
      %v2947 = vadd.f32 %v2600, %v2893
      %v2948 = vadd.f32 %v2601, %v2898
      %v2949 = vadd.f32 %v2602, %v2903
      %v2950 = vadd.f32 %v2603, %v2908
      %v2951 = vadd.f32 %v2604, %v2913
      %v2952 = vadd.f32 %v2605, %v2918
      %v2953 = vadd.f32 %v2606, %v2923
      %v2954 = vld [vmem:[%s165 + $0x22] sm:$0xff]
      %v2955 = vld [vmem:[%s165 + $0x2a] sm:$0xff]
      %v2956 = vld [vmem:[%s165 + $0x32] sm:$0xff]
      %v2957 = vld [vmem:[%s165 + $0x3a] sm:$0xff]
      %v2958 = vld [vmem:[%s165 + $0x42] sm:$0xff]
      %v2959 = vld [vmem:[%s165 + $0x4a] sm:$0xff]
      %v2960 = vld [vmem:[%s165 + $0x52] sm:$0xff]
      %v2961 = vld [vmem:[%s165 + $0x5a] sm:$0xff]
      %v2962 = vld [vmem:[%s165 + $0x62] sm:$0xff]
      %v2963 = vld [vmem:[%s165 + $0x6a] sm:$0xff]
      %v2964 = vld [vmem:[%s165 + $0x72] sm:$0xff]
      %v2965 = vld [vmem:[%s165 + $0x7a] sm:$0xff]
      %v2966 = vld [vmem:[%s165 + $0x82] sm:$0xff]
      %v2967 = vld [vmem:[%s165 + $0x8a] sm:$0xff]
      %v2968 = vld [vmem:[%s165 + $0x92] sm:$0xff]
      %v2969 = vld [vmem:[%s165 + $0x9a] sm:$0xff]
      %v2970 = vld [vmem:[%s165 + $0xa2] sm:$0xff]
      %v2971 = vld [vmem:[%s165 + $0xaa] sm:$0xff]
      %v2972 = vld [vmem:[%s165 + $0xb2] sm:$0xff]
      %v2973 = vld [vmem:[%s165 + $0xba] sm:$0xff]
      %v2974 = vld [vmem:[%s165 + $0xc2] sm:$0xff]
      %v2975 = vld [vmem:[%s165 + $0xca] sm:$0xff]
      %v2976 = vld [vmem:[%s165 + $0xd2] sm:$0xff]
      %v2977 = vld [vmem:[%s165 + $0xda] sm:$0xff]
      %v2978 = vld [vmem:[%s165 + $0xe2] sm:$0xff]
      %v2979 = vld [vmem:[%s165 + $0xea] sm:$0xff]
      %v2980 = vld [vmem:[%s165 + $0xf2] sm:$0xff]
      %v2981 = vld [vmem:[%s165 + $0xfa] sm:$0xff]
      %s2982 = scalar_lea.vmem %s1, 64
      %v2983 = vld [vmem:[%s2982] sm:$0xff]
      %v2985 = vsel %vm207, %v2954, 0
      %v2988 = vsel %vm207, %v2955, 0
      %v2991 = vsel %vm207, %v2956, 0
      %v2994 = vsel %vm207, %v2957, 0
      %v2997 = vsel %vm207, %v2958, 0
      %v3000 = vsel %vm207, %v2959, 0
      %v3003 = vsel %vm207, %v2960, 0
      %v3006 = vsel %vm207, %v2961, 0
      %v3009 = vsel %vm207, %v2962, 0
      %v3012 = vsel %vm207, %v2963, 0
      %v3015 = vsel %vm207, %v2964, 0
      %v3018 = vsel %vm207, %v2965, 0
      %v3021 = vsel %vm207, %v2966, 0
      %v3024 = vsel %vm207, %v2967, 0
      %v3027 = vsel %vm207, %v2968, 0
      %v3030 = vsel %vm207, %v2969, 0
      %v3033 = vsel %vm207, %v2970, 0
      %v3036 = vsel %vm207, %v2971, 0
      %v3039 = vsel %vm207, %v2972, 0
      %v3042 = vsel %vm207, %v2973, 0
      %v3045 = vsel %vm207, %v2974, 0
      %v3048 = vsel %vm207, %v2975, 0
      %v3051 = vsel %vm207, %v2976, 0
      %v3054 = vsel %vm207, %v2977, 0
      %v3057 = vsel %vm207, %v2978, 0
      %v3060 = vsel %vm207, %v2979, 0
      %v3063 = vsel %vm207, %v2980, 0
      %v3066 = vsel %vm207, %v2981, 0
      %3068 = vmatprep.subr.mxu0 0.0
      %3069 = vmatpush1.msra.mxu0 %v2983
      %3070 = vmatprep.subr.mxu0 0.0
      %3071 = vmatpush1.msra.mxu0 0.0
      %3072 = vmatprep.subr.mxu0 0.0
      %3073 = vmatpush1.msra.mxu0 0.0
      %3074 = vmatprep.subr.mxu0 0.0
      %3075 = vmatpush1.msra.mxu0 0.0
      %3076 = vmatprep.subr.mxu0 0.0
      %3077 = vmatpush1.msra.mxu0 0.0
      %3078 = vmatprep.subr.mxu0 0.0
      %3079 = vmatpush1.msra.mxu0 0.0
      %3080 = vmatprep.subr.mxu0 0.0
      %3081 = vmatpush1.msra.mxu0 0.0
      %3082 = vmatprep.subr.mxu0 0.0
      %3083 = vmatpush1.msra.mxu0 0.0
      %3084 = vmatprep.subr.mxu0 0.0
      %3085 = vmatpush1.msra.mxu0 0.0
      %3086 = vmatprep.subr.mxu0 0.0
      %3087 = vmatpush1.msra.mxu0 0.0
      %3088 = vmatprep.subr.mxu0 0.0
      %3089 = vmatpush1.msra.mxu0 0.0
      %3090 = vmatprep.subr.mxu0 0.0
      %3091 = vmatpush1.msra.mxu0 0.0
      %3092 = vmatprep.subr.mxu0 0.0
      %3093 = vmatpush1.msra.mxu0 0.0
      %3094 = vmatprep.subr.mxu0 0.0
      %3095 = vmatpush1.msra.mxu0 0.0
      %3096 = vmatprep.subr.mxu0 0.0
      %3097 = vmatpush1.msra.mxu0 0.0
      %3098 = vmatprep.subr.mxu0 0.0
      %3099 = vmatpush1.msra.mxu0 0.0
      %3100 = vmatprep.subr.mxu0 0.0
      %3101 = vmatpush1.msra.mxu0 0.0
      %3102 = vmatprep.subr.mxu0 0.0
      %3103 = vmatpush1.msra.mxu0 0.0
      %3104 = vmatprep.subr.mxu0 0.0
      %3105 = vmatpush1.msra.mxu0 0.0
      %3106 = vmatprep.subr.mxu0 0.0
      %3107 = vmatpush1.msra.mxu0 0.0
      %3108 = vmatprep.subr.mxu0 0.0
      %3109 = vmatpush1.msra.mxu0 0.0
      %3110 = vmatprep.subr.mxu0 0.0
      %3111 = vmatpush1.msra.mxu0 0.0
      %3112 = vmatprep.subr.mxu0 0.0
      %3113 = vmatpush1.msra.mxu0 0.0
      %3114 = vmatprep.subr.mxu0 0.0
      %3115 = vmatpush1.msra.mxu0 0.0
      %3116 = vmatprep.subr.mxu0 0.0
      %3117 = vmatpush1.msra.mxu0 0.0
      %3118 = vmatprep.subr.mxu0 0.0
      %3119 = vmatpush1.msra.mxu0 0.0
      %3120 = vmatprep.subr.mxu0 0.0
      %3121 = vmatpush1.msra.mxu0 0.0
      %3122 = vmatprep.subr.mxu0 0.0
      %3123 = vmatpush1.msra.mxu0 0.0
      %3124 = vmatprep.subr.mxu0 0.0
      %3125 = vmatpush1.msra.mxu0 0.0
      %3126 = vmatprep.subr.mxu0 0.0
      %3127 = vmatpush1.msra.mxu0 0.0
      %3128 = vmatprep.subr.mxu0 0.0
      %3129 = vmatpush1.msra.mxu0 0.0
      %3130 = vmatprep.subr.mxu0 0.0
      %3131 = vmatpush1.msra.mxu0 0.0
      %3132 = vmatprep.mubr.f32.mxu0 0.0
      %3133 = vmatmul.mubr.f32.gmra.mrb[0].mxu0 %v2985
      %v3134 = vpop.f32.mrb[0].mxu0
      %v3135 = vadd.f32 0.0, %v3134
      %v3136 = vpop.f32.mrb[0].mxu0
      %3137 = vmatprep.mubr.f32.mxu0 0.0
      %3138 = vmatmul.mubr.f32.gmra.mrb[0].mxu0 %v2988
      %v3139 = vpop.f32.mrb[0].mxu0
      %v3140 = vadd.f32 0.0, %v3139
      %v3141 = vpop.f32.mrb[0].mxu0
      %3142 = vmatprep.mubr.f32.mxu0 0.0
      %3143 = vmatmul.mubr.f32.gmra.mrb[0].mxu0 %v2991
      %v3144 = vpop.f32.mrb[0].mxu0
      %v3145 = vadd.f32 0.0, %v3144
      %v3146 = vpop.f32.mrb[0].mxu0
      %3147 = vmatprep.mubr.f32.mxu0 0.0
      %3148 = vmatmul.mubr.f32.gmra.mrb[0].mxu0 %v2994
      %v3149 = vpop.f32.mrb[0].mxu0
      %v3150 = vadd.f32 0.0, %v3149
      %v3151 = vpop.f32.mrb[0].mxu0
      %3152 = vmatprep.mubr.f32.mxu0 0.0
      %3153 = vmatmul.mubr.f32.gmra.mrb[0].mxu0 %v2997
      %v3154 = vpop.f32.mrb[0].mxu0
      %v3155 = vadd.f32 0.0, %v3154
      %v3156 = vpop.f32.mrb[0].mxu0
      %3157 = vmatprep.mubr.f32.mxu0 0.0
      %3158 = vmatmul.mubr.f32.gmra.mrb[0].mxu0 %v3000
      %v3159 = vpop.f32.mrb[0].mxu0
      %v3160 = vadd.f32 0.0, %v3159
      %v3161 = vpop.f32.mrb[0].mxu0
      %3162 = vmatprep.mubr.f32.mxu0 0.0
      %3163 = vmatmul.mubr.f32.gmra.mrb[0].mxu0 %v3003
      %v3164 = vpop.f32.mrb[0].mxu0
      %v3165 = vadd.f32 0.0, %v3164
      %v3166 = vpop.f32.mrb[0].mxu0
      %3167 = vmatprep.mubr.f32.mxu0 0.0
      %3168 = vmatmul.mubr.f32.gmra.mrb[0].mxu0 %v3006
      %v3169 = vpop.f32.mrb[0].mxu0
      %v3170 = vadd.f32 0.0, %v3169
      %v3171 = vpop.f32.mrb[0].mxu0
      %3172 = vmatprep.mubr.f32.mxu0 0.0
      %3173 = vmatmul.mubr.f32.gmra.mrb[0].mxu0 %v3009
      %v3174 = vpop.f32.mrb[0].mxu0
      %v3175 = vadd.f32 0.0, %v3174
      %v3176 = vpop.f32.mrb[0].mxu0
      %3177 = vmatprep.mubr.f32.mxu0 0.0
      %3178 = vmatmul.mubr.f32.gmra.mrb[0].mxu0 %v3012
      %v3179 = vpop.f32.mrb[0].mxu0
      %v3180 = vadd.f32 0.0, %v3179
      %v3181 = vpop.f32.mrb[0].mxu0
      %3182 = vmatprep.mubr.f32.mxu0 0.0
      %3183 = vmatmul.mubr.f32.gmra.mrb[0].mxu0 %v3015
      %v3184 = vpop.f32.mrb[0].mxu0
      %v3185 = vadd.f32 0.0, %v3184
      %v3186 = vpop.f32.mrb[0].mxu0
      %3187 = vmatprep.mubr.f32.mxu0 0.0
      %3188 = vmatmul.mubr.f32.gmra.mrb[0].mxu0 %v3018
      %v3189 = vpop.f32.mrb[0].mxu0
      %v3190 = vadd.f32 0.0, %v3189
      %v3191 = vpop.f32.mrb[0].mxu0
      %3192 = vmatprep.mubr.f32.mxu0 0.0
      %3193 = vmatmul.mubr.f32.gmra.mrb[0].mxu0 %v3021
      %v3194 = vpop.f32.mrb[0].mxu0
      %v3195 = vadd.f32 0.0, %v3194
      %v3196 = vpop.f32.mrb[0].mxu0
      %3197 = vmatprep.mubr.f32.mxu0 0.0
      %3198 = vmatmul.mubr.f32.gmra.mrb[0].mxu0 %v3024
      %v3199 = vpop.f32.mrb[0].mxu0
      %v3200 = vadd.f32 0.0, %v3199
      %v3201 = vpop.f32.mrb[0].mxu0
      %3202 = vmatprep.mubr.f32.mxu0 0.0
      %3203 = vmatmul.mubr.f32.gmra.mrb[0].mxu0 %v3027
      %v3204 = vpop.f32.mrb[0].mxu0
      %v3205 = vadd.f32 0.0, %v3204
      %v3206 = vpop.f32.mrb[0].mxu0
      %3207 = vmatprep.mubr.f32.mxu0 0.0
      %3208 = vmatmul.mubr.f32.gmra.mrb[0].mxu0 %v3030
      %v3209 = vpop.f32.mrb[0].mxu0
      %v3210 = vadd.f32 0.0, %v3209
      %v3211 = vpop.f32.mrb[0].mxu0
      %3212 = vmatprep.mubr.f32.mxu0 0.0
      %3213 = vmatmul.mubr.f32.gmra.mrb[0].mxu0 %v3033
      %v3214 = vpop.f32.mrb[0].mxu0
      %v3215 = vadd.f32 0.0, %v3214
      %v3216 = vpop.f32.mrb[0].mxu0
      %3217 = vmatprep.mubr.f32.mxu0 0.0
      %3218 = vmatmul.mubr.f32.gmra.mrb[0].mxu0 %v3036
      %v3219 = vpop.f32.mrb[0].mxu0
      %v3220 = vadd.f32 0.0, %v3219
      %v3221 = vpop.f32.mrb[0].mxu0
      %3222 = vmatprep.mubr.f32.mxu0 0.0
      %3223 = vmatmul.mubr.f32.gmra.mrb[0].mxu0 %v3039
      %v3224 = vpop.f32.mrb[0].mxu0
      %v3225 = vadd.f32 0.0, %v3224
      %v3226 = vpop.f32.mrb[0].mxu0
      %3227 = vmatprep.mubr.f32.mxu0 0.0
      %3228 = vmatmul.mubr.f32.gmra.mrb[0].mxu0 %v3042
      %v3229 = vpop.f32.mrb[0].mxu0
      %v3230 = vadd.f32 0.0, %v3229
      %v3231 = vpop.f32.mrb[0].mxu0
      %3232 = vmatprep.mubr.f32.mxu0 0.0
      %3233 = vmatmul.mubr.f32.gmra.mrb[0].mxu0 %v3045
      %v3234 = vpop.f32.mrb[0].mxu0
      %v3235 = vadd.f32 0.0, %v3234
      %v3236 = vpop.f32.mrb[0].mxu0
      %3237 = vmatprep.mubr.f32.mxu0 0.0
      %3238 = vmatmul.mubr.f32.gmra.mrb[0].mxu0 %v3048
      %v3239 = vpop.f32.mrb[0].mxu0
      %v3240 = vadd.f32 0.0, %v3239
      %v3241 = vpop.f32.mrb[0].mxu0
      %3242 = vmatprep.mubr.f32.mxu0 0.0
      %3243 = vmatmul.mubr.f32.gmra.mrb[0].mxu0 %v3051
      %v3244 = vpop.f32.mrb[0].mxu0
      %v3245 = vadd.f32 0.0, %v3244
      %v3246 = vpop.f32.mrb[0].mxu0
      %3247 = vmatprep.mubr.f32.mxu0 0.0
      %3248 = vmatmul.mubr.f32.gmra.mrb[0].mxu0 %v3054
      %v3249 = vpop.f32.mrb[0].mxu0
      %v3250 = vadd.f32 0.0, %v3249
      %v3251 = vpop.f32.mrb[0].mxu0
      %3252 = vmatprep.mubr.f32.mxu0 0.0
      %3253 = vmatmul.mubr.f32.gmra.mrb[0].mxu0 %v3057
      %v3254 = vpop.f32.mrb[0].mxu0
      %v3255 = vadd.f32 0.0, %v3254
      %v3256 = vpop.f32.mrb[0].mxu0
      %3257 = vmatprep.mubr.f32.mxu0 0.0
      %3258 = vmatmul.mubr.f32.gmra.mrb[0].mxu0 %v3060
      %v3259 = vpop.f32.mrb[0].mxu0
      %v3260 = vadd.f32 0.0, %v3259
      %v3261 = vpop.f32.mrb[0].mxu0
      %3262 = vmatprep.mubr.f32.mxu0 0.0
      %3263 = vmatmul.mubr.f32.gmra.mrb[0].mxu0 %v3063
      %v3264 = vpop.f32.mrb[0].mxu0
      %v3265 = vadd.f32 0.0, %v3264
      %v3266 = vpop.f32.mrb[0].mxu0
      %3267 = vmatprep.mubr.f32.mxu0 0.0
      %3268 = vmatmul.mubr.f32.gmra.mrb[0].mxu0 %v3066
      %v3269 = vpop.f32.mrb[0].mxu0
      %v3270 = vadd.f32 0.0, %v3269
      %v3271 = vpop.f32.mrb[0].mxu0
      %3272 = vdwg.mxu0
      %v3273 = vadd.f32 %v2926, %v3135
      %v3274 = vadd.f32 %v2927, %v3140
      %v3275 = vadd.f32 %v2928, %v3145
      %v3276 = vadd.f32 %v2929, %v3150
      %v3277 = vadd.f32 %v2930, %v3155
      %v3278 = vadd.f32 %v2931, %v3160
      %v3279 = vadd.f32 %v2932, %v3165
      %v3280 = vadd.f32 %v2933, %v3170
      %v3281 = vadd.f32 %v2934, %v3175
      %v3282 = vadd.f32 %v2935, %v3180
      %v3283 = vadd.f32 %v2936, %v3185
      %v3284 = vadd.f32 %v2937, %v3190
      %v3285 = vadd.f32 %v2938, %v3195
      %v3286 = vadd.f32 %v2939, %v3200
      %v3287 = vadd.f32 %v2940, %v3205
      %v3288 = vadd.f32 %v2941, %v3210
      %v3289 = vadd.f32 %v2942, %v3215
      %v3290 = vadd.f32 %v2943, %v3220
      %v3291 = vadd.f32 %v2944, %v3225
      %v3292 = vadd.f32 %v2945, %v3230
      %v3293 = vadd.f32 %v2946, %v3235
      %v3294 = vadd.f32 %v2947, %v3240
      %v3295 = vadd.f32 %v2948, %v3245
      %v3296 = vadd.f32 %v2949, %v3250
      %v3297 = vadd.f32 %v2950, %v3255
      %v3298 = vadd.f32 %v2951, %v3260
      %v3299 = vadd.f32 %v2952, %v3265
      %v3300 = vadd.f32 %v2953, %v3270
      %v3301 = vmax.f32 %v3273, 0.0
      %v3302 = vmax.f32 %v3274, 0.0
      %v3303 = vmax.f32 %v3275, 0.0
      %v3304 = vmax.f32 %v3276, 0.0
      %v3305 = vmax.f32 %v3277, 0.0
      %v3306 = vmax.f32 %v3278, 0.0
      %v3307 = vmax.f32 %v3279, 0.0
      %v3308 = vmax.f32 %v3280, 0.0
      %v3309 = vmax.f32 %v3281, 0.0
      %v3310 = vmax.f32 %v3282, 0.0
      %v3311 = vmax.f32 %v3283, 0.0
      %v3312 = vmax.f32 %v3284, 0.0
      %v3313 = vmax.f32 %v3285, 0.0
      %v3314 = vmax.f32 %v3286, 0.0
      %v3315 = vmax.f32 %v3287, 0.0
      %v3316 = vmax.f32 %v3288, 0.0
      %v3317 = vmax.f32 %v3289, 0.0
      %v3318 = vmax.f32 %v3290, 0.0
      %v3319 = vmax.f32 %v3291, 0.0
      %v3320 = vmax.f32 %v3292, 0.0
      %v3321 = vmax.f32 %v3293, 0.0
      %v3322 = vmax.f32 %v3294, 0.0
      %v3323 = vmax.f32 %v3295, 0.0
      %v3324 = vmax.f32 %v3296, 0.0
      %v3325 = vmax.f32 %v3297, 0.0
      %v3326 = vmax.f32 %v3298, 0.0
      %v3327 = vmax.f32 %v3299, 0.0
      %v3328 = vmax.f32 %v3300, 0.0
      %3329 = vst [vmem:[%s170] sm:$0xff] %v3301
      %3330 = vst [vmem:[%s170 + $0x8] sm:$0xff] %v3302
      %3331 = vst [vmem:[%s170 + $0x10] sm:$0xff] %v3303
      %3332 = vst [vmem:[%s170 + $0x18] sm:$0xff] %v3304
      %3333 = vst [vmem:[%s170 + $0x20] sm:$0xff] %v3305
      %3334 = vst [vmem:[%s170 + $0x28] sm:$0xff] %v3306
      %3335 = vst [vmem:[%s170 + $0x30] sm:$0xff] %v3307
      %3336 = vst [vmem:[%s170 + $0x38] sm:$0xff] %v3308
      %3337 = vst [vmem:[%s170 + $0x40] sm:$0xff] %v3309
      %3338 = vst [vmem:[%s170 + $0x48] sm:$0xff] %v3310
      %3339 = vst [vmem:[%s170 + $0x50] sm:$0xff] %v3311
      %3340 = vst [vmem:[%s170 + $0x58] sm:$0xff] %v3312
      %3341 = vst [vmem:[%s170 + $0x60] sm:$0xff] %v3313
      %3342 = vst [vmem:[%s170 + $0x68] sm:$0xff] %v3314
      %3343 = vst [vmem:[%s170 + $0x70] sm:$0xff] %v3315
      %3344 = vst [vmem:[%s170 + $0x78] sm:$0xff] %v3316
      %3345 = vst [vmem:[%s170 + $0x80] sm:$0xff] %v3317
      %3346 = vst [vmem:[%s170 + $0x88] sm:$0xff] %v3318
      %3347 = vst [vmem:[%s170 + $0x90] sm:$0xff] %v3319
      %3348 = vst [vmem:[%s170 + $0x98] sm:$0xff] %v3320
      %3349 = vst [vmem:[%s170 + $0xa0] sm:$0xff] %v3321
      %3350 = vst [vmem:[%s170 + $0xa8] sm:$0xff] %v3322
      %3351 = vst [vmem:[%s170 + $0xb0] sm:$0xff] %v3323
      %3352 = vst [vmem:[%s170 + $0xb8] sm:$0xff] %v3324
      %3353 = vst [vmem:[%s170 + $0xc0] sm:$0xff] %v3325
      %3354 = vst [vmem:[%s170 + $0xc8] sm:$0xff] %v3326
      %3355 = vst [vmem:[%s170 + $0xd0] sm:$0xff] %v3327
      %3356 = vst [vmem:[%s170 + $0xd8] sm:$0xff] %v3328
      %p3357 = scmp.lt.s32.totalorder %s14, 1
      %s3358 = scalar_select %p3357, %s14, 1
      %s3359 = smul.addr %s3358, 28
      %s3360 = smul.addr %s3359, 8
      %s3361 = scalar_lea.vmem %s3, %s3360
      // Predicated region
      $region33: #{convnd_relu_forward.1} parent=31 // pred_check
        %p3362 = pneg %p100
      $region34: #{convnd_relu_forward.1} parent=31 // pred_check_branch
        %3364 = sbr.rel (%p3362) target = $region36
      $region35: #{convnd_relu_forward.1} parent=31 // pred_region
        _
      $region36: #{convnd_relu_forward.1} parent=31 // pred_fallthru
        _
    $region32: #{convnd_relu_forward.1} parent=5 // pred_fallthru
      _
    %p3365 = scmp.le.s32.totalorder 2, %s9
    // Predicated region
    $region37: #{convnd_relu_forward.1} parent=5 // pred_check
      %p3366 = pneg %p3365
    $region38: #{convnd_relu_forward.1} parent=5 // pred_check_branch
      %3368 = sbr.rel (%p3366) target = $region40
    $region39: #{convnd_relu_forward.1} parent=5 // pred_region
      %s3369 = ssub.s32 %s9, 2
      // Predicated region
      $region41: #{convnd_relu_forward.1} parent=39 // pred_check
        %p3370 = pneg %p106
      $region42: #{convnd_relu_forward.1} parent=39 // pred_check_branch
        %3372 = sbr.rel (%p3370) target = $region44
      $region43: #{convnd_relu_forward.1} parent=39 // pred_region
        %p3373 = scmp.lt.s32.totalorder %s15, 1
        %s3374 = scalar_select %p3373, %s15, 1
        %s3375 = smul.addr %s3374, 28
        %s3376 = smul.addr %s3375, 8
        %s3377 = scalar_lea.vmem %s3, %s3376
      $region44: #{convnd_relu_forward.1} parent=39 // pred_fallthru
        _
    $region40: #{convnd_relu_forward.1} parent=5 // pred_fallthru
      _
  $region6: #{convnd_relu_forward.1} parent=0 // loop_footer
    %s13 = sadd.s32 1, %s9
  $region7: #{convnd_relu_forward.1} parent=0 // loop_footer_branch
    %8 = sbr.rel target = $region3
  $region8: #{convnd_relu_forward.1} parent=0 // loop_exit
    _

</llo_original>
